<compile_context>
chip_gen: v7x
topology: tpu7x:2x2x1
jax: 0.10.0
libtpu: 0.0.40
codegen_flags: <defaults>
</compile_context>

<pallas_src>
import math

import jax
import jax.numpy as jnp
from jax.experimental import pallas as pl
from jax.experimental.pallas import tpu as pltpu

# Small, self-consistent shapes (module defaults scaled down).
B = 2            # batch
S = 8            # sequence length
D_IN = 8         # input_dim
H = 32           # hidden_dim
NUM_LAYERS = 2   # LSTM layers
NUM_HEADS = 4    # attention heads
DH = H // NUM_HEADS
H_HALF = H // 2

# TODO(synk): key_padding_mask (the optional `mask` argument) path is not
# implemented; the kernel assumes mask=None as in the example invocation.


def _sigmoid(z):
    # Exact form (finite in f32 even for large |z|); kept as a plain divide so
    # the kernel also runs under TPU interpret mode.
    return 1.0 / (1.0 + jnp.exp(-z))


def battery_net_kernel(
    x_ref,                      # [S*B, D_IN]   (s, b) row order
    fe_w1_ref, fe_b1_ref,       # [D_IN, H], [1, H]
    fe_w2_ref, fe_b2_ref,       # [H, H],   [1, H]
    wih_ref, whh_ref, lb_ref,   # [L, H, 4H], [L, H, 4H], [L, 1, 4H]
    wqkv_ref, bqkv_ref,         # [H, 3H], [1, 3H]
    wo_ref, bo_ref,             # [H, H], [1, H]
    rw1_ref, rb1_ref,           # [H, H//2], [1, H//2]
    rw2_ref, rb2_ref,           # [H//2, 1], [1, 1]
    out_ref,                    # [B, 1]
    attnw_ref,                  # [B, S, S]
    buf_sb,                     # VMEM [S*B, H] intermediate LSTM out, (s,b) order
    buf_bs,                     # VMEM [B*S, H] final LSTM out, (b,s) order
    ctx_ref,                    # VMEM [B, S, H] attention context (heads concat)
):
    f32 = jnp.float32

    # -------- feature extractor: two fused (Linear + ReLU) matmuls ---------
    x = x_ref[...]                                                  # [S*B, D_IN]
    h1 = jnp.maximum(
        jnp.dot(x, fe_w1_ref[...], preferred_element_type=f32) + fe_b1_ref[...],
        0.0)                                                        # [S*B, H]
    feat = jnp.maximum(
        jnp.dot(h1, fe_w2_ref[...], preferred_element_type=f32) + fe_b2_ref[...],
        0.0)                                                        # [S*B, H]

    # ---------------------------- stacked LSTM ------------------------------
    # Input->hidden projection hoisted out of the recurrence (one big matmul
    # per layer); h/c stay in vregs across the unrolled time loop.
    src = feat                                                      # [S*B, H], (s,b)
    for layer in range(NUM_LAYERS):
        w_hh = whh_ref[layer]                                       # [H, 4H]
        gx = (jnp.dot(src, wih_ref[layer], preferred_element_type=f32)
              + lb_ref[layer])                                      # [S*B, 4H]
        h = jnp.zeros((B, H), f32)
        c = jnp.zeros((B, H), f32)
        last_layer = layer == NUM_LAYERS - 1
        for t in range(S):
            gates = (gx[t * B:(t + 1) * B, :]
                     + jnp.dot(h, w_hh, preferred_element_type=f32))   # [B, 4H]
            i_g = _sigmoid(gates[:, 0 * H:1 * H])
            f_g = _sigmoid(gates[:, 1 * H:2 * H])
            g_g = jnp.tanh(gates[:, 2 * H:3 * H])
            o_g = _sigmoid(gates[:, 3 * H:4 * H])
            c = f_g * c + i_g * g_g
            h = o_g * jnp.tanh(c)
            if last_layer:
                # write (b, s)-major so attention sees per-batch contiguous rows
                for b in range(B):
                    buf_bs[b * S + t:b * S + t + 1, :] = h[b:b + 1, :]
            else:
                buf_sb[t * B:(t + 1) * B, :] = h
        if not last_layer:
            src = buf_sb[...]

    lstm_bs = buf_bs[...]                                           # [B*S, H]

    # -------------- multi-head self-attention (batched over B) --------------
    scale = 1.0 / math.sqrt(DH)
    qkv = (jnp.dot(lstm_bs, wqkv_ref[...], preferred_element_type=f32)
           + bqkv_ref[...])                                         # [B*S, 3H]
    qkv = qkv.reshape(B, S, 3 * H)                                  # aligned sublane split

    probs_sum = jnp.zeros((B, S, S), f32)
    for hd in range(NUM_HEADS):
        c0 = hd * DH
        q_h = qkv[:, :, 0 * H + c0:0 * H + c0 + DH] * scale         # [B, S, DH]
        k_h = qkv[:, :, 1 * H + c0:1 * H + c0 + DH]
        v_h = qkv[:, :, 2 * H + c0:2 * H + c0 + DH]
        sc = jnp.einsum('bqd,bkd->bqk', q_h, k_h,
                        preferred_element_type=f32)                 # [B, S, S]
        m = jnp.max(sc, axis=-1, keepdims=True)
        e = jnp.exp(sc - m)
        p = e / jnp.sum(e, axis=-1, keepdims=True)                  # exact row sums
        probs_sum = probs_sum + p
        ctx_ref[:, :, c0:c0 + DH] = jnp.einsum(
            'bqk,bkd->bqd', p, v_h, preferred_element_type=f32)     # [B, S, DH]

    attnw_ref[...] = probs_sum * (1.0 / NUM_HEADS)                  # head-averaged

    ctx = ctx_ref[...].reshape(B * S, H)                            # [B*S, H]
    attn_out = (jnp.dot(ctx, wo_ref[...], preferred_element_type=f32)
                + bo_ref[...])                                      # [B*S, H]

    # ------------------------------ regressor -------------------------------
    # Run the tiny regressor on all rows (same single MXU pass either way),
    # then pick the last-timestep row of each batch.
    r1 = jnp.maximum(
        jnp.dot(attn_out, rw1_ref[...], preferred_element_type=f32) + rb1_ref[...],
        0.0)                                                        # [B*S, H//2]
    r2 = (jnp.dot(r1, rw2_ref[...], preferred_element_type=f32)
          + rb2_ref[...])                                           # [B*S, 1]
    for b in range(B):
        row = b * S + (S - 1)
        out_ref[b:b + 1, :] = r2[row:row + 1, :]


def init_params(key):
    keys = jax.random.split(key, 16)

    def u(k, shape, fan_in):
        bound = 1.0 / math.sqrt(fan_in)
        return jax.random.uniform(k, shape, jnp.float32, -bound, bound)

    params = {
        "fe_w1": u(keys[0], (D_IN, H), D_IN),
        "fe_b1": u(keys[1], (1, H), D_IN),
        "fe_w2": u(keys[2], (H, H), H),
        "fe_b2": u(keys[3], (1, H), H),
        "wih":   u(keys[4], (NUM_LAYERS, H, 4 * H), H),
        "whh":   u(keys[5], (NUM_LAYERS, H, 4 * H), H),
        # combined b_ih + b_hh
        "lb":    u(keys[6], (NUM_LAYERS, 1, 4 * H), H)
                 + u(keys[7], (NUM_LAYERS, 1, 4 * H), H),
        "wqkv":  u(keys[8], (H, 3 * H), H),
        "bqkv":  u(keys[9], (1, 3 * H), H),
        "wo":    u(keys[10], (H, H), H),
        "bo":    u(keys[11], (1, H), H),
        "rw1":   u(keys[12], (H, H_HALF), H),
        "rb1":   u(keys[13], (1, H_HALF), H),
        "rw2":   u(keys[14], (H_HALF, 1), H_HALF),
        "rb2":   u(keys[15], (1, 1), H_HALF),
    }
    return params


@jax.jit
def battery_net_forward(x_bsd, params):
    """x_bsd: [B, S, D_IN] (PyTorch batch-first). Returns (out [B,1], attn_w [B,S,S])."""
    # Free layout plumbing in the wrapper: time-major, then flatten to (s,b) rows.
    x_flat = jnp.transpose(x_bsd, (1, 0, 2)).reshape(S * B, D_IN)

    vmem = pl.BlockSpec(memory_space=pltpu.MemorySpace.VMEM)
    inputs = (
        x_flat,
        params["fe_w1"], params["fe_b1"], params["fe_w2"], params["fe_b2"],
        params["wih"], params["whh"], params["lb"],
        params["wqkv"], params["bqkv"], params["wo"], params["bo"],
        params["rw1"], params["rb1"], params["rw2"], params["rb2"],
    )
    out, attn_w = pl.pallas_call(
        battery_net_kernel,
        out_shape=(
            jax.ShapeDtypeStruct((B, 1), jnp.float32),
            jax.ShapeDtypeStruct((B, S, S), jnp.float32),
        ),
        in_specs=[vmem] * len(inputs),
        out_specs=(vmem, vmem),
        scratch_shapes=[
            pltpu.VMEM((S * B, H), jnp.float32),   # intermediate LSTM layer output
            pltpu.VMEM((B * S, H), jnp.float32),   # final LSTM layer output (b,s)
            pltpu.VMEM((B, S, H), jnp.float32),    # attention context (heads concat)
        ],
    )(*inputs)
    return out, attn_w


if __name__ == "__main__":
    key = jax.random.PRNGKey(0)
    k_x, k_p = jax.random.split(key)
    x = jax.random.normal(k_x, (B, S, D_IN), jnp.float32)
    params = init_params(k_p)

    out, attn_w = battery_net_forward(x, params)
    out = jax.block_until_ready(out)
    attn_w = jax.block_until_ready(attn_w)

    assert out.shape == (B, 1)
    assert attn_w.shape == (B, S, S)
    assert bool(jnp.all(jnp.isfinite(out)))
    assert bool(jnp.all(jnp.isfinite(attn_w)))
    # attention rows must sum to 1 (softmax, head-averaged)
    assert bool(jnp.allclose(jnp.sum(attn_w, axis=-1), 1.0, atol=1e-4))

    print("KERNEL_OK")
</pallas_src>

<mosaic_0001>
module attributes {stable_mosaic.version = 11 : i64} {
  func.func @battery_net_kernel(%arg0: memref<16x8xf32, #tpu.memory_space<vmem>>, %arg1: memref<8x32xf32, #tpu.memory_space<vmem>>, %arg2: memref<1x32xf32, #tpu.memory_space<vmem>>, %arg3: memref<32x32xf32, #tpu.memory_space<vmem>>, %arg4: memref<1x32xf32, #tpu.memory_space<vmem>>, %arg5: memref<2x32x128xf32, #tpu.memory_space<vmem>>, %arg6: memref<2x32x128xf32, #tpu.memory_space<vmem>>, %arg7: memref<2x1x128xf32, #tpu.memory_space<vmem>>, %arg8: memref<32x96xf32, #tpu.memory_space<vmem>>, %arg9: memref<1x96xf32, #tpu.memory_space<vmem>>, %arg10: memref<32x32xf32, #tpu.memory_space<vmem>>, %arg11: memref<1x32xf32, #tpu.memory_space<vmem>>, %arg12: memref<32x16xf32, #tpu.memory_space<vmem>>, %arg13: memref<1x16xf32, #tpu.memory_space<vmem>>, %arg14: memref<16x1xf32, #tpu.memory_space<vmem>>, %arg15: memref<1x1xf32, #tpu.memory_space<vmem>>, %arg16: memref<2x1xf32, #tpu.memory_space<vmem>>, %arg17: memref<2x8x8xf32, #tpu.memory_space<vmem>>, %arg18: memref<16x32xf32, #tpu.memory_space<vmem>>, %arg19: memref<16x32xf32, #tpu.memory_space<vmem>>, %arg20: memref<2x8x32xf32, #tpu.memory_space<vmem>>) attributes {dimension_semantics = [], scalar_prefetch = 0 : i64, scratch_operands = 3 : i64, tpu.core_type = #tpu.core_type<tc>} {
    %c0 = arith.constant 0 : index
    %c0_0 = arith.constant 0 : index
    %0 = vector.load %arg0[%c0, %c0_0] : memref<16x8xf32, #tpu.memory_space<vmem>>, vector<16x8xf32>
    %c0_1 = arith.constant 0 : index
    %c0_2 = arith.constant 0 : index
    %1 = vector.load %arg1[%c0_1, %c0_2] : memref<8x32xf32, #tpu.memory_space<vmem>>, vector<8x32xf32>
    %cst = arith.constant dense<0.000000e+00> : vector<16x32xf32>
    %2 = tpu.matmul %0, %1, %cst {dimension_numbers = #tpu.dot_dimension_numbers<[1], [0], [0], [1], [0, 0, 1, 1], [], []>} : vector<16x8xf32>, vector<8x32xf32>, vector<16x32xf32> -> vector<16x32xf32>
    %c0_3 = arith.constant 0 : index
    %c0_4 = arith.constant 0 : index
    %3 = vector.load %arg2[%c0_3, %c0_4] : memref<1x32xf32, #tpu.memory_space<vmem>>, vector<1x32xf32>
    %4 = vector.broadcast %3 : vector<1x32xf32> to vector<16x32xf32>
    %5 = arith.addf %2, %4 : vector<16x32xf32>
    %cst_5 = arith.constant 0.000000e+00 : f32
    %6 = vector.broadcast %cst_5 : f32 to vector<16x32xf32>
    %7 = arith.maximumf %5, %6 : vector<16x32xf32>
    %c0_6 = arith.constant 0 : index
    %c0_7 = arith.constant 0 : index
    %8 = vector.load %arg3[%c0_6, %c0_7] : memref<32x32xf32, #tpu.memory_space<vmem>>, vector<32x32xf32>
    %cst_8 = arith.constant dense<0.000000e+00> : vector<16x32xf32>
    %9 = tpu.matmul %7, %8, %cst_8 {dimension_numbers = #tpu.dot_dimension_numbers<[1], [0], [0], [1], [0, 0, 1, 1], [], []>} : vector<16x32xf32>, vector<32x32xf32>, vector<16x32xf32> -> vector<16x32xf32>
    %c0_9 = arith.constant 0 : index
    %c0_10 = arith.constant 0 : index
    %10 = vector.load %arg4[%c0_9, %c0_10] : memref<1x32xf32, #tpu.memory_space<vmem>>, vector<1x32xf32>
    %11 = vector.broadcast %10 : vector<1x32xf32> to vector<16x32xf32>
    %12 = arith.addf %9, %11 : vector<16x32xf32>
    %cst_11 = arith.constant 0.000000e+00 : f32
    %13 = vector.broadcast %cst_11 : f32 to vector<16x32xf32>
    %14 = arith.maximumf %12, %13 : vector<16x32xf32>
    %c0_12 = arith.constant 0 : index
    %c0_13 = arith.constant 0 : index
    %c0_14 = arith.constant 0 : index
    %15 = vector.load %arg6[%c0_12, %c0_13, %c0_14] : memref<2x32x128xf32, #tpu.memory_space<vmem>>, vector<1x32x128xf32>
    %16 = vector.shape_cast %15 : vector<1x32x128xf32> to vector<32x128xf32>
    %c0_15 = arith.constant 0 : index
    %c0_16 = arith.constant 0 : index
    %c0_17 = arith.constant 0 : index
    %17 = vector.load %arg5[%c0_15, %c0_16, %c0_17] : memref<2x32x128xf32, #tpu.memory_space<vmem>>, vector<1x32x128xf32>
    %18 = vector.shape_cast %17 : vector<1x32x128xf32> to vector<32x128xf32>
    %cst_18 = arith.constant dense<0.000000e+00> : vector<16x128xf32>
    %19 = tpu.matmul %14, %18, %cst_18 {dimension_numbers = #tpu.dot_dimension_numbers<[1], [0], [0], [1], [0, 0, 1, 1], [], []>} : vector<16x32xf32>, vector<32x128xf32>, vector<16x128xf32> -> vector<16x128xf32>
    %c0_19 = arith.constant 0 : index
    %c0_20 = arith.constant 0 : index
    %c0_21 = arith.constant 0 : index
    %20 = vector.load %arg7[%c0_19, %c0_20, %c0_21] : memref<2x1x128xf32, #tpu.memory_space<vmem>>, vector<1x1x128xf32>
    %21 = vector.shape_cast %20 : vector<1x1x128xf32> to vector<1x128xf32>
    %22 = vector.broadcast %21 : vector<1x128xf32> to vector<16x128xf32>
    %23 = arith.addf %19, %22 : vector<16x128xf32>
    %cst_22 = arith.constant 0.000000e+00 : f32
    %24 = vector.broadcast %cst_22 : f32 to vector<2x32xf32>
    %cst_23 = arith.constant 0.000000e+00 : f32
    %25 = vector.broadcast %cst_23 : f32 to vector<2x32xf32>
    %26 = vector.extract_strided_slice %23 {offsets = [0, 0], sizes = [2, 128], strides = [1, 1]} : vector<16x128xf32> to vector<2x128xf32>
    %cst_24 = arith.constant dense<0.000000e+00> : vector<2x128xf32>
    %27 = tpu.matmul %24, %16, %cst_24 {dimension_numbers = #tpu.dot_dimension_numbers<[1], [0], [0], [1], [0, 0, 1, 1], [], []>} : vector<2x32xf32>, vector<32x128xf32>, vector<2x128xf32> -> vector<2x128xf32>
    %28 = arith.addf %26, %27 : vector<2x128xf32>
    %29 = vector.extract_strided_slice %28 {offsets = [0, 0], sizes = [2, 32], strides = [1, 1]} : vector<2x128xf32> to vector<2x32xf32>
    %cst_25 = arith.constant 0.000000e+00 : f32
    %30 = vector.broadcast %cst_25 : f32 to vector<2x32xf32>
    %31 = arith.subf %30, %29 : vector<2x32xf32>
    %32 = math.exp %31 : vector<2x32xf32>
    %cst_26 = arith.constant 1.000000e+00 : f32
    %33 = vector.broadcast %cst_26 : f32 to vector<2x32xf32>
    %34 = arith.addf %33, %32 : vector<2x32xf32>
    %cst_27 = arith.constant 1.000000e+00 : f32
    %35 = vector.broadcast %cst_27 : f32 to vector<2x32xf32>
    %36 = arith.divf %35, %34 : vector<2x32xf32>
    %37 = vector.extract_strided_slice %28 {offsets = [0, 32], sizes = [2, 32], strides = [1, 1]} : vector<2x128xf32> to vector<2x32xf32>
    %cst_28 = arith.constant 0.000000e+00 : f32
    %38 = vector.broadcast %cst_28 : f32 to vector<2x32xf32>
    %39 = arith.subf %38, %37 : vector<2x32xf32>
    %40 = math.exp %39 : vector<2x32xf32>
    %cst_29 = arith.constant 1.000000e+00 : f32
    %41 = vector.broadcast %cst_29 : f32 to vector<2x32xf32>
    %42 = arith.addf %41, %40 : vector<2x32xf32>
    %cst_30 = arith.constant 1.000000e+00 : f32
    %43 = vector.broadcast %cst_30 : f32 to vector<2x32xf32>
    %44 = arith.divf %43, %42 : vector<2x32xf32>
    %45 = vector.extract_strided_slice %28 {offsets = [0, 64], sizes = [2, 32], strides = [1, 1]} : vector<2x128xf32> to vector<2x32xf32>
    %46 = math.tanh %45 : vector<2x32xf32>
    %47 = vector.extract_strided_slice %28 {offsets = [0, 96], sizes = [2, 32], strides = [1, 1]} : vector<2x128xf32> to vector<2x32xf32>
    %cst_31 = arith.constant 0.000000e+00 : f32
    %48 = vector.broadcast %cst_31 : f32 to vector<2x32xf32>
    %49 = arith.subf %48, %47 : vector<2x32xf32>
    %50 = math.exp %49 : vector<2x32xf32>
    %cst_32 = arith.constant 1.000000e+00 : f32
    %51 = vector.broadcast %cst_32 : f32 to vector<2x32xf32>
    %52 = arith.addf %51, %50 : vector<2x32xf32>
    %cst_33 = arith.constant 1.000000e+00 : f32
    %53 = vector.broadcast %cst_33 : f32 to vector<2x32xf32>
    %54 = arith.divf %53, %52 : vector<2x32xf32>
    %55 = arith.mulf %44, %25 : vector<2x32xf32>
    %56 = arith.mulf %36, %46 : vector<2x32xf32>
    %57 = arith.addf %55, %56 : vector<2x32xf32>
    %58 = math.tanh %57 : vector<2x32xf32>
    %59 = arith.mulf %54, %58 : vector<2x32xf32>
    %c0_34 = arith.constant 0 : index
    %c0_35 = arith.constant 0 : index
    %60 = vector.load %arg18[%c0_34, %c0_35] : memref<16x32xf32, #tpu.memory_space<vmem>>, vector<2x32xf32>
    tpu.vector_store %arg18[%c0_34, %c0_35], %59 {strides = array<i32>} : memref<16x32xf32, #tpu.memory_space<vmem>>, vector<2x32xf32>,
    %61 = vector.extract_strided_slice %23 {offsets = [2, 0], sizes = [2, 128], strides = [1, 1]} : vector<16x128xf32> to vector<2x128xf32>
    %cst_36 = arith.constant dense<0.000000e+00> : vector<2x128xf32>
    %62 = tpu.matmul %59, %16, %cst_36 {dimension_numbers = #tpu.dot_dimension_numbers<[1], [0], [0], [1], [0, 0, 1, 1], [], []>} : vector<2x32xf32>, vector<32x128xf32>, vector<2x128xf32> -> vector<2x128xf32>
    %63 = arith.addf %61, %62 : vector<2x128xf32>
    %64 = vector.extract_strided_slice %63 {offsets = [0, 0], sizes = [2, 32], strides = [1, 1]} : vector<2x128xf32> to vector<2x32xf32>
    %cst_37 = arith.constant 0.000000e+00 : f32
    %65 = vector.broadcast %cst_37 : f32 to vector<2x32xf32>
    %66 = arith.subf %65, %64 : vector<2x32xf32>
    %67 = math.exp %66 : vector<2x32xf32>
    %cst_38 = arith.constant 1.000000e+00 : f32
    %68 = vector.broadcast %cst_38 : f32 to vector<2x32xf32>
    %69 = arith.addf %68, %67 : vector<2x32xf32>
    %cst_39 = arith.constant 1.000000e+00 : f32
    %70 = vector.broadcast %cst_39 : f32 to vector<2x32xf32>
    %71 = arith.divf %70, %69 : vector<2x32xf32>
    %72 = vector.extract_strided_slice %63 {offsets = [0, 32], sizes = [2, 32], strides = [1, 1]} : vector<2x128xf32> to vector<2x32xf32>
    %cst_40 = arith.constant 0.000000e+00 : f32
    %73 = vector.broadcast %cst_40 : f32 to vector<2x32xf32>
    %74 = arith.subf %73, %72 : vector<2x32xf32>
    %75 = math.exp %74 : vector<2x32xf32>
    %cst_41 = arith.constant 1.000000e+00 : f32
    %76 = vector.broadcast %cst_41 : f32 to vector<2x32xf32>
    %77 = arith.addf %76, %75 : vector<2x32xf32>
    %cst_42 = arith.constant 1.000000e+00 : f32
    %78 = vector.broadcast %cst_42 : f32 to vector<2x32xf32>
    %79 = arith.divf %78, %77 : vector<2x32xf32>
    %80 = vector.extract_strided_slice %63 {offsets = [0, 64], sizes = [2, 32], strides = [1, 1]} : vector<2x128xf32> to vector<2x32xf32>
    %81 = math.tanh %80 : vector<2x32xf32>
    %82 = vector.extract_strided_slice %63 {offsets = [0, 96], sizes = [2, 32], strides = [1, 1]} : vector<2x128xf32> to vector<2x32xf32>
    %cst_43 = arith.constant 0.000000e+00 : f32
    %83 = vector.broadcast %cst_43 : f32 to vector<2x32xf32>
    %84 = arith.subf %83, %82 : vector<2x32xf32>
    %85 = math.exp %84 : vector<2x32xf32>
    %cst_44 = arith.constant 1.000000e+00 : f32
    %86 = vector.broadcast %cst_44 : f32 to vector<2x32xf32>
    %87 = arith.addf %86, %85 : vector<2x32xf32>
    %cst_45 = arith.constant 1.000000e+00 : f32
    %88 = vector.broadcast %cst_45 : f32 to vector<2x32xf32>
    %89 = arith.divf %88, %87 : vector<2x32xf32>
    %90 = arith.mulf %79, %57 : vector<2x32xf32>
    %91 = arith.mulf %71, %81 : vector<2x32xf32>
    %92 = arith.addf %90, %91 : vector<2x32xf32>
    %93 = math.tanh %92 : vector<2x32xf32>
    %94 = arith.mulf %89, %93 : vector<2x32xf32>
    %c2 = arith.constant 2 : index
    %c0_46 = arith.constant 0 : index
    %95 = vector.load %arg18[%c2, %c0_46] : memref<16x32xf32, #tpu.memory_space<vmem>>, vector<2x32xf32>
    tpu.vector_store %arg18[%c2, %c0_46], %94 {strides = array<i32>} : memref<16x32xf32, #tpu.memory_space<vmem>>, vector<2x32xf32>,
    %96 = vector.extract_strided_slice %23 {offsets = [4, 0], sizes = [2, 128], strides = [1, 1]} : vector<16x128xf32> to vector<2x128xf32>
    %cst_47 = arith.constant dense<0.000000e+00> : vector<2x128xf32>
    %97 = tpu.matmul %94, %16, %cst_47 {dimension_numbers = #tpu.dot_dimension_numbers<[1], [0], [0], [1], [0, 0, 1, 1], [], []>} : vector<2x32xf32>, vector<32x128xf32>, vector<2x128xf32> -> vector<2x128xf32>
    %98 = arith.addf %96, %97 : vector<2x128xf32>
    %99 = vector.extract_strided_slice %98 {offsets = [0, 0], sizes = [2, 32], strides = [1, 1]} : vector<2x128xf32> to vector<2x32xf32>
    %cst_48 = arith.constant 0.000000e+00 : f32
    %100 = vector.broadcast %cst_48 : f32 to vector<2x32xf32>
    %101 = arith.subf %100, %99 : vector<2x32xf32>
    %102 = math.exp %101 : vector<2x32xf32>
    %cst_49 = arith.constant 1.000000e+00 : f32
    %103 = vector.broadcast %cst_49 : f32 to vector<2x32xf32>
    %104 = arith.addf %103, %102 : vector<2x32xf32>
    %cst_50 = arith.constant 1.000000e+00 : f32
    %105 = vector.broadcast %cst_50 : f32 to vector<2x32xf32>
    %106 = arith.divf %105, %104 : vector<2x32xf32>
    %107 = vector.extract_strided_slice %98 {offsets = [0, 32], sizes = [2, 32], strides = [1, 1]} : vector<2x128xf32> to vector<2x32xf32>
    %cst_51 = arith.constant 0.000000e+00 : f32
    %108 = vector.broadcast %cst_51 : f32 to vector<2x32xf32>
    %109 = arith.subf %108, %107 : vector<2x32xf32>
    %110 = math.exp %109 : vector<2x32xf32>
    %cst_52 = arith.constant 1.000000e+00 : f32
    %111 = vector.broadcast %cst_52 : f32 to vector<2x32xf32>
    %112 = arith.addf %111, %110 : vector<2x32xf32>
    %cst_53 = arith.constant 1.000000e+00 : f32
    %113 = vector.broadcast %cst_53 : f32 to vector<2x32xf32>
    %114 = arith.divf %113, %112 : vector<2x32xf32>
    %115 = vector.extract_strided_slice %98 {offsets = [0, 64], sizes = [2, 32], strides = [1, 1]} : vector<2x128xf32> to vector<2x32xf32>
    %116 = math.tanh %115 : vector<2x32xf32>
    %117 = vector.extract_strided_slice %98 {offsets = [0, 96], sizes = [2, 32], strides = [1, 1]} : vector<2x128xf32> to vector<2x32xf32>
    %cst_54 = arith.constant 0.000000e+00 : f32
    %118 = vector.broadcast %cst_54 : f32 to vector<2x32xf32>
    %119 = arith.subf %118, %117 : vector<2x32xf32>
    %120 = math.exp %119 : vector<2x32xf32>
    %cst_55 = arith.constant 1.000000e+00 : f32
    %121 = vector.broadcast %cst_55 : f32 to vector<2x32xf32>
    %122 = arith.addf %121, %120 : vector<2x32xf32>
    %cst_56 = arith.constant 1.000000e+00 : f32
    %123 = vector.broadcast %cst_56 : f32 to vector<2x32xf32>
    %124 = arith.divf %123, %122 : vector<2x32xf32>
    %125 = arith.mulf %114, %92 : vector<2x32xf32>
    %126 = arith.mulf %106, %116 : vector<2x32xf32>
    %127 = arith.addf %125, %126 : vector<2x32xf32>
    %128 = math.tanh %127 : vector<2x32xf32>
    %129 = arith.mulf %124, %128 : vector<2x32xf32>
    %c4 = arith.constant 4 : index
    %c0_57 = arith.constant 0 : index
    %130 = vector.load %arg18[%c4, %c0_57] : memref<16x32xf32, #tpu.memory_space<vmem>>, vector<2x32xf32>
    tpu.vector_store %arg18[%c4, %c0_57], %129 {strides = array<i32>} : memref<16x32xf32, #tpu.memory_space<vmem>>, vector<2x32xf32>,
    %131 = vector.extract_strided_slice %23 {offsets = [6, 0], sizes = [2, 128], strides = [1, 1]} : vector<16x128xf32> to vector<2x128xf32>
    %cst_58 = arith.constant dense<0.000000e+00> : vector<2x128xf32>
    %132 = tpu.matmul %129, %16, %cst_58 {dimension_numbers = #tpu.dot_dimension_numbers<[1], [0], [0], [1], [0, 0, 1, 1], [], []>} : vector<2x32xf32>, vector<32x128xf32>, vector<2x128xf32> -> vector<2x128xf32>
    %133 = arith.addf %131, %132 : vector<2x128xf32>
    %134 = vector.extract_strided_slice %133 {offsets = [0, 0], sizes = [2, 32], strides = [1, 1]} : vector<2x128xf32> to vector<2x32xf32>
    %cst_59 = arith.constant 0.000000e+00 : f32
    %135 = vector.broadcast %cst_59 : f32 to vector<2x32xf32>
    %136 = arith.subf %135, %134 : vector<2x32xf32>
    %137 = math.exp %136 : vector<2x32xf32>
    %cst_60 = arith.constant 1.000000e+00 : f32
    %138 = vector.broadcast %cst_60 : f32 to vector<2x32xf32>
    %139 = arith.addf %138, %137 : vector<2x32xf32>
    %cst_61 = arith.constant 1.000000e+00 : f32
    %140 = vector.broadcast %cst_61 : f32 to vector<2x32xf32>
    %141 = arith.divf %140, %139 : vector<2x32xf32>
    %142 = vector.extract_strided_slice %133 {offsets = [0, 32], sizes = [2, 32], strides = [1, 1]} : vector<2x128xf32> to vector<2x32xf32>
    %cst_62 = arith.constant 0.000000e+00 : f32
    %143 = vector.broadcast %cst_62 : f32 to vector<2x32xf32>
    %144 = arith.subf %143, %142 : vector<2x32xf32>
    %145 = math.exp %144 : vector<2x32xf32>
    %cst_63 = arith.constant 1.000000e+00 : f32
    %146 = vector.broadcast %cst_63 : f32 to vector<2x32xf32>
    %147 = arith.addf %146, %145 : vector<2x32xf32>
    %cst_64 = arith.constant 1.000000e+00 : f32
    %148 = vector.broadcast %cst_64 : f32 to vector<2x32xf32>
    %149 = arith.divf %148, %147 : vector<2x32xf32>
    %150 = vector.extract_strided_slice %133 {offsets = [0, 64], sizes = [2, 32], strides = [1, 1]} : vector<2x128xf32> to vector<2x32xf32>
    %151 = math.tanh %150 : vector<2x32xf32>
    %152 = vector.extract_strided_slice %133 {offsets = [0, 96], sizes = [2, 32], strides = [1, 1]} : vector<2x128xf32> to vector<2x32xf32>
    %cst_65 = arith.constant 0.000000e+00 : f32
    %153 = vector.broadcast %cst_65 : f32 to vector<2x32xf32>
    %154 = arith.subf %153, %152 : vector<2x32xf32>
    %155 = math.exp %154 : vector<2x32xf32>
    %cst_66 = arith.constant 1.000000e+00 : f32
    %156 = vector.broadcast %cst_66 : f32 to vector<2x32xf32>
    %157 = arith.addf %156, %155 : vector<2x32xf32>
    %cst_67 = arith.constant 1.000000e+00 : f32
    %158 = vector.broadcast %cst_67 : f32 to vector<2x32xf32>
    %159 = arith.divf %158, %157 : vector<2x32xf32>
    %160 = arith.mulf %149, %127 : vector<2x32xf32>
    %161 = arith.mulf %141, %151 : vector<2x32xf32>
    %162 = arith.addf %160, %161 : vector<2x32xf32>
    %163 = math.tanh %162 : vector<2x32xf32>
    %164 = arith.mulf %159, %163 : vector<2x32xf32>
    %c6 = arith.constant 6 : index
    %c0_68 = arith.constant 0 : index
    %165 = vector.load %arg18[%c6, %c0_68] : memref<16x32xf32, #tpu.memory_space<vmem>>, vector<2x32xf32>
    tpu.vector_store %arg18[%c6, %c0_68], %164 {strides = array<i32>} : memref<16x32xf32, #tpu.memory_space<vmem>>, vector<2x32xf32>,
    %166 = vector.extract_strided_slice %23 {offsets = [8, 0], sizes = [2, 128], strides = [1, 1]} : vector<16x128xf32> to vector<2x128xf32>
    %cst_69 = arith.constant dense<0.000000e+00> : vector<2x128xf32>
    %167 = tpu.matmul %164, %16, %cst_69 {dimension_numbers = #tpu.dot_dimension_numbers<[1], [0], [0], [1], [0, 0, 1, 1], [], []>} : vector<2x32xf32>, vector<32x128xf32>, vector<2x128xf32> -> vector<2x128xf32>
    %168 = arith.addf %166, %167 : vector<2x128xf32>
    %169 = vector.extract_strided_slice %168 {offsets = [0, 0], sizes = [2, 32], strides = [1, 1]} : vector<2x128xf32> to vector<2x32xf32>
    %cst_70 = arith.constant 0.000000e+00 : f32
    %170 = vector.broadcast %cst_70 : f32 to vector<2x32xf32>
    %171 = arith.subf %170, %169 : vector<2x32xf32>
    %172 = math.exp %171 : vector<2x32xf32>
    %cst_71 = arith.constant 1.000000e+00 : f32
    %173 = vector.broadcast %cst_71 : f32 to vector<2x32xf32>
    %174 = arith.addf %173, %172 : vector<2x32xf32>
    %cst_72 = arith.constant 1.000000e+00 : f32
    %175 = vector.broadcast %cst_72 : f32 to vector<2x32xf32>
    %176 = arith.divf %175, %174 : vector<2x32xf32>
    %177 = vector.extract_strided_slice %168 {offsets = [0, 32], sizes = [2, 32], strides = [1, 1]} : vector<2x128xf32> to vector<2x32xf32>
    %cst_73 = arith.constant 0.000000e+00 : f32
    %178 = vector.broadcast %cst_73 : f32 to vector<2x32xf32>
    %179 = arith.subf %178, %177 : vector<2x32xf32>
    %180 = math.exp %179 : vector<2x32xf32>
    %cst_74 = arith.constant 1.000000e+00 : f32
    %181 = vector.broadcast %cst_74 : f32 to vector<2x32xf32>
    %182 = arith.addf %181, %180 : vector<2x32xf32>
    %cst_75 = arith.constant 1.000000e+00 : f32
    %183 = vector.broadcast %cst_75 : f32 to vector<2x32xf32>
    %184 = arith.divf %183, %182 : vector<2x32xf32>
    %185 = vector.extract_strided_slice %168 {offsets = [0, 64], sizes = [2, 32], strides = [1, 1]} : vector<2x128xf32> to vector<2x32xf32>
    %186 = math.tanh %185 : vector<2x32xf32>
    %187 = vector.extract_strided_slice %168 {offsets = [0, 96], sizes = [2, 32], strides = [1, 1]} : vector<2x128xf32> to vector<2x32xf32>
    %cst_76 = arith.constant 0.000000e+00 : f32
    %188 = vector.broadcast %cst_76 : f32 to vector<2x32xf32>
    %189 = arith.subf %188, %187 : vector<2x32xf32>
    %190 = math.exp %189 : vector<2x32xf32>
    %cst_77 = arith.constant 1.000000e+00 : f32
    %191 = vector.broadcast %cst_77 : f32 to vector<2x32xf32>
    %192 = arith.addf %191, %190 : vector<2x32xf32>
    %cst_78 = arith.constant 1.000000e+00 : f32
    %193 = vector.broadcast %cst_78 : f32 to vector<2x32xf32>
    %194 = arith.divf %193, %192 : vector<2x32xf32>
    %195 = arith.mulf %184, %162 : vector<2x32xf32>
    %196 = arith.mulf %176, %186 : vector<2x32xf32>
    %197 = arith.addf %195, %196 : vector<2x32xf32>
    %198 = math.tanh %197 : vector<2x32xf32>
    %199 = arith.mulf %194, %198 : vector<2x32xf32>
    %c8 = arith.constant 8 : index
    %c0_79 = arith.constant 0 : index
    %200 = vector.load %arg18[%c8, %c0_79] : memref<16x32xf32, #tpu.memory_space<vmem>>, vector<2x32xf32>
    tpu.vector_store %arg18[%c8, %c0_79], %199 {strides = array<i32>} : memref<16x32xf32, #tpu.memory_space<vmem>>, vector<2x32xf32>,
    %201 = vector.extract_strided_slice %23 {offsets = [10, 0], sizes = [2, 128], strides = [1, 1]} : vector<16x128xf32> to vector<2x128xf32>
    %cst_80 = arith.constant dense<0.000000e+00> : vector<2x128xf32>
    %202 = tpu.matmul %199, %16, %cst_80 {dimension_numbers = #tpu.dot_dimension_numbers<[1], [0], [0], [1], [0, 0, 1, 1], [], []>} : vector<2x32xf32>, vector<32x128xf32>, vector<2x128xf32> -> vector<2x128xf32>
    %203 = arith.addf %201, %202 : vector<2x128xf32>
    %204 = vector.extract_strided_slice %203 {offsets = [0, 0], sizes = [2, 32], strides = [1, 1]} : vector<2x128xf32> to vector<2x32xf32>
    %cst_81 = arith.constant 0.000000e+00 : f32
    %205 = vector.broadcast %cst_81 : f32 to vector<2x32xf32>
    %206 = arith.subf %205, %204 : vector<2x32xf32>
    %207 = math.exp %206 : vector<2x32xf32>
    %cst_82 = arith.constant 1.000000e+00 : f32
    %208 = vector.broadcast %cst_82 : f32 to vector<2x32xf32>
    %209 = arith.addf %208, %207 : vector<2x32xf32>
    %cst_83 = arith.constant 1.000000e+00 : f32
    %210 = vector.broadcast %cst_83 : f32 to vector<2x32xf32>
    %211 = arith.divf %210, %209 : vector<2x32xf32>
    %212 = vector.extract_strided_slice %203 {offsets = [0, 32], sizes = [2, 32], strides = [1, 1]} : vector<2x128xf32> to vector<2x32xf32>
    %cst_84 = arith.constant 0.000000e+00 : f32
    %213 = vector.broadcast %cst_84 : f32 to vector<2x32xf32>
    %214 = arith.subf %213, %212 : vector<2x32xf32>
    %215 = math.exp %214 : vector<2x32xf32>
    %cst_85 = arith.constant 1.000000e+00 : f32
    %216 = vector.broadcast %cst_85 : f32 to vector<2x32xf32>
    %217 = arith.addf %216, %215 : vector<2x32xf32>
    %cst_86 = arith.constant 1.000000e+00 : f32
    %218 = vector.broadcast %cst_86 : f32 to vector<2x32xf32>
    %219 = arith.divf %218, %217 : vector<2x32xf32>
    %220 = vector.extract_strided_slice %203 {offsets = [0, 64], sizes = [2, 32], strides = [1, 1]} : vector<2x128xf32> to vector<2x32xf32>
    %221 = math.tanh %220 : vector<2x32xf32>
    %222 = vector.extract_strided_slice %203 {offsets = [0, 96], sizes = [2, 32], strides = [1, 1]} : vector<2x128xf32> to vector<2x32xf32>
    %cst_87 = arith.constant 0.000000e+00 : f32
    %223 = vector.broadcast %cst_87 : f32 to vector<2x32xf32>
    %224 = arith.subf %223, %222 : vector<2x32xf32>
    %225 = math.exp %224 : vector<2x32xf32>
    %cst_88 = arith.constant 1.000000e+00 : f32
    %226 = vector.broadcast %cst_88 : f32 to vector<2x32xf32>
    %227 = arith.addf %226, %225 : vector<2x32xf32>
    %cst_89 = arith.constant 1.000000e+00 : f32
    %228 = vector.broadcast %cst_89 : f32 to vector<2x32xf32>
    %229 = arith.divf %228, %227 : vector<2x32xf32>
    %230 = arith.mulf %219, %197 : vector<2x32xf32>
    %231 = arith.mulf %211, %221 : vector<2x32xf32>
    %232 = arith.addf %230, %231 : vector<2x32xf32>
    %233 = math.tanh %232 : vector<2x32xf32>
    %234 = arith.mulf %229, %233 : vector<2x32xf32>
    %c10 = arith.constant 10 : index
    %c0_90 = arith.constant 0 : index
    %235 = vector.load %arg18[%c10, %c0_90] : memref<16x32xf32, #tpu.memory_space<vmem>>, vector<2x32xf32>
    tpu.vector_store %arg18[%c10, %c0_90], %234 {strides = array<i32>} : memref<16x32xf32, #tpu.memory_space<vmem>>, vector<2x32xf32>,
    %236 = vector.extract_strided_slice %23 {offsets = [12, 0], sizes = [2, 128], strides = [1, 1]} : vector<16x128xf32> to vector<2x128xf32>
    %cst_91 = arith.constant dense<0.000000e+00> : vector<2x128xf32>
    %237 = tpu.matmul %234, %16, %cst_91 {dimension_numbers = #tpu.dot_dimension_numbers<[1], [0], [0], [1], [0, 0, 1, 1], [], []>} : vector<2x32xf32>, vector<32x128xf32>, vector<2x128xf32> -> vector<2x128xf32>
    %238 = arith.addf %236, %237 : vector<2x128xf32>
    %239 = vector.extract_strided_slice %238 {offsets = [0, 0], sizes = [2, 32], strides = [1, 1]} : vector<2x128xf32> to vector<2x32xf32>
    %cst_92 = arith.constant 0.000000e+00 : f32
    %240 = vector.broadcast %cst_92 : f32 to vector<2x32xf32>
    %241 = arith.subf %240, %239 : vector<2x32xf32>
    %242 = math.exp %241 : vector<2x32xf32>
    %cst_93 = arith.constant 1.000000e+00 : f32
    %243 = vector.broadcast %cst_93 : f32 to vector<2x32xf32>
    %244 = arith.addf %243, %242 : vector<2x32xf32>
    %cst_94 = arith.constant 1.000000e+00 : f32
    %245 = vector.broadcast %cst_94 : f32 to vector<2x32xf32>
    %246 = arith.divf %245, %244 : vector<2x32xf32>
    %247 = vector.extract_strided_slice %238 {offsets = [0, 32], sizes = [2, 32], strides = [1, 1]} : vector<2x128xf32> to vector<2x32xf32>
    %cst_95 = arith.constant 0.000000e+00 : f32
    %248 = vector.broadcast %cst_95 : f32 to vector<2x32xf32>
    %249 = arith.subf %248, %247 : vector<2x32xf32>
    %250 = math.exp %249 : vector<2x32xf32>
    %cst_96 = arith.constant 1.000000e+00 : f32
    %251 = vector.broadcast %cst_96 : f32 to vector<2x32xf32>
    %252 = arith.addf %251, %250 : vector<2x32xf32>
    %cst_97 = arith.constant 1.000000e+00 : f32
    %253 = vector.broadcast %cst_97 : f32 to vector<2x32xf32>
    %254 = arith.divf %253, %252 : vector<2x32xf32>
    %255 = vector.extract_strided_slice %238 {offsets = [0, 64], sizes = [2, 32], strides = [1, 1]} : vector<2x128xf32> to vector<2x32xf32>
    %256 = math.tanh %255 : vector<2x32xf32>
    %257 = vector.extract_strided_slice %238 {offsets = [0, 96], sizes = [2, 32], strides = [1, 1]} : vector<2x128xf32> to vector<2x32xf32>
    %cst_98 = arith.constant 0.000000e+00 : f32
    %258 = vector.broadcast %cst_98 : f32 to vector<2x32xf32>
    %259 = arith.subf %258, %257 : vector<2x32xf32>
    %260 = math.exp %259 : vector<2x32xf32>
    %cst_99 = arith.constant 1.000000e+00 : f32
    %261 = vector.broadcast %cst_99 : f32 to vector<2x32xf32>
    %262 = arith.addf %261, %260 : vector<2x32xf32>
    %cst_100 = arith.constant 1.000000e+00 : f32
    %263 = vector.broadcast %cst_100 : f32 to vector<2x32xf32>
    %264 = arith.divf %263, %262 : vector<2x32xf32>
    %265 = arith.mulf %254, %232 : vector<2x32xf32>
    %266 = arith.mulf %246, %256 : vector<2x32xf32>
    %267 = arith.addf %265, %266 : vector<2x32xf32>
    %268 = math.tanh %267 : vector<2x32xf32>
    %269 = arith.mulf %264, %268 : vector<2x32xf32>
    %c12 = arith.constant 12 : index
    %c0_101 = arith.constant 0 : index
    %270 = vector.load %arg18[%c12, %c0_101] : memref<16x32xf32, #tpu.memory_space<vmem>>, vector<2x32xf32>
    tpu.vector_store %arg18[%c12, %c0_101], %269 {strides = array<i32>} : memref<16x32xf32, #tpu.memory_space<vmem>>, vector<2x32xf32>,
    %271 = vector.extract_strided_slice %23 {offsets = [14, 0], sizes = [2, 128], strides = [1, 1]} : vector<16x128xf32> to vector<2x128xf32>
    %cst_102 = arith.constant dense<0.000000e+00> : vector<2x128xf32>
    %272 = tpu.matmul %269, %16, %cst_102 {dimension_numbers = #tpu.dot_dimension_numbers<[1], [0], [0], [1], [0, 0, 1, 1], [], []>} : vector<2x32xf32>, vector<32x128xf32>, vector<2x128xf32> -> vector<2x128xf32>
    %273 = arith.addf %271, %272 : vector<2x128xf32>
    %274 = vector.extract_strided_slice %273 {offsets = [0, 0], sizes = [2, 32], strides = [1, 1]} : vector<2x128xf32> to vector<2x32xf32>
    %cst_103 = arith.constant 0.000000e+00 : f32
    %275 = vector.broadcast %cst_103 : f32 to vector<2x32xf32>
    %276 = arith.subf %275, %274 : vector<2x32xf32>
    %277 = math.exp %276 : vector<2x32xf32>
    %cst_104 = arith.constant 1.000000e+00 : f32
    %278 = vector.broadcast %cst_104 : f32 to vector<2x32xf32>
    %279 = arith.addf %278, %277 : vector<2x32xf32>
    %cst_105 = arith.constant 1.000000e+00 : f32
    %280 = vector.broadcast %cst_105 : f32 to vector<2x32xf32>
    %281 = arith.divf %280, %279 : vector<2x32xf32>
    %282 = vector.extract_strided_slice %273 {offsets = [0, 32], sizes = [2, 32], strides = [1, 1]} : vector<2x128xf32> to vector<2x32xf32>
    %cst_106 = arith.constant 0.000000e+00 : f32
    %283 = vector.broadcast %cst_106 : f32 to vector<2x32xf32>
    %284 = arith.subf %283, %282 : vector<2x32xf32>
    %285 = math.exp %284 : vector<2x32xf32>
    %cst_107 = arith.constant 1.000000e+00 : f32
    %286 = vector.broadcast %cst_107 : f32 to vector<2x32xf32>
    %287 = arith.addf %286, %285 : vector<2x32xf32>
    %cst_108 = arith.constant 1.000000e+00 : f32
    %288 = vector.broadcast %cst_108 : f32 to vector<2x32xf32>
    %289 = arith.divf %288, %287 : vector<2x32xf32>
    %290 = vector.extract_strided_slice %273 {offsets = [0, 64], sizes = [2, 32], strides = [1, 1]} : vector<2x128xf32> to vector<2x32xf32>
    %291 = math.tanh %290 : vector<2x32xf32>
    %292 = vector.extract_strided_slice %273 {offsets = [0, 96], sizes = [2, 32], strides = [1, 1]} : vector<2x128xf32> to vector<2x32xf32>
    %cst_109 = arith.constant 0.000000e+00 : f32
    %293 = vector.broadcast %cst_109 : f32 to vector<2x32xf32>
    %294 = arith.subf %293, %292 : vector<2x32xf32>
    %295 = math.exp %294 : vector<2x32xf32>
    %cst_110 = arith.constant 1.000000e+00 : f32
    %296 = vector.broadcast %cst_110 : f32 to vector<2x32xf32>
    %297 = arith.addf %296, %295 : vector<2x32xf32>
    %cst_111 = arith.constant 1.000000e+00 : f32
    %298 = vector.broadcast %cst_111 : f32 to vector<2x32xf32>
    %299 = arith.divf %298, %297 : vector<2x32xf32>
    %300 = arith.mulf %289, %267 : vector<2x32xf32>
    %301 = arith.mulf %281, %291 : vector<2x32xf32>
    %302 = arith.addf %300, %301 : vector<2x32xf32>
    %303 = math.tanh %302 : vector<2x32xf32>
    %304 = arith.mulf %299, %303 : vector<2x32xf32>
    %c14 = arith.constant 14 : index
    %c0_112 = arith.constant 0 : index
    %305 = vector.load %arg18[%c14, %c0_112] : memref<16x32xf32, #tpu.memory_space<vmem>>, vector<2x32xf32>
    tpu.vector_store %arg18[%c14, %c0_112], %304 {strides = array<i32>} : memref<16x32xf32, #tpu.memory_space<vmem>>, vector<2x32xf32>,
    %c0_113 = arith.constant 0 : index
    %c0_114 = arith.constant 0 : index
    %306 = vector.load %arg18[%c0_113, %c0_114] : memref<16x32xf32, #tpu.memory_space<vmem>>, vector<16x32xf32>
    %c1 = arith.constant 1 : index
    %c0_115 = arith.constant 0 : index
    %c0_116 = arith.constant 0 : index
    %307 = vector.load %arg6[%c1, %c0_115, %c0_116] : memref<2x32x128xf32, #tpu.memory_space<vmem>>, vector<1x32x128xf32>
    %308 = vector.shape_cast %307 : vector<1x32x128xf32> to vector<32x128xf32>
    %c1_117 = arith.constant 1 : index
    %c0_118 = arith.constant 0 : index
    %c0_119 = arith.constant 0 : index
    %309 = vector.load %arg5[%c1_117, %c0_118, %c0_119] : memref<2x32x128xf32, #tpu.memory_space<vmem>>, vector<1x32x128xf32>
    %310 = vector.shape_cast %309 : vector<1x32x128xf32> to vector<32x128xf32>
    %cst_120 = arith.constant dense<0.000000e+00> : vector<16x128xf32>
    %311 = tpu.matmul %306, %310, %cst_120 {dimension_numbers = #tpu.dot_dimension_numbers<[1], [0], [0], [1], [0, 0, 1, 1], [], []>} : vector<16x32xf32>, vector<32x128xf32>, vector<16x128xf32> -> vector<16x128xf32>
    %c1_121 = arith.constant 1 : index
    %c0_122 = arith.constant 0 : index
    %c0_123 = arith.constant 0 : index
    %312 = vector.load %arg7[%c1_121, %c0_122, %c0_123] : memref<2x1x128xf32, #tpu.memory_space<vmem>>, vector<1x1x128xf32>
    %313 = vector.shape_cast %312 : vector<1x1x128xf32> to vector<1x128xf32>
    %314 = vector.broadcast %313 : vector<1x128xf32> to vector<16x128xf32>
    %315 = arith.addf %311, %314 : vector<16x128xf32>
    %cst_124 = arith.constant 0.000000e+00 : f32
    %316 = vector.broadcast %cst_124 : f32 to vector<2x32xf32>
    %cst_125 = arith.constant 0.000000e+00 : f32
    %317 = vector.broadcast %cst_125 : f32 to vector<2x32xf32>
    %318 = vector.extract_strided_slice %315 {offsets = [0, 0], sizes = [2, 128], strides = [1, 1]} : vector<16x128xf32> to vector<2x128xf32>
    %cst_126 = arith.constant dense<0.000000e+00> : vector<2x128xf32>
    %319 = tpu.matmul %316, %308, %cst_126 {dimension_numbers = #tpu.dot_dimension_numbers<[1], [0], [0], [1], [0, 0, 1, 1], [], []>} : vector<2x32xf32>, vector<32x128xf32>, vector<2x128xf32> -> vector<2x128xf32>
    %320 = arith.addf %318, %319 : vector<2x128xf32>
    %321 = vector.extract_strided_slice %320 {offsets = [0, 0], sizes = [2, 32], strides = [1, 1]} : vector<2x128xf32> to vector<2x32xf32>
    %cst_127 = arith.constant 0.000000e+00 : f32
    %322 = vector.broadcast %cst_127 : f32 to vector<2x32xf32>
    %323 = arith.subf %322, %321 : vector<2x32xf32>
    %324 = math.exp %323 : vector<2x32xf32>
    %cst_128 = arith.constant 1.000000e+00 : f32
    %325 = vector.broadcast %cst_128 : f32 to vector<2x32xf32>
    %326 = arith.addf %325, %324 : vector<2x32xf32>
    %cst_129 = arith.constant 1.000000e+00 : f32
    %327 = vector.broadcast %cst_129 : f32 to vector<2x32xf32>
    %328 = arith.divf %327, %326 : vector<2x32xf32>
    %329 = vector.extract_strided_slice %320 {offsets = [0, 32], sizes = [2, 32], strides = [1, 1]} : vector<2x128xf32> to vector<2x32xf32>
    %cst_130 = arith.constant 0.000000e+00 : f32
    %330 = vector.broadcast %cst_130 : f32 to vector<2x32xf32>
    %331 = arith.subf %330, %329 : vector<2x32xf32>
    %332 = math.exp %331 : vector<2x32xf32>
    %cst_131 = arith.constant 1.000000e+00 : f32
    %333 = vector.broadcast %cst_131 : f32 to vector<2x32xf32>
    %334 = arith.addf %333, %332 : vector<2x32xf32>
    %cst_132 = arith.constant 1.000000e+00 : f32
    %335 = vector.broadcast %cst_132 : f32 to vector<2x32xf32>
    %336 = arith.divf %335, %334 : vector<2x32xf32>
    %337 = vector.extract_strided_slice %320 {offsets = [0, 64], sizes = [2, 32], strides = [1, 1]} : vector<2x128xf32> to vector<2x32xf32>
    %338 = math.tanh %337 : vector<2x32xf32>
    %339 = vector.extract_strided_slice %320 {offsets = [0, 96], sizes = [2, 32], strides = [1, 1]} : vector<2x128xf32> to vector<2x32xf32>
    %cst_133 = arith.constant 0.000000e+00 : f32
    %340 = vector.broadcast %cst_133 : f32 to vector<2x32xf32>
    %341 = arith.subf %340, %339 : vector<2x32xf32>
    %342 = math.exp %341 : vector<2x32xf32>
    %cst_134 = arith.constant 1.000000e+00 : f32
    %343 = vector.broadcast %cst_134 : f32 to vector<2x32xf32>
    %344 = arith.addf %343, %342 : vector<2x32xf32>
    %cst_135 = arith.constant 1.000000e+00 : f32
    %345 = vector.broadcast %cst_135 : f32 to vector<2x32xf32>
    %346 = arith.divf %345, %344 : vector<2x32xf32>
    %347 = arith.mulf %336, %317 : vector<2x32xf32>
    %348 = arith.mulf %328, %338 : vector<2x32xf32>
    %349 = arith.addf %347, %348 : vector<2x32xf32>
    %350 = math.tanh %349 : vector<2x32xf32>
    %351 = arith.mulf %346, %350 : vector<2x32xf32>
    %352 = vector.extract_strided_slice %351 {offsets = [0, 0], sizes = [1, 32], strides = [1, 1]} : vector<2x32xf32> to vector<1x32xf32>
    %c0_136 = arith.constant 0 : index
    %c0_137 = arith.constant 0 : index
    %353 = vector.load %arg19[%c0_136, %c0_137] : memref<16x32xf32, #tpu.memory_space<vmem>>, vector<1x32xf32>
    tpu.vector_store %arg19[%c0_136, %c0_137], %352 {strides = array<i32>} : memref<16x32xf32, #tpu.memory_space<vmem>>, vector<1x32xf32>,
    %354 = vector.extract_strided_slice %351 {offsets = [1, 0], sizes = [1, 32], strides = [1, 1]} : vector<2x32xf32> to vector<1x32xf32>
    %c8_138 = arith.constant 8 : index
    %c0_139 = arith.constant 0 : index
    %355 = vector.load %arg19[%c8_138, %c0_139] : memref<16x32xf32, #tpu.memory_space<vmem>>, vector<1x32xf32>
    tpu.vector_store %arg19[%c8_138, %c0_139], %354 {strides = array<i32>} : memref<16x32xf32, #tpu.memory_space<vmem>>, vector<1x32xf32>,
    %356 = vector.extract_strided_slice %315 {offsets = [2, 0], sizes = [2, 128], strides = [1, 1]} : vector<16x128xf32> to vector<2x128xf32>
    %cst_140 = arith.constant dense<0.000000e+00> : vector<2x128xf32>
    %357 = tpu.matmul %351, %308, %cst_140 {dimension_numbers = #tpu.dot_dimension_numbers<[1], [0], [0], [1], [0, 0, 1, 1], [], []>} : vector<2x32xf32>, vector<32x128xf32>, vector<2x128xf32> -> vector<2x128xf32>
    %358 = arith.addf %356, %357 : vector<2x128xf32>
    %359 = vector.extract_strided_slice %358 {offsets = [0, 0], sizes = [2, 32], strides = [1, 1]} : vector<2x128xf32> to vector<2x32xf32>
    %cst_141 = arith.constant 0.000000e+00 : f32
    %360 = vector.broadcast %cst_141 : f32 to vector<2x32xf32>
    %361 = arith.subf %360, %359 : vector<2x32xf32>
    %362 = math.exp %361 : vector<2x32xf32>
    %cst_142 = arith.constant 1.000000e+00 : f32
    %363 = vector.broadcast %cst_142 : f32 to vector<2x32xf32>
    %364 = arith.addf %363, %362 : vector<2x32xf32>
    %cst_143 = arith.constant 1.000000e+00 : f32
    %365 = vector.broadcast %cst_143 : f32 to vector<2x32xf32>
    %366 = arith.divf %365, %364 : vector<2x32xf32>
    %367 = vector.extract_strided_slice %358 {offsets = [0, 32], sizes = [2, 32], strides = [1, 1]} : vector<2x128xf32> to vector<2x32xf32>
    %cst_144 = arith.constant 0.000000e+00 : f32
    %368 = vector.broadcast %cst_144 : f32 to vector<2x32xf32>
    %369 = arith.subf %368, %367 : vector<2x32xf32>
    %370 = math.exp %369 : vector<2x32xf32>
    %cst_145 = arith.constant 1.000000e+00 : f32
    %371 = vector.broadcast %cst_145 : f32 to vector<2x32xf32>
    %372 = arith.addf %371, %370 : vector<2x32xf32>
    %cst_146 = arith.constant 1.000000e+00 : f32
    %373 = vector.broadcast %cst_146 : f32 to vector<2x32xf32>
    %374 = arith.divf %373, %372 : vector<2x32xf32>
    %375 = vector.extract_strided_slice %358 {offsets = [0, 64], sizes = [2, 32], strides = [1, 1]} : vector<2x128xf32> to vector<2x32xf32>
    %376 = math.tanh %375 : vector<2x32xf32>
    %377 = vector.extract_strided_slice %358 {offsets = [0, 96], sizes = [2, 32], strides = [1, 1]} : vector<2x128xf32> to vector<2x32xf32>
    %cst_147 = arith.constant 0.000000e+00 : f32
    %378 = vector.broadcast %cst_147 : f32 to vector<2x32xf32>
    %379 = arith.subf %378, %377 : vector<2x32xf32>
    %380 = math.exp %379 : vector<2x32xf32>
    %cst_148 = arith.constant 1.000000e+00 : f32
    %381 = vector.broadcast %cst_148 : f32 to vector<2x32xf32>
    %382 = arith.addf %381, %380 : vector<2x32xf32>
    %cst_149 = arith.constant 1.000000e+00 : f32
    %383 = vector.broadcast %cst_149 : f32 to vector<2x32xf32>
    %384 = arith.divf %383, %382 : vector<2x32xf32>
    %385 = arith.mulf %374, %349 : vector<2x32xf32>
    %386 = arith.mulf %366, %376 : vector<2x32xf32>
    %387 = arith.addf %385, %386 : vector<2x32xf32>
    %388 = math.tanh %387 : vector<2x32xf32>
    %389 = arith.mulf %384, %388 : vector<2x32xf32>
    %390 = vector.extract_strided_slice %389 {offsets = [0, 0], sizes = [1, 32], strides = [1, 1]} : vector<2x32xf32> to vector<1x32xf32>
    %c1_150 = arith.constant 1 : index
    %c0_151 = arith.constant 0 : index
    %391 = vector.load %arg19[%c1_150, %c0_151] : memref<16x32xf32, #tpu.memory_space<vmem>>, vector<1x32xf32>
    tpu.vector_store %arg19[%c1_150, %c0_151], %390 {strides = array<i32>} : memref<16x32xf32, #tpu.memory_space<vmem>>, vector<1x32xf32>,
    %392 = vector.extract_strided_slice %389 {offsets = [1, 0], sizes = [1, 32], strides = [1, 1]} : vector<2x32xf32> to vector<1x32xf32>
    %c9 = arith.constant 9 : index
    %c0_152 = arith.constant 0 : index
    %393 = vector.load %arg19[%c9, %c0_152] : memref<16x32xf32, #tpu.memory_space<vmem>>, vector<1x32xf32>
    tpu.vector_store %arg19[%c9, %c0_152], %392 {strides = array<i32>} : memref<16x32xf32, #tpu.memory_space<vmem>>, vector<1x32xf32>,
    %394 = vector.extract_strided_slice %315 {offsets = [4, 0], sizes = [2, 128], strides = [1, 1]} : vector<16x128xf32> to vector<2x128xf32>
    %cst_153 = arith.constant dense<0.000000e+00> : vector<2x128xf32>
    %395 = tpu.matmul %389, %308, %cst_153 {dimension_numbers = #tpu.dot_dimension_numbers<[1], [0], [0], [1], [0, 0, 1, 1], [], []>} : vector<2x32xf32>, vector<32x128xf32>, vector<2x128xf32> -> vector<2x128xf32>
    %396 = arith.addf %394, %395 : vector<2x128xf32>
    %397 = vector.extract_strided_slice %396 {offsets = [0, 0], sizes = [2, 32], strides = [1, 1]} : vector<2x128xf32> to vector<2x32xf32>
    %cst_154 = arith.constant 0.000000e+00 : f32
    %398 = vector.broadcast %cst_154 : f32 to vector<2x32xf32>
    %399 = arith.subf %398, %397 : vector<2x32xf32>
    %400 = math.exp %399 : vector<2x32xf32>
    %cst_155 = arith.constant 1.000000e+00 : f32
    %401 = vector.broadcast %cst_155 : f32 to vector<2x32xf32>
    %402 = arith.addf %401, %400 : vector<2x32xf32>
    %cst_156 = arith.constant 1.000000e+00 : f32
    %403 = vector.broadcast %cst_156 : f32 to vector<2x32xf32>
    %404 = arith.divf %403, %402 : vector<2x32xf32>
    %405 = vector.extract_strided_slice %396 {offsets = [0, 32], sizes = [2, 32], strides = [1, 1]} : vector<2x128xf32> to vector<2x32xf32>
    %cst_157 = arith.constant 0.000000e+00 : f32
    %406 = vector.broadcast %cst_157 : f32 to vector<2x32xf32>
    %407 = arith.subf %406, %405 : vector<2x32xf32>
    %408 = math.exp %407 : vector<2x32xf32>
    %cst_158 = arith.constant 1.000000e+00 : f32
    %409 = vector.broadcast %cst_158 : f32 to vector<2x32xf32>
    %410 = arith.addf %409, %408 : vector<2x32xf32>
    %cst_159 = arith.constant 1.000000e+00 : f32
    %411 = vector.broadcast %cst_159 : f32 to vector<2x32xf32>
    %412 = arith.divf %411, %410 : vector<2x32xf32>
    %413 = vector.extract_strided_slice %396 {offsets = [0, 64], sizes = [2, 32], strides = [1, 1]} : vector<2x128xf32> to vector<2x32xf32>
    %414 = math.tanh %413 : vector<2x32xf32>
    %415 = vector.extract_strided_slice %396 {offsets = [0, 96], sizes = [2, 32], strides = [1, 1]} : vector<2x128xf32> to vector<2x32xf32>
    %cst_160 = arith.constant 0.000000e+00 : f32
    %416 = vector.broadcast %cst_160 : f32 to vector<2x32xf32>
    %417 = arith.subf %416, %415 : vector<2x32xf32>
    %418 = math.exp %417 : vector<2x32xf32>
    %cst_161 = arith.constant 1.000000e+00 : f32
    %419 = vector.broadcast %cst_161 : f32 to vector<2x32xf32>
    %420 = arith.addf %419, %418 : vector<2x32xf32>
    %cst_162 = arith.constant 1.000000e+00 : f32
    %421 = vector.broadcast %cst_162 : f32 to vector<2x32xf32>
    %422 = arith.divf %421, %420 : vector<2x32xf32>
    %423 = arith.mulf %412, %387 : vector<2x32xf32>
    %424 = arith.mulf %404, %414 : vector<2x32xf32>
    %425 = arith.addf %423, %424 : vector<2x32xf32>
    %426 = math.tanh %425 : vector<2x32xf32>
    %427 = arith.mulf %422, %426 : vector<2x32xf32>
    %428 = vector.extract_strided_slice %427 {offsets = [0, 0], sizes = [1, 32], strides = [1, 1]} : vector<2x32xf32> to vector<1x32xf32>
    %c2_163 = arith.constant 2 : index
    %c0_164 = arith.constant 0 : index
    %429 = vector.load %arg19[%c2_163, %c0_164] : memref<16x32xf32, #tpu.memory_space<vmem>>, vector<1x32xf32>
    tpu.vector_store %arg19[%c2_163, %c0_164], %428 {strides = array<i32>} : memref<16x32xf32, #tpu.memory_space<vmem>>, vector<1x32xf32>,
    %430 = vector.extract_strided_slice %427 {offsets = [1, 0], sizes = [1, 32], strides = [1, 1]} : vector<2x32xf32> to vector<1x32xf32>
    %c10_165 = arith.constant 10 : index
    %c0_166 = arith.constant 0 : index
    %431 = vector.load %arg19[%c10_165, %c0_166] : memref<16x32xf32, #tpu.memory_space<vmem>>, vector<1x32xf32>
    tpu.vector_store %arg19[%c10_165, %c0_166], %430 {strides = array<i32>} : memref<16x32xf32, #tpu.memory_space<vmem>>, vector<1x32xf32>,
    %432 = vector.extract_strided_slice %315 {offsets = [6, 0], sizes = [2, 128], strides = [1, 1]} : vector<16x128xf32> to vector<2x128xf32>
    %cst_167 = arith.constant dense<0.000000e+00> : vector<2x128xf32>
    %433 = tpu.matmul %427, %308, %cst_167 {dimension_numbers = #tpu.dot_dimension_numbers<[1], [0], [0], [1], [0, 0, 1, 1], [], []>} : vector<2x32xf32>, vector<32x128xf32>, vector<2x128xf32> -> vector<2x128xf32>
    %434 = arith.addf %432, %433 : vector<2x128xf32>
    %435 = vector.extract_strided_slice %434 {offsets = [0, 0], sizes = [2, 32], strides = [1, 1]} : vector<2x128xf32> to vector<2x32xf32>
    %cst_168 = arith.constant 0.000000e+00 : f32
    %436 = vector.broadcast %cst_168 : f32 to vector<2x32xf32>
    %437 = arith.subf %436, %435 : vector<2x32xf32>
    %438 = math.exp %437 : vector<2x32xf32>
    %cst_169 = arith.constant 1.000000e+00 : f32
    %439 = vector.broadcast %cst_169 : f32 to vector<2x32xf32>
    %440 = arith.addf %439, %438 : vector<2x32xf32>
    %cst_170 = arith.constant 1.000000e+00 : f32
    %441 = vector.broadcast %cst_170 : f32 to vector<2x32xf32>
    %442 = arith.divf %441, %440 : vector<2x32xf32>
    %443 = vector.extract_strided_slice %434 {offsets = [0, 32], sizes = [2, 32], strides = [1, 1]} : vector<2x128xf32> to vector<2x32xf32>
    %cst_171 = arith.constant 0.000000e+00 : f32
    %444 = vector.broadcast %cst_171 : f32 to vector<2x32xf32>
    %445 = arith.subf %444, %443 : vector<2x32xf32>
    %446 = math.exp %445 : vector<2x32xf32>
    %cst_172 = arith.constant 1.000000e+00 : f32
    %447 = vector.broadcast %cst_172 : f32 to vector<2x32xf32>
    %448 = arith.addf %447, %446 : vector<2x32xf32>
    %cst_173 = arith.constant 1.000000e+00 : f32
    %449 = vector.broadcast %cst_173 : f32 to vector<2x32xf32>
    %450 = arith.divf %449, %448 : vector<2x32xf32>
    %451 = vector.extract_strided_slice %434 {offsets = [0, 64], sizes = [2, 32], strides = [1, 1]} : vector<2x128xf32> to vector<2x32xf32>
    %452 = math.tanh %451 : vector<2x32xf32>
    %453 = vector.extract_strided_slice %434 {offsets = [0, 96], sizes = [2, 32], strides = [1, 1]} : vector<2x128xf32> to vector<2x32xf32>
    %cst_174 = arith.constant 0.000000e+00 : f32
    %454 = vector.broadcast %cst_174 : f32 to vector<2x32xf32>
    %455 = arith.subf %454, %453 : vector<2x32xf32>
    %456 = math.exp %455 : vector<2x32xf32>
    %cst_175 = arith.constant 1.000000e+00 : f32
    %457 = vector.broadcast %cst_175 : f32 to vector<2x32xf32>
    %458 = arith.addf %457, %456 : vector<2x32xf32>
    %cst_176 = arith.constant 1.000000e+00 : f32
    %459 = vector.broadcast %cst_176 : f32 to vector<2x32xf32>
    %460 = arith.divf %459, %458 : vector<2x32xf32>
    %461 = arith.mulf %450, %425 : vector<2x32xf32>
    %462 = arith.mulf %442, %452 : vector<2x32xf32>
    %463 = arith.addf %461, %462 : vector<2x32xf32>
    %464 = math.tanh %463 : vector<2x32xf32>
    %465 = arith.mulf %460, %464 : vector<2x32xf32>
    %466 = vector.extract_strided_slice %465 {offsets = [0, 0], sizes = [1, 32], strides = [1, 1]} : vector<2x32xf32> to vector<1x32xf32>
    %c3 = arith.constant 3 : index
    %c0_177 = arith.constant 0 : index
    %467 = vector.load %arg19[%c3, %c0_177] : memref<16x32xf32, #tpu.memory_space<vmem>>, vector<1x32xf32>
    tpu.vector_store %arg19[%c3, %c0_177], %466 {strides = array<i32>} : memref<16x32xf32, #tpu.memory_space<vmem>>, vector<1x32xf32>,
    %468 = vector.extract_strided_slice %465 {offsets = [1, 0], sizes = [1, 32], strides = [1, 1]} : vector<2x32xf32> to vector<1x32xf32>
    %c11 = arith.constant 11 : index
    %c0_178 = arith.constant 0 : index
    %469 = vector.load %arg19[%c11, %c0_178] : memref<16x32xf32, #tpu.memory_space<vmem>>, vector<1x32xf32>
    tpu.vector_store %arg19[%c11, %c0_178], %468 {strides = array<i32>} : memref<16x32xf32, #tpu.memory_space<vmem>>, vector<1x32xf32>,
    %470 = vector.extract_strided_slice %315 {offsets = [8, 0], sizes = [2, 128], strides = [1, 1]} : vector<16x128xf32> to vector<2x128xf32>
    %cst_179 = arith.constant dense<0.000000e+00> : vector<2x128xf32>
    %471 = tpu.matmul %465, %308, %cst_179 {dimension_numbers = #tpu.dot_dimension_numbers<[1], [0], [0], [1], [0, 0, 1, 1], [], []>} : vector<2x32xf32>, vector<32x128xf32>, vector<2x128xf32> -> vector<2x128xf32>
    %472 = arith.addf %470, %471 : vector<2x128xf32>
    %473 = vector.extract_strided_slice %472 {offsets = [0, 0], sizes = [2, 32], strides = [1, 1]} : vector<2x128xf32> to vector<2x32xf32>
    %cst_180 = arith.constant 0.000000e+00 : f32
    %474 = vector.broadcast %cst_180 : f32 to vector<2x32xf32>
    %475 = arith.subf %474, %473 : vector<2x32xf32>
    %476 = math.exp %475 : vector<2x32xf32>
    %cst_181 = arith.constant 1.000000e+00 : f32
    %477 = vector.broadcast %cst_181 : f32 to vector<2x32xf32>
    %478 = arith.addf %477, %476 : vector<2x32xf32>
    %cst_182 = arith.constant 1.000000e+00 : f32
    %479 = vector.broadcast %cst_182 : f32 to vector<2x32xf32>
    %480 = arith.divf %479, %478 : vector<2x32xf32>
    %481 = vector.extract_strided_slice %472 {offsets = [0, 32], sizes = [2, 32], strides = [1, 1]} : vector<2x128xf32> to vector<2x32xf32>
    %cst_183 = arith.constant 0.000000e+00 : f32
    %482 = vector.broadcast %cst_183 : f32 to vector<2x32xf32>
    %483 = arith.subf %482, %481 : vector<2x32xf32>
    %484 = math.exp %483 : vector<2x32xf32>
    %cst_184 = arith.constant 1.000000e+00 : f32
    %485 = vector.broadcast %cst_184 : f32 to vector<2x32xf32>
    %486 = arith.addf %485, %484 : vector<2x32xf32>
    %cst_185 = arith.constant 1.000000e+00 : f32
    %487 = vector.broadcast %cst_185 : f32 to vector<2x32xf32>
    %488 = arith.divf %487, %486 : vector<2x32xf32>
    %489 = vector.extract_strided_slice %472 {offsets = [0, 64], sizes = [2, 32], strides = [1, 1]} : vector<2x128xf32> to vector<2x32xf32>
    %490 = math.tanh %489 : vector<2x32xf32>
    %491 = vector.extract_strided_slice %472 {offsets = [0, 96], sizes = [2, 32], strides = [1, 1]} : vector<2x128xf32> to vector<2x32xf32>
    %cst_186 = arith.constant 0.000000e+00 : f32
    %492 = vector.broadcast %cst_186 : f32 to vector<2x32xf32>
    %493 = arith.subf %492, %491 : vector<2x32xf32>
    %494 = math.exp %493 : vector<2x32xf32>
    %cst_187 = arith.constant 1.000000e+00 : f32
    %495 = vector.broadcast %cst_187 : f32 to vector<2x32xf32>
    %496 = arith.addf %495, %494 : vector<2x32xf32>
    %cst_188 = arith.constant 1.000000e+00 : f32
    %497 = vector.broadcast %cst_188 : f32 to vector<2x32xf32>
    %498 = arith.divf %497, %496 : vector<2x32xf32>
    %499 = arith.mulf %488, %463 : vector<2x32xf32>
    %500 = arith.mulf %480, %490 : vector<2x32xf32>
    %501 = arith.addf %499, %500 : vector<2x32xf32>
    %502 = math.tanh %501 : vector<2x32xf32>
    %503 = arith.mulf %498, %502 : vector<2x32xf32>
    %504 = vector.extract_strided_slice %503 {offsets = [0, 0], sizes = [1, 32], strides = [1, 1]} : vector<2x32xf32> to vector<1x32xf32>
    %c4_189 = arith.constant 4 : index
    %c0_190 = arith.constant 0 : index
    %505 = vector.load %arg19[%c4_189, %c0_190] : memref<16x32xf32, #tpu.memory_space<vmem>>, vector<1x32xf32>
    tpu.vector_store %arg19[%c4_189, %c0_190], %504 {strides = array<i32>} : memref<16x32xf32, #tpu.memory_space<vmem>>, vector<1x32xf32>,
    %506 = vector.extract_strided_slice %503 {offsets = [1, 0], sizes = [1, 32], strides = [1, 1]} : vector<2x32xf32> to vector<1x32xf32>
    %c12_191 = arith.constant 12 : index
    %c0_192 = arith.constant 0 : index
    %507 = vector.load %arg19[%c12_191, %c0_192] : memref<16x32xf32, #tpu.memory_space<vmem>>, vector<1x32xf32>
    tpu.vector_store %arg19[%c12_191, %c0_192], %506 {strides = array<i32>} : memref<16x32xf32, #tpu.memory_space<vmem>>, vector<1x32xf32>,
    %508 = vector.extract_strided_slice %315 {offsets = [10, 0], sizes = [2, 128], strides = [1, 1]} : vector<16x128xf32> to vector<2x128xf32>
    %cst_193 = arith.constant dense<0.000000e+00> : vector<2x128xf32>
    %509 = tpu.matmul %503, %308, %cst_193 {dimension_numbers = #tpu.dot_dimension_numbers<[1], [0], [0], [1], [0, 0, 1, 1], [], []>} : vector<2x32xf32>, vector<32x128xf32>, vector<2x128xf32> -> vector<2x128xf32>
    %510 = arith.addf %508, %509 : vector<2x128xf32>
    %511 = vector.extract_strided_slice %510 {offsets = [0, 0], sizes = [2, 32], strides = [1, 1]} : vector<2x128xf32> to vector<2x32xf32>
    %cst_194 = arith.constant 0.000000e+00 : f32
    %512 = vector.broadcast %cst_194 : f32 to vector<2x32xf32>
    %513 = arith.subf %512, %511 : vector<2x32xf32>
    %514 = math.exp %513 : vector<2x32xf32>
    %cst_195 = arith.constant 1.000000e+00 : f32
    %515 = vector.broadcast %cst_195 : f32 to vector<2x32xf32>
    %516 = arith.addf %515, %514 : vector<2x32xf32>
    %cst_196 = arith.constant 1.000000e+00 : f32
    %517 = vector.broadcast %cst_196 : f32 to vector<2x32xf32>
    %518 = arith.divf %517, %516 : vector<2x32xf32>
    %519 = vector.extract_strided_slice %510 {offsets = [0, 32], sizes = [2, 32], strides = [1, 1]} : vector<2x128xf32> to vector<2x32xf32>
    %cst_197 = arith.constant 0.000000e+00 : f32
    %520 = vector.broadcast %cst_197 : f32 to vector<2x32xf32>
    %521 = arith.subf %520, %519 : vector<2x32xf32>
    %522 = math.exp %521 : vector<2x32xf32>
    %cst_198 = arith.constant 1.000000e+00 : f32
    %523 = vector.broadcast %cst_198 : f32 to vector<2x32xf32>
    %524 = arith.addf %523, %522 : vector<2x32xf32>
    %cst_199 = arith.constant 1.000000e+00 : f32
    %525 = vector.broadcast %cst_199 : f32 to vector<2x32xf32>
    %526 = arith.divf %525, %524 : vector<2x32xf32>
    %527 = vector.extract_strided_slice %510 {offsets = [0, 64], sizes = [2, 32], strides = [1, 1]} : vector<2x128xf32> to vector<2x32xf32>
    %528 = math.tanh %527 : vector<2x32xf32>
    %529 = vector.extract_strided_slice %510 {offsets = [0, 96], sizes = [2, 32], strides = [1, 1]} : vector<2x128xf32> to vector<2x32xf32>
    %cst_200 = arith.constant 0.000000e+00 : f32
    %530 = vector.broadcast %cst_200 : f32 to vector<2x32xf32>
    %531 = arith.subf %530, %529 : vector<2x32xf32>
    %532 = math.exp %531 : vector<2x32xf32>
    %cst_201 = arith.constant 1.000000e+00 : f32
    %533 = vector.broadcast %cst_201 : f32 to vector<2x32xf32>
    %534 = arith.addf %533, %532 : vector<2x32xf32>
    %cst_202 = arith.constant 1.000000e+00 : f32
    %535 = vector.broadcast %cst_202 : f32 to vector<2x32xf32>
    %536 = arith.divf %535, %534 : vector<2x32xf32>
    %537 = arith.mulf %526, %501 : vector<2x32xf32>
    %538 = arith.mulf %518, %528 : vector<2x32xf32>
    %539 = arith.addf %537, %538 : vector<2x32xf32>
    %540 = math.tanh %539 : vector<2x32xf32>
    %541 = arith.mulf %536, %540 : vector<2x32xf32>
    %542 = vector.extract_strided_slice %541 {offsets = [0, 0], sizes = [1, 32], strides = [1, 1]} : vector<2x32xf32> to vector<1x32xf32>
    %c5 = arith.constant 5 : index
    %c0_203 = arith.constant 0 : index
    %543 = vector.load %arg19[%c5, %c0_203] : memref<16x32xf32, #tpu.memory_space<vmem>>, vector<1x32xf32>
    tpu.vector_store %arg19[%c5, %c0_203], %542 {strides = array<i32>} : memref<16x32xf32, #tpu.memory_space<vmem>>, vector<1x32xf32>,
    %544 = vector.extract_strided_slice %541 {offsets = [1, 0], sizes = [1, 32], strides = [1, 1]} : vector<2x32xf32> to vector<1x32xf32>
    %c13 = arith.constant 13 : index
    %c0_204 = arith.constant 0 : index
    %545 = vector.load %arg19[%c13, %c0_204] : memref<16x32xf32, #tpu.memory_space<vmem>>, vector<1x32xf32>
    tpu.vector_store %arg19[%c13, %c0_204], %544 {strides = array<i32>} : memref<16x32xf32, #tpu.memory_space<vmem>>, vector<1x32xf32>,
    %546 = vector.extract_strided_slice %315 {offsets = [12, 0], sizes = [2, 128], strides = [1, 1]} : vector<16x128xf32> to vector<2x128xf32>
    %cst_205 = arith.constant dense<0.000000e+00> : vector<2x128xf32>
    %547 = tpu.matmul %541, %308, %cst_205 {dimension_numbers = #tpu.dot_dimension_numbers<[1], [0], [0], [1], [0, 0, 1, 1], [], []>} : vector<2x32xf32>, vector<32x128xf32>, vector<2x128xf32> -> vector<2x128xf32>
    %548 = arith.addf %546, %547 : vector<2x128xf32>
    %549 = vector.extract_strided_slice %548 {offsets = [0, 0], sizes = [2, 32], strides = [1, 1]} : vector<2x128xf32> to vector<2x32xf32>
    %cst_206 = arith.constant 0.000000e+00 : f32
    %550 = vector.broadcast %cst_206 : f32 to vector<2x32xf32>
    %551 = arith.subf %550, %549 : vector<2x32xf32>
    %552 = math.exp %551 : vector<2x32xf32>
    %cst_207 = arith.constant 1.000000e+00 : f32
    %553 = vector.broadcast %cst_207 : f32 to vector<2x32xf32>
    %554 = arith.addf %553, %552 : vector<2x32xf32>
    %cst_208 = arith.constant 1.000000e+00 : f32
    %555 = vector.broadcast %cst_208 : f32 to vector<2x32xf32>
    %556 = arith.divf %555, %554 : vector<2x32xf32>
    %557 = vector.extract_strided_slice %548 {offsets = [0, 32], sizes = [2, 32], strides = [1, 1]} : vector<2x128xf32> to vector<2x32xf32>
    %cst_209 = arith.constant 0.000000e+00 : f32
    %558 = vector.broadcast %cst_209 : f32 to vector<2x32xf32>
    %559 = arith.subf %558, %557 : vector<2x32xf32>
    %560 = math.exp %559 : vector<2x32xf32>
    %cst_210 = arith.constant 1.000000e+00 : f32
    %561 = vector.broadcast %cst_210 : f32 to vector<2x32xf32>
    %562 = arith.addf %561, %560 : vector<2x32xf32>
    %cst_211 = arith.constant 1.000000e+00 : f32
    %563 = vector.broadcast %cst_211 : f32 to vector<2x32xf32>
    %564 = arith.divf %563, %562 : vector<2x32xf32>
    %565 = vector.extract_strided_slice %548 {offsets = [0, 64], sizes = [2, 32], strides = [1, 1]} : vector<2x128xf32> to vector<2x32xf32>
    %566 = math.tanh %565 : vector<2x32xf32>
    %567 = vector.extract_strided_slice %548 {offsets = [0, 96], sizes = [2, 32], strides = [1, 1]} : vector<2x128xf32> to vector<2x32xf32>
    %cst_212 = arith.constant 0.000000e+00 : f32
    %568 = vector.broadcast %cst_212 : f32 to vector<2x32xf32>
    %569 = arith.subf %568, %567 : vector<2x32xf32>
    %570 = math.exp %569 : vector<2x32xf32>
    %cst_213 = arith.constant 1.000000e+00 : f32
    %571 = vector.broadcast %cst_213 : f32 to vector<2x32xf32>
    %572 = arith.addf %571, %570 : vector<2x32xf32>
    %cst_214 = arith.constant 1.000000e+00 : f32
    %573 = vector.broadcast %cst_214 : f32 to vector<2x32xf32>
    %574 = arith.divf %573, %572 : vector<2x32xf32>
    %575 = arith.mulf %564, %539 : vector<2x32xf32>
    %576 = arith.mulf %556, %566 : vector<2x32xf32>
    %577 = arith.addf %575, %576 : vector<2x32xf32>
    %578 = math.tanh %577 : vector<2x32xf32>
    %579 = arith.mulf %574, %578 : vector<2x32xf32>
    %580 = vector.extract_strided_slice %579 {offsets = [0, 0], sizes = [1, 32], strides = [1, 1]} : vector<2x32xf32> to vector<1x32xf32>
    %c6_215 = arith.constant 6 : index
    %c0_216 = arith.constant 0 : index
    %581 = vector.load %arg19[%c6_215, %c0_216] : memref<16x32xf32, #tpu.memory_space<vmem>>, vector<1x32xf32>
    tpu.vector_store %arg19[%c6_215, %c0_216], %580 {strides = array<i32>} : memref<16x32xf32, #tpu.memory_space<vmem>>, vector<1x32xf32>,
    %582 = vector.extract_strided_slice %579 {offsets = [1, 0], sizes = [1, 32], strides = [1, 1]} : vector<2x32xf32> to vector<1x32xf32>
    %c14_217 = arith.constant 14 : index
    %c0_218 = arith.constant 0 : index
    %583 = vector.load %arg19[%c14_217, %c0_218] : memref<16x32xf32, #tpu.memory_space<vmem>>, vector<1x32xf32>
    tpu.vector_store %arg19[%c14_217, %c0_218], %582 {strides = array<i32>} : memref<16x32xf32, #tpu.memory_space<vmem>>, vector<1x32xf32>,
    %584 = vector.extract_strided_slice %315 {offsets = [14, 0], sizes = [2, 128], strides = [1, 1]} : vector<16x128xf32> to vector<2x128xf32>
    %cst_219 = arith.constant dense<0.000000e+00> : vector<2x128xf32>
    %585 = tpu.matmul %579, %308, %cst_219 {dimension_numbers = #tpu.dot_dimension_numbers<[1], [0], [0], [1], [0, 0, 1, 1], [], []>} : vector<2x32xf32>, vector<32x128xf32>, vector<2x128xf32> -> vector<2x128xf32>
    %586 = arith.addf %584, %585 : vector<2x128xf32>
    %587 = vector.extract_strided_slice %586 {offsets = [0, 0], sizes = [2, 32], strides = [1, 1]} : vector<2x128xf32> to vector<2x32xf32>
    %cst_220 = arith.constant 0.000000e+00 : f32
    %588 = vector.broadcast %cst_220 : f32 to vector<2x32xf32>
    %589 = arith.subf %588, %587 : vector<2x32xf32>
    %590 = math.exp %589 : vector<2x32xf32>
    %cst_221 = arith.constant 1.000000e+00 : f32
    %591 = vector.broadcast %cst_221 : f32 to vector<2x32xf32>
    %592 = arith.addf %591, %590 : vector<2x32xf32>
    %cst_222 = arith.constant 1.000000e+00 : f32
    %593 = vector.broadcast %cst_222 : f32 to vector<2x32xf32>
    %594 = arith.divf %593, %592 : vector<2x32xf32>
    %595 = vector.extract_strided_slice %586 {offsets = [0, 32], sizes = [2, 32], strides = [1, 1]} : vector<2x128xf32> to vector<2x32xf32>
    %cst_223 = arith.constant 0.000000e+00 : f32
    %596 = vector.broadcast %cst_223 : f32 to vector<2x32xf32>
    %597 = arith.subf %596, %595 : vector<2x32xf32>
    %598 = math.exp %597 : vector<2x32xf32>
    %cst_224 = arith.constant 1.000000e+00 : f32
    %599 = vector.broadcast %cst_224 : f32 to vector<2x32xf32>
    %600 = arith.addf %599, %598 : vector<2x32xf32>
    %cst_225 = arith.constant 1.000000e+00 : f32
    %601 = vector.broadcast %cst_225 : f32 to vector<2x32xf32>
    %602 = arith.divf %601, %600 : vector<2x32xf32>
    %603 = vector.extract_strided_slice %586 {offsets = [0, 64], sizes = [2, 32], strides = [1, 1]} : vector<2x128xf32> to vector<2x32xf32>
    %604 = math.tanh %603 : vector<2x32xf32>
    %605 = vector.extract_strided_slice %586 {offsets = [0, 96], sizes = [2, 32], strides = [1, 1]} : vector<2x128xf32> to vector<2x32xf32>
    %cst_226 = arith.constant 0.000000e+00 : f32
    %606 = vector.broadcast %cst_226 : f32 to vector<2x32xf32>
    %607 = arith.subf %606, %605 : vector<2x32xf32>
    %608 = math.exp %607 : vector<2x32xf32>
    %cst_227 = arith.constant 1.000000e+00 : f32
    %609 = vector.broadcast %cst_227 : f32 to vector<2x32xf32>
    %610 = arith.addf %609, %608 : vector<2x32xf32>
    %cst_228 = arith.constant 1.000000e+00 : f32
    %611 = vector.broadcast %cst_228 : f32 to vector<2x32xf32>
    %612 = arith.divf %611, %610 : vector<2x32xf32>
    %613 = arith.mulf %602, %577 : vector<2x32xf32>
    %614 = arith.mulf %594, %604 : vector<2x32xf32>
    %615 = arith.addf %613, %614 : vector<2x32xf32>
    %616 = math.tanh %615 : vector<2x32xf32>
    %617 = arith.mulf %612, %616 : vector<2x32xf32>
    %618 = vector.extract_strided_slice %617 {offsets = [0, 0], sizes = [1, 32], strides = [1, 1]} : vector<2x32xf32> to vector<1x32xf32>
    %c7 = arith.constant 7 : index
    %c0_229 = arith.constant 0 : index
    %619 = vector.load %arg19[%c7, %c0_229] : memref<16x32xf32, #tpu.memory_space<vmem>>, vector<1x32xf32>
    tpu.vector_store %arg19[%c7, %c0_229], %618 {strides = array<i32>} : memref<16x32xf32, #tpu.memory_space<vmem>>, vector<1x32xf32>,
    %620 = vector.extract_strided_slice %617 {offsets = [1, 0], sizes = [1, 32], strides = [1, 1]} : vector<2x32xf32> to vector<1x32xf32>
    %c15 = arith.constant 15 : index
    %c0_230 = arith.constant 0 : index
    %621 = vector.load %arg19[%c15, %c0_230] : memref<16x32xf32, #tpu.memory_space<vmem>>, vector<1x32xf32>
    tpu.vector_store %arg19[%c15, %c0_230], %620 {strides = array<i32>} : memref<16x32xf32, #tpu.memory_space<vmem>>, vector<1x32xf32>,
    %c0_231 = arith.constant 0 : index
    %c0_232 = arith.constant 0 : index
    %622 = vector.load %arg19[%c0_231, %c0_232] : memref<16x32xf32, #tpu.memory_space<vmem>>, vector<16x32xf32>
    %c0_233 = arith.constant 0 : index
    %c0_234 = arith.constant 0 : index
    %623 = vector.load %arg8[%c0_233, %c0_234] : memref<32x96xf32, #tpu.memory_space<vmem>>, vector<32x96xf32>
    %cst_235 = arith.constant dense<0.000000e+00> : vector<16x96xf32>
    %624 = tpu.matmul %622, %623, %cst_235 {dimension_numbers = #tpu.dot_dimension_numbers<[1], [0], [0], [1], [0, 0, 1, 1], [], []>} : vector<16x32xf32>, vector<32x96xf32>, vector<16x96xf32> -> vector<16x96xf32>
    %c0_236 = arith.constant 0 : index
    %c0_237 = arith.constant 0 : index
    %625 = vector.load %arg9[%c0_236, %c0_237] : memref<1x96xf32, #tpu.memory_space<vmem>>, vector<1x96xf32>
    %626 = vector.broadcast %625 : vector<1x96xf32> to vector<16x96xf32>
    %627 = arith.addf %624, %626 : vector<16x96xf32>
    %628 = vector.shape_cast %627 : vector<16x96xf32> to vector<2x8x96xf32>
    %cst_238 = arith.constant 0.000000e+00 : f32
    %629 = vector.broadcast %cst_238 : f32 to vector<2x8x8xf32>
    %630 = vector.extract_strided_slice %628 {offsets = [0, 0, 0], sizes = [2, 8, 8], strides = [1, 1, 1]} : vector<2x8x96xf32> to vector<2x8x8xf32>
    %cst_239 = arith.constant 0.353553385 : f32
    %631 = vector.broadcast %cst_239 : f32 to vector<2x8x8xf32>
    %632 = arith.mulf %630, %631 : vector<2x8x8xf32>
    %633 = vector.extract_strided_slice %628 {offsets = [0, 0, 32], sizes = [2, 8, 8], strides = [1, 1, 1]} : vector<2x8x96xf32> to vector<2x8x8xf32>
    %634 = vector.extract_strided_slice %628 {offsets = [0, 0, 64], sizes = [2, 8, 8], strides = [1, 1, 1]} : vector<2x8x96xf32> to vector<2x8x8xf32>
    "tpu.trace_start"() <{level = 10 : i32, message = "bqd,bkd->bqk"}> : () -> ()
    %cst_240 = arith.constant dense<0.000000e+00> : vector<2x8x8xf32>
    %635 = tpu.matmul %632, %633, %cst_240 {dimension_numbers = #tpu.dot_dimension_numbers<[2], [2], [1], [1], [0, 0, 0, 1, 1, 1], [0], [0]>} : vector<2x8x8xf32>, vector<2x8x8xf32>, vector<2x8x8xf32> -> vector<2x8x8xf32>
    "tpu.trace_stop"() : () -> ()
    %cst_241 = arith.constant dense<0xFF800000> : vector<2x8xf32>
    %636 = vector.multi_reduction <maximumf>, %635, %cst_241 [2] : vector<2x8x8xf32> to vector<2x8xf32>
    %637 = vector.shape_cast %636 : vector<2x8xf32> to vector<2x8x1xf32>
    %638 = vector.broadcast %637 : vector<2x8x1xf32> to vector<2x8x8xf32>
    %639 = arith.subf %635, %638 : vector<2x8x8xf32>
    %640 = math.exp %639 : vector<2x8x8xf32>
    %cst_242 = arith.constant dense<0.000000e+00> : vector<2x8xf32>
    %641 = vector.multi_reduction <add>, %640, %cst_242 [2] : vector<2x8x8xf32> to vector<2x8xf32>
    %642 = vector.shape_cast %641 : vector<2x8xf32> to vector<2x8x1xf32>
    %643 = vector.broadcast %642 : vector<2x8x1xf32> to vector<2x8x8xf32>
    %644 = arith.divf %640, %643 : vector<2x8x8xf32>
    %645 = arith.addf %629, %644 : vector<2x8x8xf32>
    "tpu.trace_start"() <{level = 10 : i32, message = "bqk,bkd->bqd"}> : () -> ()
    %cst_243 = arith.constant dense<0.000000e+00> : vector<2x8x8xf32>
    %646 = tpu.matmul %644, %634, %cst_243 {dimension_numbers = #tpu.dot_dimension_numbers<[2], [1], [1], [2], [0, 0, 0, 1, 1, 2], [0], [0]>} : vector<2x8x8xf32>, vector<2x8x8xf32>, vector<2x8x8xf32> -> vector<2x8x8xf32>
    "tpu.trace_stop"() : () -> ()
    %c0_244 = arith.constant 0 : index
    %c0_245 = arith.constant 0 : index
    %c0_246 = arith.constant 0 : index
    %647 = vector.load %arg20[%c0_244, %c0_245, %c0_246] : memref<2x8x32xf32, #tpu.memory_space<vmem>>, vector<2x8x8xf32>
    tpu.vector_store %arg20[%c0_244, %c0_245, %c0_246], %646 {strides = array<i32>} : memref<2x8x32xf32, #tpu.memory_space<vmem>>, vector<2x8x8xf32>,
    %648 = vector.extract_strided_slice %628 {offsets = [0, 0, 8], sizes = [2, 8, 8], strides = [1, 1, 1]} : vector<2x8x96xf32> to vector<2x8x8xf32>
    %cst_247 = arith.constant 0.353553385 : f32
    %649 = vector.broadcast %cst_247 : f32 to vector<2x8x8xf32>
    %650 = arith.mulf %648, %649 : vector<2x8x8xf32>
    %651 = vector.extract_strided_slice %628 {offsets = [0, 0, 40], sizes = [2, 8, 8], strides = [1, 1, 1]} : vector<2x8x96xf32> to vector<2x8x8xf32>
    %652 = vector.extract_strided_slice %628 {offsets = [0, 0, 72], sizes = [2, 8, 8], strides = [1, 1, 1]} : vector<2x8x96xf32> to vector<2x8x8xf32>
    "tpu.trace_start"() <{level = 10 : i32, message = "bqd,bkd->bqk"}> : () -> ()
    %cst_248 = arith.constant dense<0.000000e+00> : vector<2x8x8xf32>
    %653 = tpu.matmul %650, %651, %cst_248 {dimension_numbers = #tpu.dot_dimension_numbers<[2], [2], [1], [1], [0, 0, 0, 1, 1, 1], [0], [0]>} : vector<2x8x8xf32>, vector<2x8x8xf32>, vector<2x8x8xf32> -> vector<2x8x8xf32>
    "tpu.trace_stop"() : () -> ()
    %cst_249 = arith.constant dense<0xFF800000> : vector<2x8xf32>
    %654 = vector.multi_reduction <maximumf>, %653, %cst_249 [2] : vector<2x8x8xf32> to vector<2x8xf32>
    %655 = vector.shape_cast %654 : vector<2x8xf32> to vector<2x8x1xf32>
    %656 = vector.broadcast %655 : vector<2x8x1xf32> to vector<2x8x8xf32>
    %657 = arith.subf %653, %656 : vector<2x8x8xf32>
    %658 = math.exp %657 : vector<2x8x8xf32>
    %cst_250 = arith.constant dense<0.000000e+00> : vector<2x8xf32>
    %659 = vector.multi_reduction <add>, %658, %cst_250 [2] : vector<2x8x8xf32> to vector<2x8xf32>
    %660 = vector.shape_cast %659 : vector<2x8xf32> to vector<2x8x1xf32>
    %661 = vector.broadcast %660 : vector<2x8x1xf32> to vector<2x8x8xf32>
    %662 = arith.divf %658, %661 : vector<2x8x8xf32>
    %663 = arith.addf %645, %662 : vector<2x8x8xf32>
    "tpu.trace_start"() <{level = 10 : i32, message = "bqk,bkd->bqd"}> : () -> ()
    %cst_251 = arith.constant dense<0.000000e+00> : vector<2x8x8xf32>
    %664 = tpu.matmul %662, %652, %cst_251 {dimension_numbers = #tpu.dot_dimension_numbers<[2], [1], [1], [2], [0, 0, 0, 1, 1, 2], [0], [0]>} : vector<2x8x8xf32>, vector<2x8x8xf32>, vector<2x8x8xf32> -> vector<2x8x8xf32>
    "tpu.trace_stop"() : () -> ()
    %c0_252 = arith.constant 0 : index
    %c0_253 = arith.constant 0 : index
    %c8_254 = arith.constant 8 : index
    %665 = vector.load %arg20[%c0_252, %c0_253, %c8_254] : memref<2x8x32xf32, #tpu.memory_space<vmem>>, vector<2x8x8xf32>
    tpu.vector_store %arg20[%c0_252, %c0_253, %c8_254], %664 {strides = array<i32>} : memref<2x8x32xf32, #tpu.memory_space<vmem>>, vector<2x8x8xf32>,
    %666 = vector.extract_strided_slice %628 {offsets = [0, 0, 16], sizes = [2, 8, 8], strides = [1, 1, 1]} : vector<2x8x96xf32> to vector<2x8x8xf32>
    %cst_255 = arith.constant 0.353553385 : f32
    %667 = vector.broadcast %cst_255 : f32 to vector<2x8x8xf32>
    %668 = arith.mulf %666, %667 : vector<2x8x8xf32>
    %669 = vector.extract_strided_slice %628 {offsets = [0, 0, 48], sizes = [2, 8, 8], strides = [1, 1, 1]} : vector<2x8x96xf32> to vector<2x8x8xf32>
    %670 = vector.extract_strided_slice %628 {offsets = [0, 0, 80], sizes = [2, 8, 8], strides = [1, 1, 1]} : vector<2x8x96xf32> to vector<2x8x8xf32>
    "tpu.trace_start"() <{level = 10 : i32, message = "bqd,bkd->bqk"}> : () -> ()
    %cst_256 = arith.constant dense<0.000000e+00> : vector<2x8x8xf32>
    %671 = tpu.matmul %668, %669, %cst_256 {dimension_numbers = #tpu.dot_dimension_numbers<[2], [2], [1], [1], [0, 0, 0, 1, 1, 1], [0], [0]>} : vector<2x8x8xf32>, vector<2x8x8xf32>, vector<2x8x8xf32> -> vector<2x8x8xf32>
    "tpu.trace_stop"() : () -> ()
    %cst_257 = arith.constant dense<0xFF800000> : vector<2x8xf32>
    %672 = vector.multi_reduction <maximumf>, %671, %cst_257 [2] : vector<2x8x8xf32> to vector<2x8xf32>
    %673 = vector.shape_cast %672 : vector<2x8xf32> to vector<2x8x1xf32>
    %674 = vector.broadcast %673 : vector<2x8x1xf32> to vector<2x8x8xf32>
    %675 = arith.subf %671, %674 : vector<2x8x8xf32>
    %676 = math.exp %675 : vector<2x8x8xf32>
    %cst_258 = arith.constant dense<0.000000e+00> : vector<2x8xf32>
    %677 = vector.multi_reduction <add>, %676, %cst_258 [2] : vector<2x8x8xf32> to vector<2x8xf32>
    %678 = vector.shape_cast %677 : vector<2x8xf32> to vector<2x8x1xf32>
    %679 = vector.broadcast %678 : vector<2x8x1xf32> to vector<2x8x8xf32>
    %680 = arith.divf %676, %679 : vector<2x8x8xf32>
    %681 = arith.addf %663, %680 : vector<2x8x8xf32>
    "tpu.trace_start"() <{level = 10 : i32, message = "bqk,bkd->bqd"}> : () -> ()
    %cst_259 = arith.constant dense<0.000000e+00> : vector<2x8x8xf32>
    %682 = tpu.matmul %680, %670, %cst_259 {dimension_numbers = #tpu.dot_dimension_numbers<[2], [1], [1], [2], [0, 0, 0, 1, 1, 2], [0], [0]>} : vector<2x8x8xf32>, vector<2x8x8xf32>, vector<2x8x8xf32> -> vector<2x8x8xf32>
    "tpu.trace_stop"() : () -> ()
    %c0_260 = arith.constant 0 : index
    %c0_261 = arith.constant 0 : index
    %c16 = arith.constant 16 : index
    %683 = vector.load %arg20[%c0_260, %c0_261, %c16] : memref<2x8x32xf32, #tpu.memory_space<vmem>>, vector<2x8x8xf32>
    tpu.vector_store %arg20[%c0_260, %c0_261, %c16], %682 {strides = array<i32>} : memref<2x8x32xf32, #tpu.memory_space<vmem>>, vector<2x8x8xf32>,
    %684 = vector.extract_strided_slice %628 {offsets = [0, 0, 24], sizes = [2, 8, 8], strides = [1, 1, 1]} : vector<2x8x96xf32> to vector<2x8x8xf32>
    %cst_262 = arith.constant 0.353553385 : f32
    %685 = vector.broadcast %cst_262 : f32 to vector<2x8x8xf32>
    %686 = arith.mulf %684, %685 : vector<2x8x8xf32>
    %687 = vector.extract_strided_slice %628 {offsets = [0, 0, 56], sizes = [2, 8, 8], strides = [1, 1, 1]} : vector<2x8x96xf32> to vector<2x8x8xf32>
    %688 = vector.extract_strided_slice %628 {offsets = [0, 0, 88], sizes = [2, 8, 8], strides = [1, 1, 1]} : vector<2x8x96xf32> to vector<2x8x8xf32>
    "tpu.trace_start"() <{level = 10 : i32, message = "bqd,bkd->bqk"}> : () -> ()
    %cst_263 = arith.constant dense<0.000000e+00> : vector<2x8x8xf32>
    %689 = tpu.matmul %686, %687, %cst_263 {dimension_numbers = #tpu.dot_dimension_numbers<[2], [2], [1], [1], [0, 0, 0, 1, 1, 1], [0], [0]>} : vector<2x8x8xf32>, vector<2x8x8xf32>, vector<2x8x8xf32> -> vector<2x8x8xf32>
    "tpu.trace_stop"() : () -> ()
    %cst_264 = arith.constant dense<0xFF800000> : vector<2x8xf32>
    %690 = vector.multi_reduction <maximumf>, %689, %cst_264 [2] : vector<2x8x8xf32> to vector<2x8xf32>
    %691 = vector.shape_cast %690 : vector<2x8xf32> to vector<2x8x1xf32>
    %692 = vector.broadcast %691 : vector<2x8x1xf32> to vector<2x8x8xf32>
    %693 = arith.subf %689, %692 : vector<2x8x8xf32>
    %694 = math.exp %693 : vector<2x8x8xf32>
    %cst_265 = arith.constant dense<0.000000e+00> : vector<2x8xf32>
    %695 = vector.multi_reduction <add>, %694, %cst_265 [2] : vector<2x8x8xf32> to vector<2x8xf32>
    %696 = vector.shape_cast %695 : vector<2x8xf32> to vector<2x8x1xf32>
    %697 = vector.broadcast %696 : vector<2x8x1xf32> to vector<2x8x8xf32>
    %698 = arith.divf %694, %697 : vector<2x8x8xf32>
    %699 = arith.addf %681, %698 : vector<2x8x8xf32>
    "tpu.trace_start"() <{level = 10 : i32, message = "bqk,bkd->bqd"}> : () -> ()
    %cst_266 = arith.constant dense<0.000000e+00> : vector<2x8x8xf32>
    %700 = tpu.matmul %698, %688, %cst_266 {dimension_numbers = #tpu.dot_dimension_numbers<[2], [1], [1], [2], [0, 0, 0, 1, 1, 2], [0], [0]>} : vector<2x8x8xf32>, vector<2x8x8xf32>, vector<2x8x8xf32> -> vector<2x8x8xf32>
    "tpu.trace_stop"() : () -> ()
    %c0_267 = arith.constant 0 : index
    %c0_268 = arith.constant 0 : index
    %c24 = arith.constant 24 : index
    %701 = vector.load %arg20[%c0_267, %c0_268, %c24] : memref<2x8x32xf32, #tpu.memory_space<vmem>>, vector<2x8x8xf32>
    tpu.vector_store %arg20[%c0_267, %c0_268, %c24], %700 {strides = array<i32>} : memref<2x8x32xf32, #tpu.memory_space<vmem>>, vector<2x8x8xf32>,
    %cst_269 = arith.constant 2.500000e-01 : f32
    %702 = vector.broadcast %cst_269 : f32 to vector<2x8x8xf32>
    %703 = arith.mulf %699, %702 : vector<2x8x8xf32>
    %c0_270 = arith.constant 0 : index
    %c0_271 = arith.constant 0 : index
    %c0_272 = arith.constant 0 : index
    %704 = vector.load %arg17[%c0_270, %c0_271, %c0_272] : memref<2x8x8xf32, #tpu.memory_space<vmem>>, vector<2x8x8xf32>
    tpu.vector_store %arg17[%c0_270, %c0_271, %c0_272], %703 {strides = array<i32>} : memref<2x8x8xf32, #tpu.memory_space<vmem>>, vector<2x8x8xf32>,
    %c0_273 = arith.constant 0 : index
    %c0_274 = arith.constant 0 : index
    %c0_275 = arith.constant 0 : index
    %705 = vector.load %arg20[%c0_273, %c0_274, %c0_275] : memref<2x8x32xf32, #tpu.memory_space<vmem>>, vector<2x8x32xf32>
    %706 = vector.shape_cast %705 : vector<2x8x32xf32> to vector<16x32xf32>
    %c0_276 = arith.constant 0 : index
    %c0_277 = arith.constant 0 : index
    %707 = vector.load %arg10[%c0_276, %c0_277] : memref<32x32xf32, #tpu.memory_space<vmem>>, vector<32x32xf32>
    %cst_278 = arith.constant dense<0.000000e+00> : vector<16x32xf32>
    %708 = tpu.matmul %706, %707, %cst_278 {dimension_numbers = #tpu.dot_dimension_numbers<[1], [0], [0], [1], [0, 0, 1, 1], [], []>} : vector<16x32xf32>, vector<32x32xf32>, vector<16x32xf32> -> vector<16x32xf32>
    %c0_279 = arith.constant 0 : index
    %c0_280 = arith.constant 0 : index
    %709 = vector.load %arg11[%c0_279, %c0_280] : memref<1x32xf32, #tpu.memory_space<vmem>>, vector<1x32xf32>
    %710 = vector.broadcast %709 : vector<1x32xf32> to vector<16x32xf32>
    %711 = arith.addf %708, %710 : vector<16x32xf32>
    %c0_281 = arith.constant 0 : index
    %c0_282 = arith.constant 0 : index
    %712 = vector.load %arg12[%c0_281, %c0_282] : memref<32x16xf32, #tpu.memory_space<vmem>>, vector<32x16xf32>
    %cst_283 = arith.constant dense<0.000000e+00> : vector<16x16xf32>
    %713 = tpu.matmul %711, %712, %cst_283 {dimension_numbers = #tpu.dot_dimension_numbers<[1], [0], [0], [1], [0, 0, 1, 1], [], []>} : vector<16x32xf32>, vector<32x16xf32>, vector<16x16xf32> -> vector<16x16xf32>
    %c0_284 = arith.constant 0 : index
    %c0_285 = arith.constant 0 : index
    %714 = vector.load %arg13[%c0_284, %c0_285] : memref<1x16xf32, #tpu.memory_space<vmem>>, vector<1x16xf32>
    %715 = vector.broadcast %714 : vector<1x16xf32> to vector<16x16xf32>
    %716 = arith.addf %713, %715 : vector<16x16xf32>
    %cst_286 = arith.constant 0.000000e+00 : f32
    %717 = vector.broadcast %cst_286 : f32 to vector<16x16xf32>
    %718 = arith.maximumf %716, %717 : vector<16x16xf32>
    %c0_287 = arith.constant 0 : index
    %c0_288 = arith.constant 0 : index
    %719 = vector.load %arg14[%c0_287, %c0_288] : memref<16x1xf32, #tpu.memory_space<vmem>>, vector<16x1xf32>
    %cst_289 = arith.constant dense<0.000000e+00> : vector<16x1xf32>
    %720 = tpu.matmul %718, %719, %cst_289 {dimension_numbers = #tpu.dot_dimension_numbers<[1], [0], [0], [1], [0, 0, 1, 1], [], []>} : vector<16x16xf32>, vector<16x1xf32>, vector<16x1xf32> -> vector<16x1xf32>
    %c0_290 = arith.constant 0 : index
    %c0_291 = arith.constant 0 : index
    %721 = vector.load %arg15[%c0_290, %c0_291] : memref<1x1xf32, #tpu.memory_space<vmem>>, vector<1x1xf32>
    %722 = vector.broadcast %721 : vector<1x1xf32> to vector<16x1xf32>
    %723 = arith.addf %720, %722 : vector<16x1xf32>
    %724 = vector.extract_strided_slice %723 {offsets = [7, 0], sizes = [1, 1], strides = [1, 1]} : vector<16x1xf32> to vector<1x1xf32>
    %c0_292 = arith.constant 0 : index
    %c0_293 = arith.constant 0 : index
    %725 = vector.load %arg16[%c0_292, %c0_293] : memref<2x1xf32, #tpu.memory_space<vmem>>, vector<1x1xf32>
    tpu.vector_store %arg16[%c0_292, %c0_293], %724 {strides = array<i32>} : memref<2x1xf32, #tpu.memory_space<vmem>>, vector<1x1xf32>,
    %726 = vector.extract_strided_slice %723 {offsets = [15, 0], sizes = [1, 1], strides = [1, 1]} : vector<16x1xf32> to vector<1x1xf32>
    %c1_294 = arith.constant 1 : index
    %c0_295 = arith.constant 0 : index
    %727 = vector.load %arg16[%c1_294, %c0_295] : memref<2x1xf32, #tpu.memory_space<vmem>>, vector<1x1xf32>
    tpu.vector_store %arg16[%c1_294, %c0_295], %726 {strides = array<i32>} : memref<2x1xf32, #tpu.memory_space<vmem>>, vector<1x1xf32>,
    return
  }
}

</mosaic_0001>

<llo_original>
// kernel: battery_net_forward.1
$region0: #{battery_net_forward.1}
  #allocation0 [shape = 'u32[]', space=smem, size = 0x4, offset = 0x4, fixed_abs, tag = 'smem constant byte address 0x4 - core index']
  #allocation1 [shape = 'u32[144,128]{1,0:T(1,128)}', space=vmem, size = 0x12000, scoped, tag = 'internal scratch']
  #allocation2 [shape = 'f32[16,32]{1,0:T(8,128)}', space=vmem, size = 0x2000, scoped, tag = 'scratch operand']
  #allocation3 [shape = 'f32[16,32]{1,0:T(8,128)}', space=vmem, size = 0x2000, scoped, tag = 'scratch operand']
  #allocation4 [shape = 'f32[2,8,32]{2,1,0:T(8,128)}', space=vmem, size = 0x2000, scoped, tag = 'scratch operand']
  #allocation5 [shape = 'f32[1,1]{1,0:T(1,128)S(1)}', space=vmem, size = 0x200, scoped, tag = 'scoped memory for battery_net_forward.1']
  %s0 = inlined_call_operand.vmem [shape: f32[16,8], index: 0, kind: input, shape index: {}]
  %s1 = inlined_call_operand.hbm [shape: f32[8,32], index: 1, kind: input, shape index: {}]
  %s2 = inlined_call_operand.vmem [shape: f32[1,32], index: 2, kind: input, shape index: {}]
  %s3 = inlined_call_operand.hbm [shape: f32[32,32], index: 3, kind: input, shape index: {}]
  %s4 = inlined_call_operand.hbm [shape: f32[1,32], index: 4, kind: input, shape index: {}]
  %s5 = inlined_call_operand.vmem [shape: f32[2,32,128], index: 5, kind: input, shape index: {}]
  %s6 = inlined_call_operand.vmem [shape: f32[2,32,128], index: 6, kind: input, shape index: {}]
  %s7 = inlined_call_operand.hbm [shape: f32[2,1,128], index: 7, kind: input, shape index: {}]
  %s8 = inlined_call_operand.vmem [shape: f32[32,96], index: 8, kind: input, shape index: {}]
  %s9 = inlined_call_operand.hbm [shape: f32[1,96], index: 9, kind: input, shape index: {}]
  %s10 = inlined_call_operand.hbm [shape: f32[32,32], index: 10, kind: input, shape index: {}]
  %s11 = inlined_call_operand.hbm [shape: f32[1,32], index: 11, kind: input, shape index: {}]
  %s12 = inlined_call_operand.vmem [shape: f32[32,16], index: 12, kind: input, shape index: {}]
  %s13 = inlined_call_operand.hbm [shape: f32[1,16], index: 13, kind: input, shape index: {}]
  %s14 = inlined_call_operand.vmem [shape: f32[16,1], index: 14, kind: input, shape index: {}]
  %s15 = inlined_call_operand.<no memory space> [shape: f32[1,1], index: 15, kind: input, shape index: {}]
  %s16 = inlined_call_operand.vmem [shape: f32[2,1], index: 16, kind: output, shape index: {0}]
  %s17 = inlined_call_operand.hbm [shape: f32[2,8,8], index: 17, kind: output, shape index: {1}]
  %18 = xla_tuple %s16, %s17
  %s19 = sld [smem:[#allocation0]]
  $region114: #{battery_net_forward.1} parent=0
    _
  %s21 = ssub.s32 1, %s19
  %s22 = scalar_select 0, %s21, %s19
  %v23 = vstv %s15
  %24 = vst [vmem:[#allocation5] sm:$0x1] %v23
  $region1: #{battery_net_forward.1} parent=0
    #allocation6 [shape = 'u8[4096]{0}', space=vmem, size = 0x1000, scoped, tag = 'input window, operand 1, single buffered']
    #allocation7 [shape = 's32[1]{0}', space=sflag, size = 0x4, scoped, tag = 'scoped memory for battery_net_forward.1']
    #allocation8 [shape = 's32[1]{0}', space=sflag, size = 0x4, scoped, tag = 'scoped memory for battery_net_forward.1']
    #allocation9 [shape = 'u8[16384]{0}', space=vmem, size = 0x4000, scoped, tag = 'input window, operand 3, single buffered']
    #allocation10 [shape = 's32[1]{0}', space=sflag, size = 0x4, scoped, tag = 'scoped memory for battery_net_forward.1']
    #allocation11 [shape = 'u8[512]{0}', space=vmem, size = 0x400, scoped, tag = 'input window, operand 4, single buffered']
    #allocation12 [shape = 'u8[1024]{0}', space=vmem, size = 0x400, scoped, tag = 'input window, operand 7, single buffered']
    #allocation13 [shape = 's32[1]{0}', space=sflag, size = 0x4, scoped, tag = 'scoped memory for battery_net_forward.1']
    #allocation14 [shape = 'u8[512]{0}', space=vmem, size = 0x400, scoped, tag = 'input window, operand 9, single buffered']
    #allocation15 [shape = 'u8[16384]{0}', space=vmem, size = 0x4000, scoped, tag = 'input window, operand 10, single buffered']
    #allocation16 [shape = 's32[1]{0}', space=sflag, size = 0x4, scoped, tag = 'scoped memory for battery_net_forward.1']
    #allocation17 [shape = 'u8[512]{0}', space=vmem, size = 0x400, scoped, tag = 'input window, operand 11, single buffered']
    #allocation18 [shape = 'u8[512]{0}', space=vmem, size = 0x400, scoped, tag = 'input window, operand 13, single buffered']
    #allocation19 [shape = 's32[1]{0}', space=sflag, size = 0x4, scoped, tag = 'scoped memory for battery_net_forward.1']
    #allocation20 [shape = 'u8[8192]{0}', space=vmem, size = 0x2000, scoped, tag = 'output window, operand 1, single buffered']
    %25 = vsyncpa [#allocation7], 0
    %26 = vsyncpa [#allocation10], 0
    %27 = vsyncpa [#allocation13], 0
    %28 = vsyncpa [#allocation16], 0
    %29 = vsyncpa [#allocation19], 0
    %30 = vsyncpa [#allocation8], 0
    // Predicated region
    $region2: #{battery_net_forward.1} parent=1 // pred_check
      _
    $region3: #{battery_net_forward.1} parent=1 // pred_check_branch
      %32 = sbr.rel (0) target = $region5
    $region4: #{battery_net_forward.1} parent=1 // pred_region
      _
    $region5: #{battery_net_forward.1} parent=1 // pred_fallthru
      _
    // Predicated region
    $region6: #{battery_net_forward.1} parent=1 // pred_check
      _
    $region7: #{battery_net_forward.1} parent=1 // pred_check_branch
      %34 = sbr.rel (0) target = $region9
    $region8: #{battery_net_forward.1} parent=1 // pred_region
      %s36 = ssub.s32 128, 128
      %37 = vsyncadd [#allocation7], %s36
      %s39 = sshll.u32 [#allocation6], 4
      %s40 = int_to_ptr.vmem [resolvable:$true] %s39
      %42 = dma.hbm_to_vmem [thread:$0]  %s1, 128, %s40, [#allocation7]
    $region9: #{battery_net_forward.1} parent=1 // pred_fallthru
      _
    // Predicated region
    $region10: #{battery_net_forward.1} parent=1 // pred_check
      _
    $region11: #{battery_net_forward.1} parent=1 // pred_check_branch
      %44 = sbr.rel (0) target = $region13
    $region12: #{battery_net_forward.1} parent=1 // pred_region
      _
    $region13: #{battery_net_forward.1} parent=1 // pred_fallthru
      _
    // Predicated region
    $region14: #{battery_net_forward.1} parent=1 // pred_check
      _
    $region15: #{battery_net_forward.1} parent=1 // pred_check_branch
      %46 = sbr.rel (0) target = $region17
    $region16: #{battery_net_forward.1} parent=1 // pred_region
      %s48 = ssub.s32 512, 512
      %49 = vsyncadd [#allocation10], %s48
      %s50 = sshll.u32 [#allocation9], 4
      %s51 = int_to_ptr.vmem [resolvable:$true] %s50
      %56 = dma.hbm_to_vmem [thread:$0]  %s3, 512, %s51, [#allocation10], 128, 128, 8
    $region17: #{battery_net_forward.1} parent=1 // pred_fallthru
      _
    // Predicated region
    $region18: #{battery_net_forward.1} parent=1 // pred_check
      _
    $region19: #{battery_net_forward.1} parent=1 // pred_check_branch
      %58 = sbr.rel (0) target = $region21
    $region20: #{battery_net_forward.1} parent=1 // pred_region
      %s60 = ssub.s32 16, 16
      %61 = vsyncadd [#allocation10], %s60
      %s63 = sshll.u32 [#allocation11], 4
      %s64 = int_to_ptr.vmem [resolvable:$true] %s63
      %66 = dma.hbm_to_vmem [thread:$0]  %s4, 16, %s64, [#allocation10]
    $region21: #{battery_net_forward.1} parent=1 // pred_fallthru
      _
    // Predicated region
    $region22: #{battery_net_forward.1} parent=1 // pred_check
      _
    $region23: #{battery_net_forward.1} parent=1 // pred_check_branch
      %68 = sbr.rel (0) target = $region25
    $region24: #{battery_net_forward.1} parent=1 // pred_region
      _
    $region25: #{battery_net_forward.1} parent=1 // pred_fallthru
      _
    // Predicated region
    $region26: #{battery_net_forward.1} parent=1 // pred_check
      _
    $region27: #{battery_net_forward.1} parent=1 // pred_check_branch
      %70 = sbr.rel (0) target = $region29
    $region28: #{battery_net_forward.1} parent=1 // pred_region
      _
    $region29: #{battery_net_forward.1} parent=1 // pred_fallthru
      _
    // Predicated region
    $region30: #{battery_net_forward.1} parent=1 // pred_check
      _
    $region31: #{battery_net_forward.1} parent=1 // pred_check_branch
      %72 = sbr.rel (0) target = $region33
    $region32: #{battery_net_forward.1} parent=1 // pred_region
      %s74 = ssub.s32 32, 32
      %75 = vsyncadd [#allocation13], %s74
      %s76 = sshll.u32 [#allocation12], 4
      %s77 = int_to_ptr.vmem [resolvable:$true] %s76
      %82 = dma.hbm_to_vmem [thread:$0]  %s7, 32, %s77, [#allocation13], 16, 16, 1
    $region33: #{battery_net_forward.1} parent=1 // pred_fallthru
      _
    // Predicated region
    $region34: #{battery_net_forward.1} parent=1 // pred_check
      _
    $region35: #{battery_net_forward.1} parent=1 // pred_check_branch
      %84 = sbr.rel (0) target = $region37
    $region36: #{battery_net_forward.1} parent=1 // pred_region
      _
    $region37: #{battery_net_forward.1} parent=1 // pred_fallthru
      _
    // Predicated region
    $region38: #{battery_net_forward.1} parent=1 // pred_check
      _
    $region39: #{battery_net_forward.1} parent=1 // pred_check_branch
      %86 = sbr.rel (0) target = $region41
    $region40: #{battery_net_forward.1} parent=1 // pred_region
      %s88 = ssub.s32 16, 16
      %89 = vsyncadd [#allocation13], %s88
      %s91 = sshll.u32 [#allocation14], 4
      %s92 = int_to_ptr.vmem [resolvable:$true] %s91
      %94 = dma.hbm_to_vmem [thread:$0]  %s9, 16, %s92, [#allocation13]
    $region41: #{battery_net_forward.1} parent=1 // pred_fallthru
      _
    // Predicated region
    $region42: #{battery_net_forward.1} parent=1 // pred_check
      _
    $region43: #{battery_net_forward.1} parent=1 // pred_check_branch
      %96 = sbr.rel (0) target = $region45
    $region44: #{battery_net_forward.1} parent=1 // pred_region
      %s98 = ssub.s32 512, 512
      %99 = vsyncadd [#allocation16], %s98
      %s100 = sshll.u32 [#allocation15], 4
      %s101 = int_to_ptr.vmem [resolvable:$true] %s100
      %106 = dma.hbm_to_vmem [thread:$0]  %s10, 512, %s101, [#allocation16], 128, 128, 8
    $region45: #{battery_net_forward.1} parent=1 // pred_fallthru
      _
    // Predicated region
    $region46: #{battery_net_forward.1} parent=1 // pred_check
      _
    $region47: #{battery_net_forward.1} parent=1 // pred_check_branch
      %108 = sbr.rel (0) target = $region49
    $region48: #{battery_net_forward.1} parent=1 // pred_region
      %s110 = ssub.s32 16, 16
      %111 = vsyncadd [#allocation16], %s110
      %s113 = sshll.u32 [#allocation17], 4
      %s114 = int_to_ptr.vmem [resolvable:$true] %s113
      %116 = dma.hbm_to_vmem [thread:$0]  %s11, 16, %s114, [#allocation16]
    $region49: #{battery_net_forward.1} parent=1 // pred_fallthru
      _
    // Predicated region
    $region50: #{battery_net_forward.1} parent=1 // pred_check
      _
    $region51: #{battery_net_forward.1} parent=1 // pred_check_branch
      %118 = sbr.rel (0) target = $region53
    $region52: #{battery_net_forward.1} parent=1 // pred_region
      _
    $region53: #{battery_net_forward.1} parent=1 // pred_fallthru
      _
    // Predicated region
    $region54: #{battery_net_forward.1} parent=1 // pred_check
      _
    $region55: #{battery_net_forward.1} parent=1 // pred_check_branch
      %120 = sbr.rel (0) target = $region57
    $region56: #{battery_net_forward.1} parent=1 // pred_region
      %s122 = ssub.s32 16, 16
      %123 = vsyncadd [#allocation19], %s122
      %s125 = sshll.u32 [#allocation18], 4
      %s126 = int_to_ptr.vmem [resolvable:$true] %s125
      %128 = dma.hbm_to_vmem [thread:$0]  %s13, 16, %s126, [#allocation19]
    $region57: #{battery_net_forward.1} parent=1 // pred_fallthru
      _
    // Predicated region
    $region58: #{battery_net_forward.1} parent=1 // pred_check
      _
    $region59: #{battery_net_forward.1} parent=1 // pred_check_branch
      %130 = sbr.rel (0) target = $region61
    $region60: #{battery_net_forward.1} parent=1 // pred_region
      _
    $region61: #{battery_net_forward.1} parent=1 // pred_fallthru
      _
    // Predicated region
    $region62: #{battery_net_forward.1} parent=1 // pred_check
      _
    $region63: #{battery_net_forward.1} parent=1 // pred_check_branch
      %132 = sbr.rel (0) target = $region65
    $region64: #{battery_net_forward.1} parent=1 // pred_region
      _
    $region65: #{battery_net_forward.1} parent=1 // pred_fallthru
      _
    // Predicated region
    $region66: #{battery_net_forward.1} parent=1 // pred_check
      _
    $region67: #{battery_net_forward.1} parent=1 // pred_check_branch
      %134 = sbr.rel (0) target = $region69
    $region68: #{battery_net_forward.1} parent=1 // pred_region
      %135 = dma.done [#allocation7], 128
    $region69: #{battery_net_forward.1} parent=1 // pred_fallthru
      _
    // Predicated region
    $region70: #{battery_net_forward.1} parent=1 // pred_check
      _
    $region71: #{battery_net_forward.1} parent=1 // pred_check_branch
      %137 = sbr.rel (0) target = $region73
    $region72: #{battery_net_forward.1} parent=1 // pred_region
      %138 = dma.done [#allocation10], 512
    $region73: #{battery_net_forward.1} parent=1 // pred_fallthru
      _
    // Predicated region
    $region74: #{battery_net_forward.1} parent=1 // pred_check
      _
    $region75: #{battery_net_forward.1} parent=1 // pred_check_branch
      %140 = sbr.rel (0) target = $region77
    $region76: #{battery_net_forward.1} parent=1 // pred_region
      %141 = dma.done [#allocation10], 16
    $region77: #{battery_net_forward.1} parent=1 // pred_fallthru
      _
    // Predicated region
    $region78: #{battery_net_forward.1} parent=1 // pred_check
      _
    $region79: #{battery_net_forward.1} parent=1 // pred_check_branch
      %143 = sbr.rel (0) target = $region81
    $region80: #{battery_net_forward.1} parent=1 // pred_region
      %144 = dma.done [#allocation13], 32
    $region81: #{battery_net_forward.1} parent=1 // pred_fallthru
      _
    // Predicated region
    $region82: #{battery_net_forward.1} parent=1 // pred_check
      _
    $region83: #{battery_net_forward.1} parent=1 // pred_check_branch
      %146 = sbr.rel (0) target = $region85
    $region84: #{battery_net_forward.1} parent=1 // pred_region
      %147 = dma.done [#allocation13], 16
    $region85: #{battery_net_forward.1} parent=1 // pred_fallthru
      _
    // Predicated region
    $region86: #{battery_net_forward.1} parent=1 // pred_check
      _
    $region87: #{battery_net_forward.1} parent=1 // pred_check_branch
      %149 = sbr.rel (0) target = $region89
    $region88: #{battery_net_forward.1} parent=1 // pred_region
      %150 = dma.done [#allocation16], 512
    $region89: #{battery_net_forward.1} parent=1 // pred_fallthru
      _
    // Predicated region
    $region90: #{battery_net_forward.1} parent=1 // pred_check
      _
    $region91: #{battery_net_forward.1} parent=1 // pred_check_branch
      %152 = sbr.rel (0) target = $region93
    $region92: #{battery_net_forward.1} parent=1 // pred_region
      %153 = dma.done [#allocation16], 16
    $region93: #{battery_net_forward.1} parent=1 // pred_fallthru
      _
    // Predicated region
    $region94: #{battery_net_forward.1} parent=1 // pred_check
      _
    $region95: #{battery_net_forward.1} parent=1 // pred_check_branch
      %155 = sbr.rel (0) target = $region97
    $region96: #{battery_net_forward.1} parent=1 // pred_region
      %156 = dma.done [#allocation19], 16
    $region97: #{battery_net_forward.1} parent=1 // pred_fallthru
      _
    %v157 = vld [vmem:[%s0] sm:$0xff]
    %v158 = vld [vmem:[%s0 + $0x8] sm:$0xff]
    %v159 = vld [vmem:[#allocation6] sm:$0xff]
    %v160 = vld [vmem:[%s2] sm:$0x1]
    %v162 = vlaneseq
    %v163 = vshrl.u32 %v162, 7
    %v164 = vsub.s32 0, %v163
    %v165 = vrot.slane %v160, %v164
    %vm167 = vcmask 64512
    %v169 = vsel %vm167, %v157, 0
    %v172 = vsel %vm167, %v158, 0
    %174 = vmatprep.subr.mxu0 0.0
    %175 = vmatpush1.msra.mxu0 %v159
    %176 = vmatprep.subr.mxu0 0.0
    %177 = vmatpush1.msra.mxu0 0.0
    %178 = vmatprep.subr.mxu0 0.0
    %179 = vmatpush1.msra.mxu0 0.0
    %180 = vmatprep.subr.mxu0 0.0
    %181 = vmatpush1.msra.mxu0 0.0
    %182 = vmatprep.subr.mxu0 0.0
    %183 = vmatpush1.msra.mxu0 0.0
    %184 = vmatprep.subr.mxu0 0.0
    %185 = vmatpush1.msra.mxu0 0.0
    %186 = vmatprep.subr.mxu0 0.0
    %187 = vmatpush1.msra.mxu0 0.0
    %188 = vmatprep.subr.mxu0 0.0
    %189 = vmatpush1.msra.mxu0 0.0
    %190 = vmatprep.subr.mxu0 0.0
    %191 = vmatpush1.msra.mxu0 0.0
    %192 = vmatprep.subr.mxu0 0.0
    %193 = vmatpush1.msra.mxu0 0.0
    %194 = vmatprep.subr.mxu0 0.0
    %195 = vmatpush1.msra.mxu0 0.0
    %196 = vmatprep.subr.mxu0 0.0
    %197 = vmatpush1.msra.mxu0 0.0
    %198 = vmatprep.subr.mxu0 0.0
    %199 = vmatpush1.msra.mxu0 0.0
    %200 = vmatprep.subr.mxu0 0.0
    %201 = vmatpush1.msra.mxu0 0.0
    %202 = vmatprep.subr.mxu0 0.0
    %203 = vmatpush1.msra.mxu0 0.0
    %204 = vmatprep.subr.mxu0 0.0
    %205 = vmatpush1.msra.mxu0 0.0
    %206 = vmatprep.subr.mxu0 0.0
    %207 = vmatpush1.msra.mxu0 0.0
    %208 = vmatprep.subr.mxu0 0.0
    %209 = vmatpush1.msra.mxu0 0.0
    %210 = vmatprep.subr.mxu0 0.0
    %211 = vmatpush1.msra.mxu0 0.0
    %212 = vmatprep.subr.mxu0 0.0
    %213 = vmatpush1.msra.mxu0 0.0
    %214 = vmatprep.subr.mxu0 0.0
    %215 = vmatpush1.msra.mxu0 0.0
    %216 = vmatprep.subr.mxu0 0.0
    %217 = vmatpush1.msra.mxu0 0.0
    %218 = vmatprep.subr.mxu0 0.0
    %219 = vmatpush1.msra.mxu0 0.0
    %220 = vmatprep.subr.mxu0 0.0
    %221 = vmatpush1.msra.mxu0 0.0
    %222 = vmatprep.subr.mxu0 0.0
    %223 = vmatpush1.msra.mxu0 0.0
    %224 = vmatprep.subr.mxu0 0.0
    %225 = vmatpush1.msra.mxu0 0.0
    %226 = vmatprep.subr.mxu0 0.0
    %227 = vmatpush1.msra.mxu0 0.0
    %228 = vmatprep.subr.mxu0 0.0
    %229 = vmatpush1.msra.mxu0 0.0
    %230 = vmatprep.subr.mxu0 0.0
    %231 = vmatpush1.msra.mxu0 0.0
    %232 = vmatprep.subr.mxu0 0.0
    %233 = vmatpush1.msra.mxu0 0.0
    %234 = vmatprep.subr.mxu0 0.0
    %235 = vmatpush1.msra.mxu0 0.0
    %236 = vmatprep.subr.mxu0 0.0
    %237 = vmatpush1.msra.mxu0 0.0
    %238 = vmatprep.mubr.f32.mxu0 0.0
    %239 = vmatmul.mubr.f32.gmra.mrb[0].mxu0 %v169
    %v240 = vpop.f32.mrb[0].mxu0
    %v241 = vadd.f32 %v165, %v240
    %v242 = vpop.f32.mrb[0].mxu0
    %243 = vmatprep.mubr.f32.mxu0 0.0
    %244 = vmatmul.mubr.f32.gmra.mrb[0].mxu0 %v172
    %v245 = vpop.f32.mrb[0].mxu0
    %v246 = vadd.f32 %v165, %v245
    %v247 = vpop.f32.mrb[0].mxu0
    %248 = vdwg.mxu0
    %v249 = vmax.f32 %v241, 0.0
    %v250 = vmax.f32 %v246, 0.0
    %v251 = vld [vmem:[#allocation9] sm:$0xff]
    %v252 = vld [vmem:[#allocation9 + $0x8] sm:$0xff]
    %v253 = vld [vmem:[#allocation9 + $0x10] sm:$0xff]
    %v254 = vld [vmem:[#allocation9 + $0x18] sm:$0xff]
    %v255 = vld [vmem:[#allocation11] sm:$0x1]
    %v257 = vlaneseq
    %v258 = vshrl.u32 %v257, 7
    %v259 = vsub.s32 0, %v258
    %v260 = vrot.slane %v255, %v259
    %vm262 = vcmask 261120
    %v264 = vsel %vm262, %v249, 0
    %v267 = vsel %vm262, %v250, 0
    %269 = vmatprep.subr.mxu0 0.0
    %270 = vmatpush1.msra.mxu0 %v251
    %271 = vmatprep.subr.mxu0 0.0
    %272 = vmatpush1.msra.mxu0 %v252
    %273 = vmatprep.subr.mxu0 0.0
    %274 = vmatpush1.msra.mxu0 %v253
    %275 = vmatprep.subr.mxu0 0.0
    %276 = vmatpush1.msra.mxu0 %v254
    %277 = vmatprep.subr.mxu0 0.0
    %278 = vmatpush1.msra.mxu0 0.0
    %279 = vmatprep.subr.mxu0 0.0
    %280 = vmatpush1.msra.mxu0 0.0
    %281 = vmatprep.subr.mxu0 0.0
    %282 = vmatpush1.msra.mxu0 0.0
    %283 = vmatprep.subr.mxu0 0.0
    %284 = vmatpush1.msra.mxu0 0.0
    %285 = vmatprep.subr.mxu0 0.0
    %286 = vmatpush1.msra.mxu0 0.0
    %287 = vmatprep.subr.mxu0 0.0
    %288 = vmatpush1.msra.mxu0 0.0
    %289 = vmatprep.subr.mxu0 0.0
    %290 = vmatpush1.msra.mxu0 0.0
    %291 = vmatprep.subr.mxu0 0.0
    %292 = vmatpush1.msra.mxu0 0.0
    %293 = vmatprep.subr.mxu0 0.0
    %294 = vmatpush1.msra.mxu0 0.0
    %295 = vmatprep.subr.mxu0 0.0
    %296 = vmatpush1.msra.mxu0 0.0
    %297 = vmatprep.subr.mxu0 0.0
    %298 = vmatpush1.msra.mxu0 0.0
    %299 = vmatprep.subr.mxu0 0.0
    %300 = vmatpush1.msra.mxu0 0.0
    %301 = vmatprep.subr.mxu0 0.0
    %302 = vmatpush1.msra.mxu0 0.0
    %303 = vmatprep.subr.mxu0 0.0
    %304 = vmatpush1.msra.mxu0 0.0
    %305 = vmatprep.subr.mxu0 0.0
    %306 = vmatpush1.msra.mxu0 0.0
    %307 = vmatprep.subr.mxu0 0.0
    %308 = vmatpush1.msra.mxu0 0.0
    %309 = vmatprep.subr.mxu0 0.0
    %310 = vmatpush1.msra.mxu0 0.0
    %311 = vmatprep.subr.mxu0 0.0
    %312 = vmatpush1.msra.mxu0 0.0
    %313 = vmatprep.subr.mxu0 0.0
    %314 = vmatpush1.msra.mxu0 0.0
    %315 = vmatprep.subr.mxu0 0.0
    %316 = vmatpush1.msra.mxu0 0.0
    %317 = vmatprep.subr.mxu0 0.0
    %318 = vmatpush1.msra.mxu0 0.0
    %319 = vmatprep.subr.mxu0 0.0
    %320 = vmatpush1.msra.mxu0 0.0
    %321 = vmatprep.subr.mxu0 0.0
    %322 = vmatpush1.msra.mxu0 0.0
    %323 = vmatprep.subr.mxu0 0.0
    %324 = vmatpush1.msra.mxu0 0.0
    %325 = vmatprep.subr.mxu0 0.0
    %326 = vmatpush1.msra.mxu0 0.0
    %327 = vmatprep.subr.mxu0 0.0
    %328 = vmatpush1.msra.mxu0 0.0
    %329 = vmatprep.subr.mxu0 0.0
    %330 = vmatpush1.msra.mxu0 0.0
    %331 = vmatprep.subr.mxu0 0.0
    %332 = vmatpush1.msra.mxu0 0.0
    %333 = vmatprep.mubr.f32.mxu0 0.0
    %334 = vmatmul.mubr.f32.gmra.mrb[0].mxu0 %v264
    %v335 = vpop.f32.mrb[0].mxu0
    %v336 = vadd.f32 %v260, %v335
    %v337 = vpop.f32.mrb[0].mxu0
    %338 = vmatprep.mubr.f32.mxu0 0.0
    %339 = vmatmul.mubr.f32.gmra.mrb[0].mxu0 %v267
    %v340 = vpop.f32.mrb[0].mxu0
    %v341 = vadd.f32 %v260, %v340
    %v342 = vpop.f32.mrb[0].mxu0
    %343 = vdwg.mxu0
    %v344 = vmax.f32 %v336, 0.0
    %v345 = vmax.f32 %v341, 0.0
    %v346 = vld [vmem:[%s6] sm:$0xff]
    %v347 = vld [vmem:[%s6 + $0x8] sm:$0xff]
    %v348 = vld [vmem:[%s6 + $0x10] sm:$0xff]
    %v349 = vld [vmem:[%s6 + $0x18] sm:$0xff]
    %v350 = vld [vmem:[%s5] sm:$0xff]
    %v351 = vld [vmem:[%s5 + $0x8] sm:$0xff]
    %v352 = vld [vmem:[%s5 + $0x10] sm:$0xff]
    %v353 = vld [vmem:[%s5 + $0x18] sm:$0xff]
    %v354 = vld [vmem:[#allocation12] sm:$0x1]
    %v356 = vlaneseq
    %v357 = vshrl.u32 %v356, 7
    %v358 = vsub.s32 0, %v357
    %v359 = vrot.slane %v354, %v358
    %v362 = vsel %vm262, %v344, 0
    %v365 = vsel %vm262, %v345, 0
    %367 = vmatprep.subr.mxu0 0.0
    %368 = vmatpush1.msra.mxu0 %v350
    %369 = vmatprep.subr.mxu0 0.0
    %370 = vmatpush1.msra.mxu0 %v351
    %371 = vmatprep.subr.mxu0 0.0
    %372 = vmatpush1.msra.mxu0 %v352
    %373 = vmatprep.subr.mxu0 0.0
    %374 = vmatpush1.msra.mxu0 %v353
    %375 = vmatprep.subr.mxu0 0.0
    %376 = vmatpush1.msra.mxu0 0.0
    %377 = vmatprep.subr.mxu0 0.0
    %378 = vmatpush1.msra.mxu0 0.0
    %379 = vmatprep.subr.mxu0 0.0
    %380 = vmatpush1.msra.mxu0 0.0
    %381 = vmatprep.subr.mxu0 0.0
    %382 = vmatpush1.msra.mxu0 0.0
    %383 = vmatprep.subr.mxu0 0.0
    %384 = vmatpush1.msra.mxu0 0.0
    %385 = vmatprep.subr.mxu0 0.0
    %386 = vmatpush1.msra.mxu0 0.0
    %387 = vmatprep.subr.mxu0 0.0
    %388 = vmatpush1.msra.mxu0 0.0
    %389 = vmatprep.subr.mxu0 0.0
    %390 = vmatpush1.msra.mxu0 0.0
    %391 = vmatprep.subr.mxu0 0.0
    %392 = vmatpush1.msra.mxu0 0.0
    %393 = vmatprep.subr.mxu0 0.0
    %394 = vmatpush1.msra.mxu0 0.0
    %395 = vmatprep.subr.mxu0 0.0
    %396 = vmatpush1.msra.mxu0 0.0
    %397 = vmatprep.subr.mxu0 0.0
    %398 = vmatpush1.msra.mxu0 0.0
    %399 = vmatprep.subr.mxu0 0.0
    %400 = vmatpush1.msra.mxu0 0.0
    %401 = vmatprep.subr.mxu0 0.0
    %402 = vmatpush1.msra.mxu0 0.0
    %403 = vmatprep.subr.mxu0 0.0
    %404 = vmatpush1.msra.mxu0 0.0
    %405 = vmatprep.subr.mxu0 0.0
    %406 = vmatpush1.msra.mxu0 0.0
    %407 = vmatprep.subr.mxu0 0.0
    %408 = vmatpush1.msra.mxu0 0.0
    %409 = vmatprep.subr.mxu0 0.0
    %410 = vmatpush1.msra.mxu0 0.0
    %411 = vmatprep.subr.mxu0 0.0
    %412 = vmatpush1.msra.mxu0 0.0
    %413 = vmatprep.subr.mxu0 0.0
    %414 = vmatpush1.msra.mxu0 0.0
    %415 = vmatprep.subr.mxu0 0.0
    %416 = vmatpush1.msra.mxu0 0.0
    %417 = vmatprep.subr.mxu0 0.0
    %418 = vmatpush1.msra.mxu0 0.0
    %419 = vmatprep.subr.mxu0 0.0
    %420 = vmatpush1.msra.mxu0 0.0
    %421 = vmatprep.subr.mxu0 0.0
    %422 = vmatpush1.msra.mxu0 0.0
    %423 = vmatprep.subr.mxu0 0.0
    %424 = vmatpush1.msra.mxu0 0.0
    %425 = vmatprep.subr.mxu0 0.0
    %426 = vmatpush1.msra.mxu0 0.0
    %427 = vmatprep.subr.mxu0 0.0
    %428 = vmatpush1.msra.mxu0 0.0
    %429 = vmatprep.subr.mxu0 0.0
    %430 = vmatpush1.msra.mxu0 0.0
    %431 = vmatprep.mubr.f32.mxu0 0.0
    %432 = vmatmul.mubr.f32.gmra.mrb[0].mxu0 %v362
    %v433 = vpop.f32.mrb[0].mxu0
    %v434 = vadd.f32 %v359, %v433
    %v435 = vpop.f32.mrb[0].mxu0
    %436 = vmatprep.mubr.f32.mxu0 0.0
    %437 = vmatmul.mubr.f32.gmra.mrb[0].mxu0 %v365
    %v438 = vpop.f32.mrb[0].mxu0
    %v439 = vadd.f32 %v359, %v438
    %v440 = vpop.f32.mrb[0].mxu0
    %441 = vdwg.mxu0
    %v443 = vsel %vm262, 0.0, 0
    %445 = vmatprep.subr.mxu0 0.0
    %446 = vmatpush1.msra.mxu0 %v346
    %447 = vmatprep.subr.mxu0 0.0
    %448 = vmatpush1.msra.mxu0 %v347
    %449 = vmatprep.subr.mxu0 0.0
    %450 = vmatpush1.msra.mxu0 %v348
    %451 = vmatprep.subr.mxu0 0.0
    %452 = vmatpush1.msra.mxu0 %v349
    %453 = vmatprep.subr.mxu0 0.0
    %454 = vmatpush1.msra.mxu0 0.0
    %455 = vmatprep.subr.mxu0 0.0
    %456 = vmatpush1.msra.mxu0 0.0
    %457 = vmatprep.subr.mxu0 0.0
    %458 = vmatpush1.msra.mxu0 0.0
    %459 = vmatprep.subr.mxu0 0.0
    %460 = vmatpush1.msra.mxu0 0.0
    %461 = vmatprep.subr.mxu0 0.0
    %462 = vmatpush1.msra.mxu0 0.0
    %463 = vmatprep.subr.mxu0 0.0
    %464 = vmatpush1.msra.mxu0 0.0
    %465 = vmatprep.subr.mxu0 0.0
    %466 = vmatpush1.msra.mxu0 0.0
    %467 = vmatprep.subr.mxu0 0.0
    %468 = vmatpush1.msra.mxu0 0.0
    %469 = vmatprep.subr.mxu0 0.0
    %470 = vmatpush1.msra.mxu0 0.0
    %471 = vmatprep.subr.mxu0 0.0
    %472 = vmatpush1.msra.mxu0 0.0
    %473 = vmatprep.subr.mxu0 0.0
    %474 = vmatpush1.msra.mxu0 0.0
    %475 = vmatprep.subr.mxu0 0.0
    %476 = vmatpush1.msra.mxu0 0.0
    %477 = vmatprep.subr.mxu0 0.0
    %478 = vmatpush1.msra.mxu0 0.0
    %479 = vmatprep.subr.mxu0 0.0
    %480 = vmatpush1.msra.mxu0 0.0
    %481 = vmatprep.subr.mxu0 0.0
    %482 = vmatpush1.msra.mxu0 0.0
    %483 = vmatprep.subr.mxu0 0.0
    %484 = vmatpush1.msra.mxu0 0.0
    %485 = vmatprep.subr.mxu0 0.0
    %486 = vmatpush1.msra.mxu0 0.0
    %487 = vmatprep.subr.mxu0 0.0
    %488 = vmatpush1.msra.mxu0 0.0
    %489 = vmatprep.subr.mxu0 0.0
    %490 = vmatpush1.msra.mxu0 0.0
    %491 = vmatprep.subr.mxu0 0.0
    %492 = vmatpush1.msra.mxu0 0.0
    %493 = vmatprep.subr.mxu0 0.0
    %494 = vmatpush1.msra.mxu0 0.0
    %495 = vmatprep.subr.mxu0 0.0
    %496 = vmatpush1.msra.mxu0 0.0
    %497 = vmatprep.subr.mxu0 0.0
    %498 = vmatpush1.msra.mxu0 0.0
    %499 = vmatprep.subr.mxu0 0.0
    %500 = vmatpush1.msra.mxu0 0.0
    %501 = vmatprep.subr.mxu0 0.0
    %502 = vmatpush1.msra.mxu0 0.0
    %503 = vmatprep.subr.mxu0 0.0
    %504 = vmatpush1.msra.mxu0 0.0
    %505 = vmatprep.subr.mxu0 0.0
    %506 = vmatpush1.msra.mxu0 0.0
    %507 = vmatprep.subr.mxu0 0.0
    %508 = vmatpush1.msra.mxu0 0.0
    %509 = vmatprep.mubr.f32.mxu0 0.0
    %510 = vmatmul.mubr.f32.gmra.mrb[0].mxu0 %v443
    %v511 = vpop.f32.mrb[0].mxu0
    %v512 = vadd.f32 0.0, %v511
    %v513 = vpop.f32.mrb[0].mxu0
    %514 = vdwg.mxu0
    %v515 = vadd.f32 %v434, %v512
    %v516 = vsub.f32 0.0, %v515
    %v517 = vmul.f32 %v516, 1.442695
    %v518 = vpow.pop %v517
    %v519 = vadd.f32 %v518, 1.0
    %v520 = vrcp.pop %v519
    %v521 = vmul.f32 1.0, %v520
    %v522 = vtanh.pop %v515
    %v523 = vmul.f32 %v521, 0.0
    %525 = vrot.lane.b32.xlu0 %v522, 64
    %v526 = vpop.permute.xlu0 %525
    %v528 = vmul.f32 %v521, %v526
    %530 = vrot.lane.b32.xlu0 %v528, 32
    %v531 = vpop.permute.xlu0 %530
    %v533 = vadd.f32 %v523, %v531
    %v534 = vtanh.pop %v533
    %536 = vrot.lane.b32.xlu0 %v534, 64
    %v537 = vpop.permute.xlu0 %536
    %v539 = vmul.f32 %v521, %v537
    %541 = vrot.lane.b32.xlu0 %v539, 32
    %v542 = vpop.permute.xlu0 %541
    %vm544 = vcmask 254976
    %545 = vst.msk [vmem:[#allocation2] sm:$0x3] %vm544, %v542
    %v546 = vsel %vm262, %v542, 0
    %548 = vmatprep.subr.mxu0 0.0
    %549 = vmatpush1.msra.mxu0 %v346
    %550 = vmatprep.subr.mxu0 0.0
    %551 = vmatpush1.msra.mxu0 %v347
    %552 = vmatprep.subr.mxu0 0.0
    %553 = vmatpush1.msra.mxu0 %v348
    %554 = vmatprep.subr.mxu0 0.0
    %555 = vmatpush1.msra.mxu0 %v349
    %556 = vmatprep.subr.mxu0 0.0
    %557 = vmatpush1.msra.mxu0 0.0
    %558 = vmatprep.subr.mxu0 0.0
    %559 = vmatpush1.msra.mxu0 0.0
    %560 = vmatprep.subr.mxu0 0.0
    %561 = vmatpush1.msra.mxu0 0.0
    %562 = vmatprep.subr.mxu0 0.0
    %563 = vmatpush1.msra.mxu0 0.0
    %564 = vmatprep.subr.mxu0 0.0
    %565 = vmatpush1.msra.mxu0 0.0
    %566 = vmatprep.subr.mxu0 0.0
    %567 = vmatpush1.msra.mxu0 0.0
    %568 = vmatprep.subr.mxu0 0.0
    %569 = vmatpush1.msra.mxu0 0.0
    %570 = vmatprep.subr.mxu0 0.0
    %571 = vmatpush1.msra.mxu0 0.0
    %572 = vmatprep.subr.mxu0 0.0
    %573 = vmatpush1.msra.mxu0 0.0
    %574 = vmatprep.subr.mxu0 0.0
    %575 = vmatpush1.msra.mxu0 0.0
    %576 = vmatprep.subr.mxu0 0.0
    %577 = vmatpush1.msra.mxu0 0.0
    %578 = vmatprep.subr.mxu0 0.0
    %579 = vmatpush1.msra.mxu0 0.0
    %580 = vmatprep.subr.mxu0 0.0
    %581 = vmatpush1.msra.mxu0 0.0
    %582 = vmatprep.subr.mxu0 0.0
    %583 = vmatpush1.msra.mxu0 0.0
    %584 = vmatprep.subr.mxu0 0.0
    %585 = vmatpush1.msra.mxu0 0.0
    %586 = vmatprep.subr.mxu0 0.0
    %587 = vmatpush1.msra.mxu0 0.0
    %588 = vmatprep.subr.mxu0 0.0
    %589 = vmatpush1.msra.mxu0 0.0
    %590 = vmatprep.subr.mxu0 0.0
    %591 = vmatpush1.msra.mxu0 0.0
    %592 = vmatprep.subr.mxu0 0.0
    %593 = vmatpush1.msra.mxu0 0.0
    %594 = vmatprep.subr.mxu0 0.0
    %595 = vmatpush1.msra.mxu0 0.0
    %596 = vmatprep.subr.mxu0 0.0
    %597 = vmatpush1.msra.mxu0 0.0
    %598 = vmatprep.subr.mxu0 0.0
    %599 = vmatpush1.msra.mxu0 0.0
    %600 = vmatprep.subr.mxu0 0.0
    %601 = vmatpush1.msra.mxu0 0.0
    %602 = vmatprep.subr.mxu0 0.0
    %603 = vmatpush1.msra.mxu0 0.0
    %604 = vmatprep.subr.mxu0 0.0
    %605 = vmatpush1.msra.mxu0 0.0
    %606 = vmatprep.subr.mxu0 0.0
    %607 = vmatpush1.msra.mxu0 0.0
    %608 = vmatprep.subr.mxu0 0.0
    %609 = vmatpush1.msra.mxu0 0.0
    %610 = vmatprep.subr.mxu0 0.0
    %611 = vmatpush1.msra.mxu0 0.0
    %612 = vmatprep.mubr.f32.mxu0 0.0
    %613 = vmatmul.mubr.f32.gmra.mrb[0].mxu0 %v546
    %v614 = vpop.f32.mrb[0].mxu0
    %v615 = vadd.f32 0.0, %v614
    %v616 = vpop.f32.mrb[0].mxu0
    %617 = vdwg.mxu0
    %v619 = vrot.slane %v615, 6
    %v621 = vadd.f32 %v434, %v619
    %v622 = vsub.f32 0.0, %v621
    %v623 = vmul.f32 %v622, 1.442695
    %v624 = vpow.pop %v623
    %v625 = vadd.f32 %v624, 1.0
    %v626 = vrcp.pop %v625
    %v627 = vmul.f32 1.0, %v626
    %v628 = vtanh.pop %v621
    %v630 = vrot.slane %v533, 6
    %v632 = vmul.f32 %v627, %v630
    %634 = vrot.lane.b32.xlu0 %v628, 64
    %v635 = vpop.permute.xlu0 %634
    %v637 = vmul.f32 %v627, %v635
    %639 = vrot.lane.b32.xlu0 %v637, 32
    %v640 = vpop.permute.xlu0 %639
    %v642 = vadd.f32 %v632, %v640
    %v643 = vtanh.pop %v642
    %645 = vrot.lane.b32.xlu0 %v643, 64
    %v646 = vpop.permute.xlu0 %645
    %v648 = vmul.f32 %v627, %v646
    %650 = vrot.lane.b32.xlu0 %v648, 32
    %v651 = vpop.permute.xlu0 %650
    %vm653 = vcmask 257026
    %654 = vst.msk [vmem:[#allocation2] sm:$0xc] %vm653, %v651
    %v655 = vrot.slane %v648, 2
    %656 = vrot.lane.b32.xlu0 %v655, 32
    %v657 = vpop.permute.xlu0 %656
    %v658 = vsel %vm262, %v657, 0
    %660 = vmatprep.subr.mxu0 0.0
    %661 = vmatpush1.msra.mxu0 %v346
    %662 = vmatprep.subr.mxu0 0.0
    %663 = vmatpush1.msra.mxu0 %v347
    %664 = vmatprep.subr.mxu0 0.0
    %665 = vmatpush1.msra.mxu0 %v348
    %666 = vmatprep.subr.mxu0 0.0
    %667 = vmatpush1.msra.mxu0 %v349
    %668 = vmatprep.subr.mxu0 0.0
    %669 = vmatpush1.msra.mxu0 0.0
    %670 = vmatprep.subr.mxu0 0.0
    %671 = vmatpush1.msra.mxu0 0.0
    %672 = vmatprep.subr.mxu0 0.0
    %673 = vmatpush1.msra.mxu0 0.0
    %674 = vmatprep.subr.mxu0 0.0
    %675 = vmatpush1.msra.mxu0 0.0
    %676 = vmatprep.subr.mxu0 0.0
    %677 = vmatpush1.msra.mxu0 0.0
    %678 = vmatprep.subr.mxu0 0.0
    %679 = vmatpush1.msra.mxu0 0.0
    %680 = vmatprep.subr.mxu0 0.0
    %681 = vmatpush1.msra.mxu0 0.0
    %682 = vmatprep.subr.mxu0 0.0
    %683 = vmatpush1.msra.mxu0 0.0
    %684 = vmatprep.subr.mxu0 0.0
    %685 = vmatpush1.msra.mxu0 0.0
    %686 = vmatprep.subr.mxu0 0.0
    %687 = vmatpush1.msra.mxu0 0.0
    %688 = vmatprep.subr.mxu0 0.0
    %689 = vmatpush1.msra.mxu0 0.0
    %690 = vmatprep.subr.mxu0 0.0
    %691 = vmatpush1.msra.mxu0 0.0
    %692 = vmatprep.subr.mxu0 0.0
    %693 = vmatpush1.msra.mxu0 0.0
    %694 = vmatprep.subr.mxu0 0.0
    %695 = vmatpush1.msra.mxu0 0.0
    %696 = vmatprep.subr.mxu0 0.0
    %697 = vmatpush1.msra.mxu0 0.0
    %698 = vmatprep.subr.mxu0 0.0
    %699 = vmatpush1.msra.mxu0 0.0
    %700 = vmatprep.subr.mxu0 0.0
    %701 = vmatpush1.msra.mxu0 0.0
    %702 = vmatprep.subr.mxu0 0.0
    %703 = vmatpush1.msra.mxu0 0.0
    %704 = vmatprep.subr.mxu0 0.0
    %705 = vmatpush1.msra.mxu0 0.0
    %706 = vmatprep.subr.mxu0 0.0
    %707 = vmatpush1.msra.mxu0 0.0
    %708 = vmatprep.subr.mxu0 0.0
    %709 = vmatpush1.msra.mxu0 0.0
    %710 = vmatprep.subr.mxu0 0.0
    %711 = vmatpush1.msra.mxu0 0.0
    %712 = vmatprep.subr.mxu0 0.0
    %713 = vmatpush1.msra.mxu0 0.0
    %714 = vmatprep.subr.mxu0 0.0
    %715 = vmatpush1.msra.mxu0 0.0
    %716 = vmatprep.subr.mxu0 0.0
    %717 = vmatpush1.msra.mxu0 0.0
    %718 = vmatprep.subr.mxu0 0.0
    %719 = vmatpush1.msra.mxu0 0.0
    %720 = vmatprep.subr.mxu0 0.0
    %721 = vmatpush1.msra.mxu0 0.0
    %722 = vmatprep.subr.mxu0 0.0
    %723 = vmatpush1.msra.mxu0 0.0
    %724 = vmatprep.mubr.f32.mxu0 0.0
    %725 = vmatmul.mubr.f32.gmra.mrb[0].mxu0 %v658
    %v726 = vpop.f32.mrb[0].mxu0
    %v727 = vadd.f32 0.0, %v726
    %v728 = vpop.f32.mrb[0].mxu0
    %729 = vdwg.mxu0
    %v731 = vrot.slane %v727, 4
    %v733 = vadd.f32 %v434, %v731
    %v734 = vsub.f32 0.0, %v733
    %v735 = vmul.f32 %v734, 1.442695
    %v736 = vpow.pop %v735
    %v737 = vadd.f32 %v736, 1.0
    %v738 = vrcp.pop %v737
    %v739 = vmul.f32 1.0, %v738
    %v740 = vtanh.pop %v733
    %v742 = vrot.slane %v642, 6
    %v744 = vmul.f32 %v739, %v742
    %746 = vrot.lane.b32.xlu0 %v740, 64
    %v747 = vpop.permute.xlu0 %746
    %v749 = vmul.f32 %v739, %v747
    %751 = vrot.lane.b32.xlu0 %v749, 32
    %v752 = vpop.permute.xlu0 %751
    %v754 = vadd.f32 %v744, %v752
    %v755 = vtanh.pop %v754
    %757 = vrot.lane.b32.xlu0 %v755, 64
    %v758 = vpop.permute.xlu0 %757
    %v760 = vmul.f32 %v739, %v758
    %762 = vrot.lane.b32.xlu0 %v760, 32
    %v763 = vpop.permute.xlu0 %762
    %vm765 = vcmask 259076
    %766 = vst.msk [vmem:[#allocation2] sm:$0x30] %vm765, %v763
    %v767 = vrot.slane %v760, 4
    %768 = vrot.lane.b32.xlu0 %v767, 32
    %v769 = vpop.permute.xlu0 %768
    %v770 = vsel %vm262, %v769, 0
    %772 = vmatprep.subr.mxu0 0.0
    %773 = vmatpush1.msra.mxu0 %v346
    %774 = vmatprep.subr.mxu0 0.0
    %775 = vmatpush1.msra.mxu0 %v347
    %776 = vmatprep.subr.mxu0 0.0
    %777 = vmatpush1.msra.mxu0 %v348
    %778 = vmatprep.subr.mxu0 0.0
    %779 = vmatpush1.msra.mxu0 %v349
    %780 = vmatprep.subr.mxu0 0.0
    %781 = vmatpush1.msra.mxu0 0.0
    %782 = vmatprep.subr.mxu0 0.0
    %783 = vmatpush1.msra.mxu0 0.0
    %784 = vmatprep.subr.mxu0 0.0
    %785 = vmatpush1.msra.mxu0 0.0
    %786 = vmatprep.subr.mxu0 0.0
    %787 = vmatpush1.msra.mxu0 0.0
    %788 = vmatprep.subr.mxu0 0.0
    %789 = vmatpush1.msra.mxu0 0.0
    %790 = vmatprep.subr.mxu0 0.0
    %791 = vmatpush1.msra.mxu0 0.0
    %792 = vmatprep.subr.mxu0 0.0
    %793 = vmatpush1.msra.mxu0 0.0
    %794 = vmatprep.subr.mxu0 0.0
    %795 = vmatpush1.msra.mxu0 0.0
    %796 = vmatprep.subr.mxu0 0.0
    %797 = vmatpush1.msra.mxu0 0.0
    %798 = vmatprep.subr.mxu0 0.0
    %799 = vmatpush1.msra.mxu0 0.0
    %800 = vmatprep.subr.mxu0 0.0
    %801 = vmatpush1.msra.mxu0 0.0
    %802 = vmatprep.subr.mxu0 0.0
    %803 = vmatpush1.msra.mxu0 0.0
    %804 = vmatprep.subr.mxu0 0.0
    %805 = vmatpush1.msra.mxu0 0.0
    %806 = vmatprep.subr.mxu0 0.0
    %807 = vmatpush1.msra.mxu0 0.0
    %808 = vmatprep.subr.mxu0 0.0
    %809 = vmatpush1.msra.mxu0 0.0
    %810 = vmatprep.subr.mxu0 0.0
    %811 = vmatpush1.msra.mxu0 0.0
    %812 = vmatprep.subr.mxu0 0.0
    %813 = vmatpush1.msra.mxu0 0.0
    %814 = vmatprep.subr.mxu0 0.0
    %815 = vmatpush1.msra.mxu0 0.0
    %816 = vmatprep.subr.mxu0 0.0
    %817 = vmatpush1.msra.mxu0 0.0
    %818 = vmatprep.subr.mxu0 0.0
    %819 = vmatpush1.msra.mxu0 0.0
    %820 = vmatprep.subr.mxu0 0.0
    %821 = vmatpush1.msra.mxu0 0.0
    %822 = vmatprep.subr.mxu0 0.0
    %823 = vmatpush1.msra.mxu0 0.0
    %824 = vmatprep.subr.mxu0 0.0
    %825 = vmatpush1.msra.mxu0 0.0
    %826 = vmatprep.subr.mxu0 0.0
    %827 = vmatpush1.msra.mxu0 0.0
    %828 = vmatprep.subr.mxu0 0.0
    %829 = vmatpush1.msra.mxu0 0.0
    %830 = vmatprep.subr.mxu0 0.0
    %831 = vmatpush1.msra.mxu0 0.0
    %832 = vmatprep.subr.mxu0 0.0
    %833 = vmatpush1.msra.mxu0 0.0
    %834 = vmatprep.subr.mxu0 0.0
    %835 = vmatpush1.msra.mxu0 0.0
    %836 = vmatprep.mubr.f32.mxu0 0.0
    %837 = vmatmul.mubr.f32.gmra.mrb[0].mxu0 %v770
    %v838 = vpop.f32.mrb[0].mxu0
    %v839 = vadd.f32 0.0, %v838
    %v840 = vpop.f32.mrb[0].mxu0
    %841 = vdwg.mxu0
    %v843 = vrot.slane %v839, 2
    %v845 = vadd.f32 %v434, %v843
    %v846 = vsub.f32 0.0, %v845
    %v847 = vmul.f32 %v846, 1.442695
    %v848 = vpow.pop %v847
    %v849 = vadd.f32 %v848, 1.0
    %v850 = vrcp.pop %v849
    %v851 = vmul.f32 1.0, %v850
    %v852 = vtanh.pop %v845
    %v854 = vrot.slane %v754, 6
    %v856 = vmul.f32 %v851, %v854
    %858 = vrot.lane.b32.xlu0 %v852, 64
    %v859 = vpop.permute.xlu0 %858
    %v861 = vmul.f32 %v851, %v859
    %863 = vrot.lane.b32.xlu0 %v861, 32
    %v864 = vpop.permute.xlu0 %863
    %v866 = vadd.f32 %v856, %v864
    %v867 = vtanh.pop %v866
    %869 = vrot.lane.b32.xlu0 %v867, 64
    %v870 = vpop.permute.xlu0 %869
    %v872 = vmul.f32 %v851, %v870
    %874 = vrot.lane.b32.xlu0 %v872, 32
    %v875 = vpop.permute.xlu0 %874
    %vm877 = vcmask 261126
    %878 = vst.msk [vmem:[#allocation2] sm:$0xc0] %vm877, %v875
    %v879 = vrot.slane %v872, 6
    %880 = vrot.lane.b32.xlu0 %v879, 32
    %v881 = vpop.permute.xlu0 %880
    %v882 = vsel %vm262, %v881, 0
    %884 = vmatprep.subr.mxu0 0.0
    %885 = vmatpush1.msra.mxu0 %v346
    %886 = vmatprep.subr.mxu0 0.0
    %887 = vmatpush1.msra.mxu0 %v347
    %888 = vmatprep.subr.mxu0 0.0
    %889 = vmatpush1.msra.mxu0 %v348
    %890 = vmatprep.subr.mxu0 0.0
    %891 = vmatpush1.msra.mxu0 %v349
    %892 = vmatprep.subr.mxu0 0.0
    %893 = vmatpush1.msra.mxu0 0.0
    %894 = vmatprep.subr.mxu0 0.0
    %895 = vmatpush1.msra.mxu0 0.0
    %896 = vmatprep.subr.mxu0 0.0
    %897 = vmatpush1.msra.mxu0 0.0
    %898 = vmatprep.subr.mxu0 0.0
    %899 = vmatpush1.msra.mxu0 0.0
    %900 = vmatprep.subr.mxu0 0.0
    %901 = vmatpush1.msra.mxu0 0.0
    %902 = vmatprep.subr.mxu0 0.0
    %903 = vmatpush1.msra.mxu0 0.0
    %904 = vmatprep.subr.mxu0 0.0
    %905 = vmatpush1.msra.mxu0 0.0
    %906 = vmatprep.subr.mxu0 0.0
    %907 = vmatpush1.msra.mxu0 0.0
    %908 = vmatprep.subr.mxu0 0.0
    %909 = vmatpush1.msra.mxu0 0.0
    %910 = vmatprep.subr.mxu0 0.0
    %911 = vmatpush1.msra.mxu0 0.0
    %912 = vmatprep.subr.mxu0 0.0
    %913 = vmatpush1.msra.mxu0 0.0
    %914 = vmatprep.subr.mxu0 0.0
    %915 = vmatpush1.msra.mxu0 0.0
    %916 = vmatprep.subr.mxu0 0.0
    %917 = vmatpush1.msra.mxu0 0.0
    %918 = vmatprep.subr.mxu0 0.0
    %919 = vmatpush1.msra.mxu0 0.0
    %920 = vmatprep.subr.mxu0 0.0
    %921 = vmatpush1.msra.mxu0 0.0
    %922 = vmatprep.subr.mxu0 0.0
    %923 = vmatpush1.msra.mxu0 0.0
    %924 = vmatprep.subr.mxu0 0.0
    %925 = vmatpush1.msra.mxu0 0.0
    %926 = vmatprep.subr.mxu0 0.0
    %927 = vmatpush1.msra.mxu0 0.0
    %928 = vmatprep.subr.mxu0 0.0
    %929 = vmatpush1.msra.mxu0 0.0
    %930 = vmatprep.subr.mxu0 0.0
    %931 = vmatpush1.msra.mxu0 0.0
    %932 = vmatprep.subr.mxu0 0.0
    %933 = vmatpush1.msra.mxu0 0.0
    %934 = vmatprep.subr.mxu0 0.0
    %935 = vmatpush1.msra.mxu0 0.0
    %936 = vmatprep.subr.mxu0 0.0
    %937 = vmatpush1.msra.mxu0 0.0
    %938 = vmatprep.subr.mxu0 0.0
    %939 = vmatpush1.msra.mxu0 0.0
    %940 = vmatprep.subr.mxu0 0.0
    %941 = vmatpush1.msra.mxu0 0.0
    %942 = vmatprep.subr.mxu0 0.0
    %943 = vmatpush1.msra.mxu0 0.0
    %944 = vmatprep.subr.mxu0 0.0
    %945 = vmatpush1.msra.mxu0 0.0
    %946 = vmatprep.subr.mxu0 0.0
    %947 = vmatpush1.msra.mxu0 0.0
    %948 = vmatprep.mubr.f32.mxu0 0.0
    %949 = vmatmul.mubr.f32.gmra.mrb[0].mxu0 %v882
    %v950 = vpop.f32.mrb[0].mxu0
    %v951 = vadd.f32 0.0, %v950
    %v952 = vpop.f32.mrb[0].mxu0
    %953 = vdwg.mxu0
    %v954 = vadd.f32 %v439, %v951
    %v955 = vsub.f32 0.0, %v954
    %v956 = vmul.f32 %v955, 1.442695
    %v957 = vpow.pop %v956
    %v958 = vadd.f32 %v957, 1.0
    %v959 = vrcp.pop %v958
    %v960 = vmul.f32 1.0, %v959
    %v961 = vtanh.pop %v954
    %v963 = vrot.slane %v866, 6
    %v965 = vmul.f32 %v960, %v963
    %967 = vrot.lane.b32.xlu0 %v961, 64
    %v968 = vpop.permute.xlu0 %967
    %v970 = vmul.f32 %v960, %v968
    %972 = vrot.lane.b32.xlu0 %v970, 32
    %v973 = vpop.permute.xlu0 %972
    %v975 = vadd.f32 %v965, %v973
    %v976 = vtanh.pop %v975
    %978 = vrot.lane.b32.xlu0 %v976, 64
    %v979 = vpop.permute.xlu0 %978
    %v981 = vmul.f32 %v960, %v979
    %983 = vrot.lane.b32.xlu0 %v981, 32
    %v984 = vpop.permute.xlu0 %983
    %986 = vst.msk [vmem:[#allocation2 + $0x8] sm:$0x3] %vm544, %v984
    %v987 = vsel %vm262, %v984, 0
    %989 = vmatprep.subr.mxu0 0.0
    %990 = vmatpush1.msra.mxu0 %v346
    %991 = vmatprep.subr.mxu0 0.0
    %992 = vmatpush1.msra.mxu0 %v347
    %993 = vmatprep.subr.mxu0 0.0
    %994 = vmatpush1.msra.mxu0 %v348
    %995 = vmatprep.subr.mxu0 0.0
    %996 = vmatpush1.msra.mxu0 %v349
    %997 = vmatprep.subr.mxu0 0.0
    %998 = vmatpush1.msra.mxu0 0.0
    %999 = vmatprep.subr.mxu0 0.0
    %1000 = vmatpush1.msra.mxu0 0.0
    %1001 = vmatprep.subr.mxu0 0.0
    %1002 = vmatpush1.msra.mxu0 0.0
    %1003 = vmatprep.subr.mxu0 0.0
    %1004 = vmatpush1.msra.mxu0 0.0
    %1005 = vmatprep.subr.mxu0 0.0
    %1006 = vmatpush1.msra.mxu0 0.0
    %1007 = vmatprep.subr.mxu0 0.0
    %1008 = vmatpush1.msra.mxu0 0.0
    %1009 = vmatprep.subr.mxu0 0.0
    %1010 = vmatpush1.msra.mxu0 0.0
    %1011 = vmatprep.subr.mxu0 0.0
    %1012 = vmatpush1.msra.mxu0 0.0
    %1013 = vmatprep.subr.mxu0 0.0
    %1014 = vmatpush1.msra.mxu0 0.0
    %1015 = vmatprep.subr.mxu0 0.0
    %1016 = vmatpush1.msra.mxu0 0.0
    %1017 = vmatprep.subr.mxu0 0.0
    %1018 = vmatpush1.msra.mxu0 0.0
    %1019 = vmatprep.subr.mxu0 0.0
    %1020 = vmatpush1.msra.mxu0 0.0
    %1021 = vmatprep.subr.mxu0 0.0
    %1022 = vmatpush1.msra.mxu0 0.0
    %1023 = vmatprep.subr.mxu0 0.0
    %1024 = vmatpush1.msra.mxu0 0.0
    %1025 = vmatprep.subr.mxu0 0.0
    %1026 = vmatpush1.msra.mxu0 0.0
    %1027 = vmatprep.subr.mxu0 0.0
    %1028 = vmatpush1.msra.mxu0 0.0
    %1029 = vmatprep.subr.mxu0 0.0
    %1030 = vmatpush1.msra.mxu0 0.0
    %1031 = vmatprep.subr.mxu0 0.0
    %1032 = vmatpush1.msra.mxu0 0.0
    %1033 = vmatprep.subr.mxu0 0.0
    %1034 = vmatpush1.msra.mxu0 0.0
    %1035 = vmatprep.subr.mxu0 0.0
    %1036 = vmatpush1.msra.mxu0 0.0
    %1037 = vmatprep.subr.mxu0 0.0
    %1038 = vmatpush1.msra.mxu0 0.0
    %1039 = vmatprep.subr.mxu0 0.0
    %1040 = vmatpush1.msra.mxu0 0.0
    %1041 = vmatprep.subr.mxu0 0.0
    %1042 = vmatpush1.msra.mxu0 0.0
    %1043 = vmatprep.subr.mxu0 0.0
    %1044 = vmatpush1.msra.mxu0 0.0
    %1045 = vmatprep.subr.mxu0 0.0
    %1046 = vmatpush1.msra.mxu0 0.0
    %1047 = vmatprep.subr.mxu0 0.0
    %1048 = vmatpush1.msra.mxu0 0.0
    %1049 = vmatprep.subr.mxu0 0.0
    %1050 = vmatpush1.msra.mxu0 0.0
    %1051 = vmatprep.subr.mxu0 0.0
    %1052 = vmatpush1.msra.mxu0 0.0
    %1053 = vmatprep.mubr.f32.mxu0 0.0
    %1054 = vmatmul.mubr.f32.gmra.mrb[0].mxu0 %v987
    %v1055 = vpop.f32.mrb[0].mxu0
    %v1056 = vadd.f32 0.0, %v1055
    %v1057 = vpop.f32.mrb[0].mxu0
    %1058 = vdwg.mxu0
    %v1060 = vrot.slane %v1056, 6
    %v1062 = vadd.f32 %v439, %v1060
    %v1063 = vsub.f32 0.0, %v1062
    %v1064 = vmul.f32 %v1063, 1.442695
    %v1065 = vpow.pop %v1064
    %v1066 = vadd.f32 %v1065, 1.0
    %v1067 = vrcp.pop %v1066
    %v1068 = vmul.f32 1.0, %v1067
    %v1069 = vtanh.pop %v1062
    %v1071 = vrot.slane %v975, 6
    %v1073 = vmul.f32 %v1068, %v1071
    %1075 = vrot.lane.b32.xlu0 %v1069, 64
    %v1076 = vpop.permute.xlu0 %1075
    %v1078 = vmul.f32 %v1068, %v1076
    %1080 = vrot.lane.b32.xlu0 %v1078, 32
    %v1081 = vpop.permute.xlu0 %1080
    %v1083 = vadd.f32 %v1073, %v1081
    %v1084 = vtanh.pop %v1083
    %1086 = vrot.lane.b32.xlu0 %v1084, 64
    %v1087 = vpop.permute.xlu0 %1086
    %v1089 = vmul.f32 %v1068, %v1087
    %1091 = vrot.lane.b32.xlu0 %v1089, 32
    %v1092 = vpop.permute.xlu0 %1091
    %1094 = vst.msk [vmem:[#allocation2 + $0x8] sm:$0xc] %vm653, %v1092
    %v1095 = vrot.slane %v1089, 2
    %1096 = vrot.lane.b32.xlu0 %v1095, 32
    %v1097 = vpop.permute.xlu0 %1096
    %v1098 = vsel %vm262, %v1097, 0
    %1100 = vmatprep.subr.mxu0 0.0
    %1101 = vmatpush1.msra.mxu0 %v346
    %1102 = vmatprep.subr.mxu0 0.0
    %1103 = vmatpush1.msra.mxu0 %v347
    %1104 = vmatprep.subr.mxu0 0.0
    %1105 = vmatpush1.msra.mxu0 %v348
    %1106 = vmatprep.subr.mxu0 0.0
    %1107 = vmatpush1.msra.mxu0 %v349
    %1108 = vmatprep.subr.mxu0 0.0
    %1109 = vmatpush1.msra.mxu0 0.0
    %1110 = vmatprep.subr.mxu0 0.0
    %1111 = vmatpush1.msra.mxu0 0.0
    %1112 = vmatprep.subr.mxu0 0.0
    %1113 = vmatpush1.msra.mxu0 0.0
    %1114 = vmatprep.subr.mxu0 0.0
    %1115 = vmatpush1.msra.mxu0 0.0
    %1116 = vmatprep.subr.mxu0 0.0
    %1117 = vmatpush1.msra.mxu0 0.0
    %1118 = vmatprep.subr.mxu0 0.0
    %1119 = vmatpush1.msra.mxu0 0.0
    %1120 = vmatprep.subr.mxu0 0.0
    %1121 = vmatpush1.msra.mxu0 0.0
    %1122 = vmatprep.subr.mxu0 0.0
    %1123 = vmatpush1.msra.mxu0 0.0
    %1124 = vmatprep.subr.mxu0 0.0
    %1125 = vmatpush1.msra.mxu0 0.0
    %1126 = vmatprep.subr.mxu0 0.0
    %1127 = vmatpush1.msra.mxu0 0.0
    %1128 = vmatprep.subr.mxu0 0.0
    %1129 = vmatpush1.msra.mxu0 0.0
    %1130 = vmatprep.subr.mxu0 0.0
    %1131 = vmatpush1.msra.mxu0 0.0
    %1132 = vmatprep.subr.mxu0 0.0
    %1133 = vmatpush1.msra.mxu0 0.0
    %1134 = vmatprep.subr.mxu0 0.0
    %1135 = vmatpush1.msra.mxu0 0.0
    %1136 = vmatprep.subr.mxu0 0.0
    %1137 = vmatpush1.msra.mxu0 0.0
    %1138 = vmatprep.subr.mxu0 0.0
    %1139 = vmatpush1.msra.mxu0 0.0
    %1140 = vmatprep.subr.mxu0 0.0
    %1141 = vmatpush1.msra.mxu0 0.0
    %1142 = vmatprep.subr.mxu0 0.0
    %1143 = vmatpush1.msra.mxu0 0.0
    %1144 = vmatprep.subr.mxu0 0.0
    %1145 = vmatpush1.msra.mxu0 0.0
    %1146 = vmatprep.subr.mxu0 0.0
    %1147 = vmatpush1.msra.mxu0 0.0
    %1148 = vmatprep.subr.mxu0 0.0
    %1149 = vmatpush1.msra.mxu0 0.0
    %1150 = vmatprep.subr.mxu0 0.0
    %1151 = vmatpush1.msra.mxu0 0.0
    %1152 = vmatprep.subr.mxu0 0.0
    %1153 = vmatpush1.msra.mxu0 0.0
    %1154 = vmatprep.subr.mxu0 0.0
    %1155 = vmatpush1.msra.mxu0 0.0
    %1156 = vmatprep.subr.mxu0 0.0
    %1157 = vmatpush1.msra.mxu0 0.0
    %1158 = vmatprep.subr.mxu0 0.0
    %1159 = vmatpush1.msra.mxu0 0.0
    %1160 = vmatprep.subr.mxu0 0.0
    %1161 = vmatpush1.msra.mxu0 0.0
    %1162 = vmatprep.subr.mxu0 0.0
    %1163 = vmatpush1.msra.mxu0 0.0
    %1164 = vmatprep.mubr.f32.mxu0 0.0
    %1165 = vmatmul.mubr.f32.gmra.mrb[0].mxu0 %v1098
    %v1166 = vpop.f32.mrb[0].mxu0
    %v1167 = vadd.f32 0.0, %v1166
    %v1168 = vpop.f32.mrb[0].mxu0
    %1169 = vdwg.mxu0
    %v1171 = vrot.slane %v1167, 4
    %v1173 = vadd.f32 %v439, %v1171
    %v1174 = vsub.f32 0.0, %v1173
    %v1175 = vmul.f32 %v1174, 1.442695
    %v1176 = vpow.pop %v1175
    %v1177 = vadd.f32 %v1176, 1.0
    %v1178 = vrcp.pop %v1177
    %v1179 = vmul.f32 1.0, %v1178
    %v1180 = vtanh.pop %v1173
    %v1182 = vrot.slane %v1083, 6
    %v1184 = vmul.f32 %v1179, %v1182
    %1186 = vrot.lane.b32.xlu0 %v1180, 64
    %v1187 = vpop.permute.xlu0 %1186
    %v1189 = vmul.f32 %v1179, %v1187
    %1191 = vrot.lane.b32.xlu0 %v1189, 32
    %v1192 = vpop.permute.xlu0 %1191
    %v1194 = vadd.f32 %v1184, %v1192
    %v1195 = vtanh.pop %v1194
    %1197 = vrot.lane.b32.xlu0 %v1195, 64
    %v1198 = vpop.permute.xlu0 %1197
    %v1200 = vmul.f32 %v1179, %v1198
    %1202 = vrot.lane.b32.xlu0 %v1200, 32
    %v1203 = vpop.permute.xlu0 %1202
    %1205 = vst.msk [vmem:[#allocation2 + $0x8] sm:$0x30] %vm765, %v1203
    %v1206 = vrot.slane %v1200, 4
    %1207 = vrot.lane.b32.xlu0 %v1206, 32
    %v1208 = vpop.permute.xlu0 %1207
    %v1209 = vsel %vm262, %v1208, 0
    %1211 = vmatprep.subr.mxu0 0.0
    %1212 = vmatpush1.msra.mxu0 %v346
    %1213 = vmatprep.subr.mxu0 0.0
    %1214 = vmatpush1.msra.mxu0 %v347
    %1215 = vmatprep.subr.mxu0 0.0
    %1216 = vmatpush1.msra.mxu0 %v348
    %1217 = vmatprep.subr.mxu0 0.0
    %1218 = vmatpush1.msra.mxu0 %v349
    %1219 = vmatprep.subr.mxu0 0.0
    %1220 = vmatpush1.msra.mxu0 0.0
    %1221 = vmatprep.subr.mxu0 0.0
    %1222 = vmatpush1.msra.mxu0 0.0
    %1223 = vmatprep.subr.mxu0 0.0
    %1224 = vmatpush1.msra.mxu0 0.0
    %1225 = vmatprep.subr.mxu0 0.0
    %1226 = vmatpush1.msra.mxu0 0.0
    %1227 = vmatprep.subr.mxu0 0.0
    %1228 = vmatpush1.msra.mxu0 0.0
    %1229 = vmatprep.subr.mxu0 0.0
    %1230 = vmatpush1.msra.mxu0 0.0
    %1231 = vmatprep.subr.mxu0 0.0
    %1232 = vmatpush1.msra.mxu0 0.0
    %1233 = vmatprep.subr.mxu0 0.0
    %1234 = vmatpush1.msra.mxu0 0.0
    %1235 = vmatprep.subr.mxu0 0.0
    %1236 = vmatpush1.msra.mxu0 0.0
    %1237 = vmatprep.subr.mxu0 0.0
    %1238 = vmatpush1.msra.mxu0 0.0
    %1239 = vmatprep.subr.mxu0 0.0
    %1240 = vmatpush1.msra.mxu0 0.0
    %1241 = vmatprep.subr.mxu0 0.0
    %1242 = vmatpush1.msra.mxu0 0.0
    %1243 = vmatprep.subr.mxu0 0.0
    %1244 = vmatpush1.msra.mxu0 0.0
    %1245 = vmatprep.subr.mxu0 0.0
    %1246 = vmatpush1.msra.mxu0 0.0
    %1247 = vmatprep.subr.mxu0 0.0
    %1248 = vmatpush1.msra.mxu0 0.0
    %1249 = vmatprep.subr.mxu0 0.0
    %1250 = vmatpush1.msra.mxu0 0.0
    %1251 = vmatprep.subr.mxu0 0.0
    %1252 = vmatpush1.msra.mxu0 0.0
    %1253 = vmatprep.subr.mxu0 0.0
    %1254 = vmatpush1.msra.mxu0 0.0
    %1255 = vmatprep.subr.mxu0 0.0
    %1256 = vmatpush1.msra.mxu0 0.0
    %1257 = vmatprep.subr.mxu0 0.0
    %1258 = vmatpush1.msra.mxu0 0.0
    %1259 = vmatprep.subr.mxu0 0.0
    %1260 = vmatpush1.msra.mxu0 0.0
    %1261 = vmatprep.subr.mxu0 0.0
    %1262 = vmatpush1.msra.mxu0 0.0
    %1263 = vmatprep.subr.mxu0 0.0
    %1264 = vmatpush1.msra.mxu0 0.0
    %1265 = vmatprep.subr.mxu0 0.0
    %1266 = vmatpush1.msra.mxu0 0.0
    %1267 = vmatprep.subr.mxu0 0.0
    %1268 = vmatpush1.msra.mxu0 0.0
    %1269 = vmatprep.subr.mxu0 0.0
    %1270 = vmatpush1.msra.mxu0 0.0
    %1271 = vmatprep.subr.mxu0 0.0
    %1272 = vmatpush1.msra.mxu0 0.0
    %1273 = vmatprep.subr.mxu0 0.0
    %1274 = vmatpush1.msra.mxu0 0.0
    %1275 = vmatprep.mubr.f32.mxu0 0.0
    %1276 = vmatmul.mubr.f32.gmra.mrb[0].mxu0 %v1209
    %v1277 = vpop.f32.mrb[0].mxu0
    %v1278 = vadd.f32 0.0, %v1277
    %v1279 = vpop.f32.mrb[0].mxu0
    %1280 = vdwg.mxu0
    %v1282 = vrot.slane %v1278, 2
    %v1284 = vadd.f32 %v439, %v1282
    %v1285 = vsub.f32 0.0, %v1284
    %v1286 = vmul.f32 %v1285, 1.442695
    %v1287 = vpow.pop %v1286
    %v1288 = vadd.f32 %v1287, 1.0
    %v1289 = vrcp.pop %v1288
    %v1290 = vmul.f32 1.0, %v1289
    %v1291 = vtanh.pop %v1284
    %v1293 = vrot.slane %v1194, 6
    %v1295 = vmul.f32 %v1290, %v1293
    %1297 = vrot.lane.b32.xlu0 %v1291, 64
    %v1298 = vpop.permute.xlu0 %1297
    %v1300 = vmul.f32 %v1290, %v1298
    %1302 = vrot.lane.b32.xlu0 %v1300, 32
    %v1303 = vpop.permute.xlu0 %1302
    %v1305 = vadd.f32 %v1295, %v1303
    %v1306 = vtanh.pop %v1305
    %1308 = vrot.lane.b32.xlu0 %v1306, 64
    %v1309 = vpop.permute.xlu0 %1308
    %v1311 = vmul.f32 %v1290, %v1309
    %1313 = vrot.lane.b32.xlu0 %v1311, 32
    %v1314 = vpop.permute.xlu0 %1313
    %1316 = vst.msk [vmem:[#allocation2 + $0x8] sm:$0xc0] %vm877, %v1314
    %v1317 = vld [vmem:[#allocation2] sm:$0xff]
    %v1318 = vld [vmem:[#allocation2 + $0x8] sm:$0xff]
    %s1319 = scalar_lea.vmem %s6, 32
    %v1320 = vld [vmem:[%s1319] sm:$0xff]
    %v1321 = vld [vmem:[%s1319 + $0x8] sm:$0xff]
    %v1322 = vld [vmem:[%s1319 + $0x10] sm:$0xff]
    %v1323 = vld [vmem:[%s1319 + $0x18] sm:$0xff]
    %s1324 = scalar_lea.vmem %s5, 32
    %v1325 = vld [vmem:[%s1324] sm:$0xff]
    %v1326 = vld [vmem:[%s1324 + $0x8] sm:$0xff]
    %v1327 = vld [vmem:[%s1324 + $0x10] sm:$0xff]
    %v1328 = vld [vmem:[%s1324 + $0x18] sm:$0xff]
    %s1329 = scalar_lea.vmem [#allocation12], 1
    %v1330 = vld [vmem:[%s1329] sm:$0x1]
    %v1332 = vlaneseq
    %v1333 = vshrl.u32 %v1332, 7
    %v1334 = vsub.s32 0, %v1333
    %v1335 = vrot.slane %v1330, %v1334
    %v1338 = vsel %vm262, %v1317, 0
    %v1341 = vsel %vm262, %v1318, 0
    %1343 = vmatprep.subr.mxu0 0.0
    %1344 = vmatpush1.msra.mxu0 %v1325
    %1345 = vmatprep.subr.mxu0 0.0
    %1346 = vmatpush1.msra.mxu0 %v1326
    %1347 = vmatprep.subr.mxu0 0.0
    %1348 = vmatpush1.msra.mxu0 %v1327
    %1349 = vmatprep.subr.mxu0 0.0
    %1350 = vmatpush1.msra.mxu0 %v1328
    %1351 = vmatprep.subr.mxu0 0.0
    %1352 = vmatpush1.msra.mxu0 0.0
    %1353 = vmatprep.subr.mxu0 0.0
    %1354 = vmatpush1.msra.mxu0 0.0
    %1355 = vmatprep.subr.mxu0 0.0
    %1356 = vmatpush1.msra.mxu0 0.0
    %1357 = vmatprep.subr.mxu0 0.0
    %1358 = vmatpush1.msra.mxu0 0.0
    %1359 = vmatprep.subr.mxu0 0.0
    %1360 = vmatpush1.msra.mxu0 0.0
    %1361 = vmatprep.subr.mxu0 0.0
    %1362 = vmatpush1.msra.mxu0 0.0
    %1363 = vmatprep.subr.mxu0 0.0
    %1364 = vmatpush1.msra.mxu0 0.0
    %1365 = vmatprep.subr.mxu0 0.0
    %1366 = vmatpush1.msra.mxu0 0.0
    %1367 = vmatprep.subr.mxu0 0.0
    %1368 = vmatpush1.msra.mxu0 0.0
    %1369 = vmatprep.subr.mxu0 0.0
    %1370 = vmatpush1.msra.mxu0 0.0
    %1371 = vmatprep.subr.mxu0 0.0
    %1372 = vmatpush1.msra.mxu0 0.0
    %1373 = vmatprep.subr.mxu0 0.0
    %1374 = vmatpush1.msra.mxu0 0.0
    %1375 = vmatprep.subr.mxu0 0.0
    %1376 = vmatpush1.msra.mxu0 0.0
    %1377 = vmatprep.subr.mxu0 0.0
    %1378 = vmatpush1.msra.mxu0 0.0
    %1379 = vmatprep.subr.mxu0 0.0
    %1380 = vmatpush1.msra.mxu0 0.0
    %1381 = vmatprep.subr.mxu0 0.0
    %1382 = vmatpush1.msra.mxu0 0.0
    %1383 = vmatprep.subr.mxu0 0.0
    %1384 = vmatpush1.msra.mxu0 0.0
    %1385 = vmatprep.subr.mxu0 0.0
    %1386 = vmatpush1.msra.mxu0 0.0
    %1387 = vmatprep.subr.mxu0 0.0
    %1388 = vmatpush1.msra.mxu0 0.0
    %1389 = vmatprep.subr.mxu0 0.0
    %1390 = vmatpush1.msra.mxu0 0.0
    %1391 = vmatprep.subr.mxu0 0.0
    %1392 = vmatpush1.msra.mxu0 0.0
    %1393 = vmatprep.subr.mxu0 0.0
    %1394 = vmatpush1.msra.mxu0 0.0
    %1395 = vmatprep.subr.mxu0 0.0
    %1396 = vmatpush1.msra.mxu0 0.0
    %1397 = vmatprep.subr.mxu0 0.0
    %1398 = vmatpush1.msra.mxu0 0.0
    %1399 = vmatprep.subr.mxu0 0.0
    %1400 = vmatpush1.msra.mxu0 0.0
    %1401 = vmatprep.subr.mxu0 0.0
    %1402 = vmatpush1.msra.mxu0 0.0
    %1403 = vmatprep.subr.mxu0 0.0
    %1404 = vmatpush1.msra.mxu0 0.0
    %1405 = vmatprep.subr.mxu0 0.0
    %1406 = vmatpush1.msra.mxu0 0.0
    %1407 = vmatprep.mubr.f32.mxu0 0.0
    %1408 = vmatmul.mubr.f32.gmra.mrb[0].mxu0 %v1338
    %v1409 = vpop.f32.mrb[0].mxu0
    %v1410 = vadd.f32 %v1335, %v1409
    %v1411 = vpop.f32.mrb[0].mxu0
    %1412 = vmatprep.mubr.f32.mxu0 0.0
    %1413 = vmatmul.mubr.f32.gmra.mrb[0].mxu0 %v1341
    %v1414 = vpop.f32.mrb[0].mxu0
    %v1415 = vadd.f32 %v1335, %v1414
    %v1416 = vpop.f32.mrb[0].mxu0
    %1417 = vdwg.mxu0
    %1418 = vmatprep.subr.mxu0 0.0
    %1419 = vmatpush1.msra.mxu0 %v1320
    %1420 = vmatprep.subr.mxu0 0.0
    %1421 = vmatpush1.msra.mxu0 %v1321
    %1422 = vmatprep.subr.mxu0 0.0
    %1423 = vmatpush1.msra.mxu0 %v1322
    %1424 = vmatprep.subr.mxu0 0.0
    %1425 = vmatpush1.msra.mxu0 %v1323
    %1426 = vmatprep.subr.mxu0 0.0
    %1427 = vmatpush1.msra.mxu0 0.0
    %1428 = vmatprep.subr.mxu0 0.0
    %1429 = vmatpush1.msra.mxu0 0.0
    %1430 = vmatprep.subr.mxu0 0.0
    %1431 = vmatpush1.msra.mxu0 0.0
    %1432 = vmatprep.subr.mxu0 0.0
    %1433 = vmatpush1.msra.mxu0 0.0
    %1434 = vmatprep.subr.mxu0 0.0
    %1435 = vmatpush1.msra.mxu0 0.0
    %1436 = vmatprep.subr.mxu0 0.0
    %1437 = vmatpush1.msra.mxu0 0.0
    %1438 = vmatprep.subr.mxu0 0.0
    %1439 = vmatpush1.msra.mxu0 0.0
    %1440 = vmatprep.subr.mxu0 0.0
    %1441 = vmatpush1.msra.mxu0 0.0
    %1442 = vmatprep.subr.mxu0 0.0
    %1443 = vmatpush1.msra.mxu0 0.0
    %1444 = vmatprep.subr.mxu0 0.0
    %1445 = vmatpush1.msra.mxu0 0.0
    %1446 = vmatprep.subr.mxu0 0.0
    %1447 = vmatpush1.msra.mxu0 0.0
    %1448 = vmatprep.subr.mxu0 0.0
    %1449 = vmatpush1.msra.mxu0 0.0
    %1450 = vmatprep.subr.mxu0 0.0
    %1451 = vmatpush1.msra.mxu0 0.0
    %1452 = vmatprep.subr.mxu0 0.0
    %1453 = vmatpush1.msra.mxu0 0.0
    %1454 = vmatprep.subr.mxu0 0.0
    %1455 = vmatpush1.msra.mxu0 0.0
    %1456 = vmatprep.subr.mxu0 0.0
    %1457 = vmatpush1.msra.mxu0 0.0
    %1458 = vmatprep.subr.mxu0 0.0
    %1459 = vmatpush1.msra.mxu0 0.0
    %1460 = vmatprep.subr.mxu0 0.0
    %1461 = vmatpush1.msra.mxu0 0.0
    %1462 = vmatprep.subr.mxu0 0.0
    %1463 = vmatpush1.msra.mxu0 0.0
    %1464 = vmatprep.subr.mxu0 0.0
    %1465 = vmatpush1.msra.mxu0 0.0
    %1466 = vmatprep.subr.mxu0 0.0
    %1467 = vmatpush1.msra.mxu0 0.0
    %1468 = vmatprep.subr.mxu0 0.0
    %1469 = vmatpush1.msra.mxu0 0.0
    %1470 = vmatprep.subr.mxu0 0.0
    %1471 = vmatpush1.msra.mxu0 0.0
    %1472 = vmatprep.subr.mxu0 0.0
    %1473 = vmatpush1.msra.mxu0 0.0
    %1474 = vmatprep.subr.mxu0 0.0
    %1475 = vmatpush1.msra.mxu0 0.0
    %1476 = vmatprep.subr.mxu0 0.0
    %1477 = vmatpush1.msra.mxu0 0.0
    %1478 = vmatprep.subr.mxu0 0.0
    %1479 = vmatpush1.msra.mxu0 0.0
    %1480 = vmatprep.subr.mxu0 0.0
    %1481 = vmatpush1.msra.mxu0 0.0
    %1482 = vmatprep.mubr.f32.mxu0 0.0
    %1483 = vmatmul.mubr.f32.gmra.mrb[0].mxu0 %v443
    %v1484 = vpop.f32.mrb[0].mxu0
    %v1485 = vadd.f32 0.0, %v1484
    %v1486 = vpop.f32.mrb[0].mxu0
    %1487 = vdwg.mxu0
    %v1488 = vadd.f32 %v1410, %v1485
    %v1489 = vsub.f32 0.0, %v1488
    %v1490 = vmul.f32 %v1489, 1.442695
    %v1491 = vpow.pop %v1490
    %v1492 = vadd.f32 %v1491, 1.0
    %v1493 = vrcp.pop %v1492
    %v1494 = vmul.f32 1.0, %v1493
    %v1495 = vtanh.pop %v1488
    %v1496 = vmul.f32 %v1494, 0.0
    %1498 = vrot.lane.b32.xlu0 %v1495, 64
    %v1499 = vpop.permute.xlu0 %1498
    %v1501 = vmul.f32 %v1494, %v1499
    %1503 = vrot.lane.b32.xlu0 %v1501, 32
    %v1504 = vpop.permute.xlu0 %1503
    %v1506 = vadd.f32 %v1496, %v1504
    %v1507 = vtanh.pop %v1506
    %1509 = vrot.lane.b32.xlu0 %v1507, 64
    %v1510 = vpop.permute.xlu0 %1509
    %v1512 = vmul.f32 %v1494, %v1510
    %1514 = vrot.lane.b32.xlu0 %v1512, 32
    %v1515 = vpop.permute.xlu0 %1514
    %vm1517 = vcmask 253952
    %1518 = vst.msk [vmem:[#allocation3] sm:$0x1] %vm1517, %v1515
    %vm1519 = vcmask 254977
    %1520 = vst.msk [vmem:[#allocation3 + $0x7] sm:$0x2] %vm1519, %v1515
    %v1521 = vsel %vm262, %v1515, 0
    %1523 = vmatprep.subr.mxu0 0.0
    %1524 = vmatpush1.msra.mxu0 %v1320
    %1525 = vmatprep.subr.mxu0 0.0
    %1526 = vmatpush1.msra.mxu0 %v1321
    %1527 = vmatprep.subr.mxu0 0.0
    %1528 = vmatpush1.msra.mxu0 %v1322
    %1529 = vmatprep.subr.mxu0 0.0
    %1530 = vmatpush1.msra.mxu0 %v1323
    %1531 = vmatprep.subr.mxu0 0.0
    %1532 = vmatpush1.msra.mxu0 0.0
    %1533 = vmatprep.subr.mxu0 0.0
    %1534 = vmatpush1.msra.mxu0 0.0
    %1535 = vmatprep.subr.mxu0 0.0
    %1536 = vmatpush1.msra.mxu0 0.0
    %1537 = vmatprep.subr.mxu0 0.0
    %1538 = vmatpush1.msra.mxu0 0.0
    %1539 = vmatprep.subr.mxu0 0.0
    %1540 = vmatpush1.msra.mxu0 0.0
    %1541 = vmatprep.subr.mxu0 0.0
    %1542 = vmatpush1.msra.mxu0 0.0
    %1543 = vmatprep.subr.mxu0 0.0
    %1544 = vmatpush1.msra.mxu0 0.0
    %1545 = vmatprep.subr.mxu0 0.0
    %1546 = vmatpush1.msra.mxu0 0.0
    %1547 = vmatprep.subr.mxu0 0.0
    %1548 = vmatpush1.msra.mxu0 0.0
    %1549 = vmatprep.subr.mxu0 0.0
    %1550 = vmatpush1.msra.mxu0 0.0
    %1551 = vmatprep.subr.mxu0 0.0
    %1552 = vmatpush1.msra.mxu0 0.0
    %1553 = vmatprep.subr.mxu0 0.0
    %1554 = vmatpush1.msra.mxu0 0.0
    %1555 = vmatprep.subr.mxu0 0.0
    %1556 = vmatpush1.msra.mxu0 0.0
    %1557 = vmatprep.subr.mxu0 0.0
    %1558 = vmatpush1.msra.mxu0 0.0
    %1559 = vmatprep.subr.mxu0 0.0
    %1560 = vmatpush1.msra.mxu0 0.0
    %1561 = vmatprep.subr.mxu0 0.0
    %1562 = vmatpush1.msra.mxu0 0.0
    %1563 = vmatprep.subr.mxu0 0.0
    %1564 = vmatpush1.msra.mxu0 0.0
    %1565 = vmatprep.subr.mxu0 0.0
    %1566 = vmatpush1.msra.mxu0 0.0
    %1567 = vmatprep.subr.mxu0 0.0
    %1568 = vmatpush1.msra.mxu0 0.0
    %1569 = vmatprep.subr.mxu0 0.0
    %1570 = vmatpush1.msra.mxu0 0.0
    %1571 = vmatprep.subr.mxu0 0.0
    %1572 = vmatpush1.msra.mxu0 0.0
    %1573 = vmatprep.subr.mxu0 0.0
    %1574 = vmatpush1.msra.mxu0 0.0
    %1575 = vmatprep.subr.mxu0 0.0
    %1576 = vmatpush1.msra.mxu0 0.0
    %1577 = vmatprep.subr.mxu0 0.0
    %1578 = vmatpush1.msra.mxu0 0.0
    %1579 = vmatprep.subr.mxu0 0.0
    %1580 = vmatpush1.msra.mxu0 0.0
    %1581 = vmatprep.subr.mxu0 0.0
    %1582 = vmatpush1.msra.mxu0 0.0
    %1583 = vmatprep.subr.mxu0 0.0
    %1584 = vmatpush1.msra.mxu0 0.0
    %1585 = vmatprep.subr.mxu0 0.0
    %1586 = vmatpush1.msra.mxu0 0.0
    %1587 = vmatprep.mubr.f32.mxu0 0.0
    %1588 = vmatmul.mubr.f32.gmra.mrb[0].mxu0 %v1521
    %v1589 = vpop.f32.mrb[0].mxu0
    %v1590 = vadd.f32 0.0, %v1589
    %v1591 = vpop.f32.mrb[0].mxu0
    %1592 = vdwg.mxu0
    %v1594 = vrot.slane %v1590, 6
    %v1596 = vadd.f32 %v1410, %v1594
    %v1597 = vsub.f32 0.0, %v1596
    %v1598 = vmul.f32 %v1597, 1.442695
    %v1599 = vpow.pop %v1598
    %v1600 = vadd.f32 %v1599, 1.0
    %v1601 = vrcp.pop %v1600
    %v1602 = vmul.f32 1.0, %v1601
    %v1603 = vtanh.pop %v1596
    %v1605 = vrot.slane %v1506, 6
    %v1607 = vmul.f32 %v1602, %v1605
    %1609 = vrot.lane.b32.xlu0 %v1603, 64
    %v1610 = vpop.permute.xlu0 %1609
    %v1612 = vmul.f32 %v1602, %v1610
    %1614 = vrot.lane.b32.xlu0 %v1612, 32
    %v1615 = vpop.permute.xlu0 %1614
    %v1617 = vadd.f32 %v1607, %v1615
    %v1618 = vtanh.pop %v1617
    %1620 = vrot.lane.b32.xlu0 %v1618, 64
    %v1621 = vpop.permute.xlu0 %1620
    %v1623 = vmul.f32 %v1602, %v1621
    %1625 = vrot.lane.b32.xlu0 %v1623, 32
    %v1626 = vpop.permute.xlu0 %1625
    %vm1628 = vcmask 256002
    %1629 = vst.msk [vmem:[#allocation3 - $0x1] sm:$0x4] %vm1628, %v1626
    %vm1630 = vcmask 257027
    %1631 = vst.msk [vmem:[#allocation3 + $0x6] sm:$0x8] %vm1630, %v1626
    %v1632 = vrot.slane %v1623, 2
    %1633 = vrot.lane.b32.xlu0 %v1632, 32
    %v1634 = vpop.permute.xlu0 %1633
    %v1635 = vsel %vm262, %v1634, 0
    %1637 = vmatprep.subr.mxu0 0.0
    %1638 = vmatpush1.msra.mxu0 %v1320
    %1639 = vmatprep.subr.mxu0 0.0
    %1640 = vmatpush1.msra.mxu0 %v1321
    %1641 = vmatprep.subr.mxu0 0.0
    %1642 = vmatpush1.msra.mxu0 %v1322
    %1643 = vmatprep.subr.mxu0 0.0
    %1644 = vmatpush1.msra.mxu0 %v1323
    %1645 = vmatprep.subr.mxu0 0.0
    %1646 = vmatpush1.msra.mxu0 0.0
    %1647 = vmatprep.subr.mxu0 0.0
    %1648 = vmatpush1.msra.mxu0 0.0
    %1649 = vmatprep.subr.mxu0 0.0
    %1650 = vmatpush1.msra.mxu0 0.0
    %1651 = vmatprep.subr.mxu0 0.0
    %1652 = vmatpush1.msra.mxu0 0.0
    %1653 = vmatprep.subr.mxu0 0.0
    %1654 = vmatpush1.msra.mxu0 0.0
    %1655 = vmatprep.subr.mxu0 0.0
    %1656 = vmatpush1.msra.mxu0 0.0
    %1657 = vmatprep.subr.mxu0 0.0
    %1658 = vmatpush1.msra.mxu0 0.0
    %1659 = vmatprep.subr.mxu0 0.0
    %1660 = vmatpush1.msra.mxu0 0.0
    %1661 = vmatprep.subr.mxu0 0.0
    %1662 = vmatpush1.msra.mxu0 0.0
    %1663 = vmatprep.subr.mxu0 0.0
    %1664 = vmatpush1.msra.mxu0 0.0
    %1665 = vmatprep.subr.mxu0 0.0
    %1666 = vmatpush1.msra.mxu0 0.0
    %1667 = vmatprep.subr.mxu0 0.0
    %1668 = vmatpush1.msra.mxu0 0.0
    %1669 = vmatprep.subr.mxu0 0.0
    %1670 = vmatpush1.msra.mxu0 0.0
    %1671 = vmatprep.subr.mxu0 0.0
    %1672 = vmatpush1.msra.mxu0 0.0
    %1673 = vmatprep.subr.mxu0 0.0
    %1674 = vmatpush1.msra.mxu0 0.0
    %1675 = vmatprep.subr.mxu0 0.0
    %1676 = vmatpush1.msra.mxu0 0.0
    %1677 = vmatprep.subr.mxu0 0.0
    %1678 = vmatpush1.msra.mxu0 0.0
    %1679 = vmatprep.subr.mxu0 0.0
    %1680 = vmatpush1.msra.mxu0 0.0
    %1681 = vmatprep.subr.mxu0 0.0
    %1682 = vmatpush1.msra.mxu0 0.0
    %1683 = vmatprep.subr.mxu0 0.0
    %1684 = vmatpush1.msra.mxu0 0.0
    %1685 = vmatprep.subr.mxu0 0.0
    %1686 = vmatpush1.msra.mxu0 0.0
    %1687 = vmatprep.subr.mxu0 0.0
    %1688 = vmatpush1.msra.mxu0 0.0
    %1689 = vmatprep.subr.mxu0 0.0
    %1690 = vmatpush1.msra.mxu0 0.0
    %1691 = vmatprep.subr.mxu0 0.0
    %1692 = vmatpush1.msra.mxu0 0.0
    %1693 = vmatprep.subr.mxu0 0.0
    %1694 = vmatpush1.msra.mxu0 0.0
    %1695 = vmatprep.subr.mxu0 0.0
    %1696 = vmatpush1.msra.mxu0 0.0
    %1697 = vmatprep.subr.mxu0 0.0
    %1698 = vmatpush1.msra.mxu0 0.0
    %1699 = vmatprep.subr.mxu0 0.0
    %1700 = vmatpush1.msra.mxu0 0.0
    %1701 = vmatprep.mubr.f32.mxu0 0.0
    %1702 = vmatmul.mubr.f32.gmra.mrb[0].mxu0 %v1635
    %v1703 = vpop.f32.mrb[0].mxu0
    %v1704 = vadd.f32 0.0, %v1703
    %v1705 = vpop.f32.mrb[0].mxu0
    %1706 = vdwg.mxu0
    %v1708 = vrot.slane %v1704, 4
    %v1710 = vadd.f32 %v1410, %v1708
    %v1711 = vsub.f32 0.0, %v1710
    %v1712 = vmul.f32 %v1711, 1.442695
    %v1713 = vpow.pop %v1712
    %v1714 = vadd.f32 %v1713, 1.0
    %v1715 = vrcp.pop %v1714
    %v1716 = vmul.f32 1.0, %v1715
    %v1717 = vtanh.pop %v1710
    %v1719 = vrot.slane %v1617, 6
    %v1721 = vmul.f32 %v1716, %v1719
    %1723 = vrot.lane.b32.xlu0 %v1717, 64
    %v1724 = vpop.permute.xlu0 %1723
    %v1726 = vmul.f32 %v1716, %v1724
    %1728 = vrot.lane.b32.xlu0 %v1726, 32
    %v1729 = vpop.permute.xlu0 %1728
    %v1731 = vadd.f32 %v1721, %v1729
    %v1732 = vtanh.pop %v1731
    %1734 = vrot.lane.b32.xlu0 %v1732, 64
    %v1735 = vpop.permute.xlu0 %1734
    %v1737 = vmul.f32 %v1716, %v1735
    %1739 = vrot.lane.b32.xlu0 %v1737, 32
    %v1740 = vpop.permute.xlu0 %1739
    %vm1742 = vcmask 258052
    %1743 = vst.msk [vmem:[#allocation3 - $0x2] sm:$0x10] %vm1742, %v1740
    %vm1744 = vcmask 259077
    %1745 = vst.msk [vmem:[#allocation3 + $0x5] sm:$0x20] %vm1744, %v1740
    %v1746 = vrot.slane %v1737, 4
    %1747 = vrot.lane.b32.xlu0 %v1746, 32
    %v1748 = vpop.permute.xlu0 %1747
    %v1749 = vsel %vm262, %v1748, 0
    %1751 = vmatprep.subr.mxu0 0.0
    %1752 = vmatpush1.msra.mxu0 %v1320
    %1753 = vmatprep.subr.mxu0 0.0
    %1754 = vmatpush1.msra.mxu0 %v1321
    %1755 = vmatprep.subr.mxu0 0.0
    %1756 = vmatpush1.msra.mxu0 %v1322
    %1757 = vmatprep.subr.mxu0 0.0
    %1758 = vmatpush1.msra.mxu0 %v1323
    %1759 = vmatprep.subr.mxu0 0.0
    %1760 = vmatpush1.msra.mxu0 0.0
    %1761 = vmatprep.subr.mxu0 0.0
    %1762 = vmatpush1.msra.mxu0 0.0
    %1763 = vmatprep.subr.mxu0 0.0
    %1764 = vmatpush1.msra.mxu0 0.0
    %1765 = vmatprep.subr.mxu0 0.0
    %1766 = vmatpush1.msra.mxu0 0.0
    %1767 = vmatprep.subr.mxu0 0.0
    %1768 = vmatpush1.msra.mxu0 0.0
    %1769 = vmatprep.subr.mxu0 0.0
    %1770 = vmatpush1.msra.mxu0 0.0
    %1771 = vmatprep.subr.mxu0 0.0
    %1772 = vmatpush1.msra.mxu0 0.0
    %1773 = vmatprep.subr.mxu0 0.0
    %1774 = vmatpush1.msra.mxu0 0.0
    %1775 = vmatprep.subr.mxu0 0.0
    %1776 = vmatpush1.msra.mxu0 0.0
    %1777 = vmatprep.subr.mxu0 0.0
    %1778 = vmatpush1.msra.mxu0 0.0
    %1779 = vmatprep.subr.mxu0 0.0
    %1780 = vmatpush1.msra.mxu0 0.0
    %1781 = vmatprep.subr.mxu0 0.0
    %1782 = vmatpush1.msra.mxu0 0.0
    %1783 = vmatprep.subr.mxu0 0.0
    %1784 = vmatpush1.msra.mxu0 0.0
    %1785 = vmatprep.subr.mxu0 0.0
    %1786 = vmatpush1.msra.mxu0 0.0
    %1787 = vmatprep.subr.mxu0 0.0
    %1788 = vmatpush1.msra.mxu0 0.0
    %1789 = vmatprep.subr.mxu0 0.0
    %1790 = vmatpush1.msra.mxu0 0.0
    %1791 = vmatprep.subr.mxu0 0.0
    %1792 = vmatpush1.msra.mxu0 0.0
    %1793 = vmatprep.subr.mxu0 0.0
    %1794 = vmatpush1.msra.mxu0 0.0
    %1795 = vmatprep.subr.mxu0 0.0
    %1796 = vmatpush1.msra.mxu0 0.0
    %1797 = vmatprep.subr.mxu0 0.0
    %1798 = vmatpush1.msra.mxu0 0.0
    %1799 = vmatprep.subr.mxu0 0.0
    %1800 = vmatpush1.msra.mxu0 0.0
    %1801 = vmatprep.subr.mxu0 0.0
    %1802 = vmatpush1.msra.mxu0 0.0
    %1803 = vmatprep.subr.mxu0 0.0
    %1804 = vmatpush1.msra.mxu0 0.0
    %1805 = vmatprep.subr.mxu0 0.0
    %1806 = vmatpush1.msra.mxu0 0.0
    %1807 = vmatprep.subr.mxu0 0.0
    %1808 = vmatpush1.msra.mxu0 0.0
    %1809 = vmatprep.subr.mxu0 0.0
    %1810 = vmatpush1.msra.mxu0 0.0
    %1811 = vmatprep.subr.mxu0 0.0
    %1812 = vmatpush1.msra.mxu0 0.0
    %1813 = vmatprep.subr.mxu0 0.0
    %1814 = vmatpush1.msra.mxu0 0.0
    %1815 = vmatprep.mubr.f32.mxu0 0.0
    %1816 = vmatmul.mubr.f32.gmra.mrb[0].mxu0 %v1749
    %v1817 = vpop.f32.mrb[0].mxu0
    %v1818 = vadd.f32 0.0, %v1817
    %v1819 = vpop.f32.mrb[0].mxu0
    %1820 = vdwg.mxu0
    %v1822 = vrot.slane %v1818, 2
    %v1824 = vadd.f32 %v1410, %v1822
    %v1825 = vsub.f32 0.0, %v1824
    %v1826 = vmul.f32 %v1825, 1.442695
    %v1827 = vpow.pop %v1826
    %v1828 = vadd.f32 %v1827, 1.0
    %v1829 = vrcp.pop %v1828
    %v1830 = vmul.f32 1.0, %v1829
    %v1831 = vtanh.pop %v1824
    %v1833 = vrot.slane %v1731, 6
    %v1835 = vmul.f32 %v1830, %v1833
    %1837 = vrot.lane.b32.xlu0 %v1831, 64
    %v1838 = vpop.permute.xlu0 %1837
    %v1840 = vmul.f32 %v1830, %v1838
    %1842 = vrot.lane.b32.xlu0 %v1840, 32
    %v1843 = vpop.permute.xlu0 %1842
    %v1845 = vadd.f32 %v1835, %v1843
    %v1846 = vtanh.pop %v1845
    %1848 = vrot.lane.b32.xlu0 %v1846, 64
    %v1849 = vpop.permute.xlu0 %1848
    %v1851 = vmul.f32 %v1830, %v1849
    %1853 = vrot.lane.b32.xlu0 %v1851, 32
    %v1854 = vpop.permute.xlu0 %1853
    %vm1856 = vcmask 260102
    %1857 = vst.msk [vmem:[#allocation3 - $0x3] sm:$0x40] %vm1856, %v1854
    %vm1858 = vcmask 261127
    %1859 = vst.msk [vmem:[#allocation3 + $0x4] sm:$0x80] %vm1858, %v1854
    %v1860 = vrot.slane %v1851, 6
    %1861 = vrot.lane.b32.xlu0 %v1860, 32
    %v1862 = vpop.permute.xlu0 %1861
    %v1863 = vsel %vm262, %v1862, 0
    %1865 = vmatprep.subr.mxu0 0.0
    %1866 = vmatpush1.msra.mxu0 %v1320
    %1867 = vmatprep.subr.mxu0 0.0
    %1868 = vmatpush1.msra.mxu0 %v1321
    %1869 = vmatprep.subr.mxu0 0.0
    %1870 = vmatpush1.msra.mxu0 %v1322
    %1871 = vmatprep.subr.mxu0 0.0
    %1872 = vmatpush1.msra.mxu0 %v1323
    %1873 = vmatprep.subr.mxu0 0.0
    %1874 = vmatpush1.msra.mxu0 0.0
    %1875 = vmatprep.subr.mxu0 0.0
    %1876 = vmatpush1.msra.mxu0 0.0
    %1877 = vmatprep.subr.mxu0 0.0
    %1878 = vmatpush1.msra.mxu0 0.0
    %1879 = vmatprep.subr.mxu0 0.0
    %1880 = vmatpush1.msra.mxu0 0.0
    %1881 = vmatprep.subr.mxu0 0.0
    %1882 = vmatpush1.msra.mxu0 0.0
    %1883 = vmatprep.subr.mxu0 0.0
    %1884 = vmatpush1.msra.mxu0 0.0
    %1885 = vmatprep.subr.mxu0 0.0
    %1886 = vmatpush1.msra.mxu0 0.0
    %1887 = vmatprep.subr.mxu0 0.0
    %1888 = vmatpush1.msra.mxu0 0.0
    %1889 = vmatprep.subr.mxu0 0.0
    %1890 = vmatpush1.msra.mxu0 0.0
    %1891 = vmatprep.subr.mxu0 0.0
    %1892 = vmatpush1.msra.mxu0 0.0
    %1893 = vmatprep.subr.mxu0 0.0
    %1894 = vmatpush1.msra.mxu0 0.0
    %1895 = vmatprep.subr.mxu0 0.0
    %1896 = vmatpush1.msra.mxu0 0.0
    %1897 = vmatprep.subr.mxu0 0.0
    %1898 = vmatpush1.msra.mxu0 0.0
    %1899 = vmatprep.subr.mxu0 0.0
    %1900 = vmatpush1.msra.mxu0 0.0
    %1901 = vmatprep.subr.mxu0 0.0
    %1902 = vmatpush1.msra.mxu0 0.0
    %1903 = vmatprep.subr.mxu0 0.0
    %1904 = vmatpush1.msra.mxu0 0.0
    %1905 = vmatprep.subr.mxu0 0.0
    %1906 = vmatpush1.msra.mxu0 0.0
    %1907 = vmatprep.subr.mxu0 0.0
    %1908 = vmatpush1.msra.mxu0 0.0
    %1909 = vmatprep.subr.mxu0 0.0
    %1910 = vmatpush1.msra.mxu0 0.0
    %1911 = vmatprep.subr.mxu0 0.0
    %1912 = vmatpush1.msra.mxu0 0.0
    %1913 = vmatprep.subr.mxu0 0.0
    %1914 = vmatpush1.msra.mxu0 0.0
    %1915 = vmatprep.subr.mxu0 0.0
    %1916 = vmatpush1.msra.mxu0 0.0
    %1917 = vmatprep.subr.mxu0 0.0
    %1918 = vmatpush1.msra.mxu0 0.0
    %1919 = vmatprep.subr.mxu0 0.0
    %1920 = vmatpush1.msra.mxu0 0.0
    %1921 = vmatprep.subr.mxu0 0.0
    %1922 = vmatpush1.msra.mxu0 0.0
    %1923 = vmatprep.subr.mxu0 0.0
    %1924 = vmatpush1.msra.mxu0 0.0
    %1925 = vmatprep.subr.mxu0 0.0
    %1926 = vmatpush1.msra.mxu0 0.0
    %1927 = vmatprep.subr.mxu0 0.0
    %1928 = vmatpush1.msra.mxu0 0.0
    %1929 = vmatprep.mubr.f32.mxu0 0.0
    %1930 = vmatmul.mubr.f32.gmra.mrb[0].mxu0 %v1863
    %v1931 = vpop.f32.mrb[0].mxu0
    %v1932 = vadd.f32 0.0, %v1931
    %v1933 = vpop.f32.mrb[0].mxu0
    %1934 = vdwg.mxu0
    %v1935 = vadd.f32 %v1415, %v1932
    %v1936 = vsub.f32 0.0, %v1935
    %v1937 = vmul.f32 %v1936, 1.442695
    %v1938 = vpow.pop %v1937
    %v1939 = vadd.f32 %v1938, 1.0
    %v1940 = vrcp.pop %v1939
    %v1941 = vmul.f32 1.0, %v1940
    %v1942 = vtanh.pop %v1935
    %v1944 = vrot.slane %v1845, 6
    %v1946 = vmul.f32 %v1941, %v1944
    %1948 = vrot.lane.b32.xlu0 %v1942, 64
    %v1949 = vpop.permute.xlu0 %1948
    %v1951 = vmul.f32 %v1941, %v1949
    %1953 = vrot.lane.b32.xlu0 %v1951, 32
    %v1954 = vpop.permute.xlu0 %1953
    %v1956 = vadd.f32 %v1946, %v1954
    %v1957 = vtanh.pop %v1956
    %1959 = vrot.lane.b32.xlu0 %v1957, 64
    %v1960 = vpop.permute.xlu0 %1959
    %v1962 = vmul.f32 %v1941, %v1960
    %1964 = vrot.lane.b32.xlu0 %v1962, 32
    %v1965 = vpop.permute.xlu0 %1964
    %1967 = vst.msk [vmem:[#allocation3 + $0x4] sm:$0x1] %vm1517, %v1965
    %1968 = vst.msk [vmem:[#allocation3 + $0xb] sm:$0x2] %vm1519, %v1965
    %v1969 = vsel %vm262, %v1965, 0
    %1971 = vmatprep.subr.mxu0 0.0
    %1972 = vmatpush1.msra.mxu0 %v1320
    %1973 = vmatprep.subr.mxu0 0.0
    %1974 = vmatpush1.msra.mxu0 %v1321
    %1975 = vmatprep.subr.mxu0 0.0
    %1976 = vmatpush1.msra.mxu0 %v1322
    %1977 = vmatprep.subr.mxu0 0.0
    %1978 = vmatpush1.msra.mxu0 %v1323
    %1979 = vmatprep.subr.mxu0 0.0
    %1980 = vmatpush1.msra.mxu0 0.0
    %1981 = vmatprep.subr.mxu0 0.0
    %1982 = vmatpush1.msra.mxu0 0.0
    %1983 = vmatprep.subr.mxu0 0.0
    %1984 = vmatpush1.msra.mxu0 0.0
    %1985 = vmatprep.subr.mxu0 0.0
    %1986 = vmatpush1.msra.mxu0 0.0
    %1987 = vmatprep.subr.mxu0 0.0
    %1988 = vmatpush1.msra.mxu0 0.0
    %1989 = vmatprep.subr.mxu0 0.0
    %1990 = vmatpush1.msra.mxu0 0.0
    %1991 = vmatprep.subr.mxu0 0.0
    %1992 = vmatpush1.msra.mxu0 0.0
    %1993 = vmatprep.subr.mxu0 0.0
    %1994 = vmatpush1.msra.mxu0 0.0
    %1995 = vmatprep.subr.mxu0 0.0
    %1996 = vmatpush1.msra.mxu0 0.0
    %1997 = vmatprep.subr.mxu0 0.0
    %1998 = vmatpush1.msra.mxu0 0.0
    %1999 = vmatprep.subr.mxu0 0.0
    %2000 = vmatpush1.msra.mxu0 0.0
    %2001 = vmatprep.subr.mxu0 0.0
    %2002 = vmatpush1.msra.mxu0 0.0
    %2003 = vmatprep.subr.mxu0 0.0
    %2004 = vmatpush1.msra.mxu0 0.0
    %2005 = vmatprep.subr.mxu0 0.0
    %2006 = vmatpush1.msra.mxu0 0.0
    %2007 = vmatprep.subr.mxu0 0.0
    %2008 = vmatpush1.msra.mxu0 0.0
    %2009 = vmatprep.subr.mxu0 0.0
    %2010 = vmatpush1.msra.mxu0 0.0
    %2011 = vmatprep.subr.mxu0 0.0
    %2012 = vmatpush1.msra.mxu0 0.0
    %2013 = vmatprep.subr.mxu0 0.0
    %2014 = vmatpush1.msra.mxu0 0.0
    %2015 = vmatprep.subr.mxu0 0.0
    %2016 = vmatpush1.msra.mxu0 0.0
    %2017 = vmatprep.subr.mxu0 0.0
    %2018 = vmatpush1.msra.mxu0 0.0
    %2019 = vmatprep.subr.mxu0 0.0
    %2020 = vmatpush1.msra.mxu0 0.0
    %2021 = vmatprep.subr.mxu0 0.0
    %2022 = vmatpush1.msra.mxu0 0.0
    %2023 = vmatprep.subr.mxu0 0.0
    %2024 = vmatpush1.msra.mxu0 0.0
    %2025 = vmatprep.subr.mxu0 0.0
    %2026 = vmatpush1.msra.mxu0 0.0
    %2027 = vmatprep.subr.mxu0 0.0
    %2028 = vmatpush1.msra.mxu0 0.0
    %2029 = vmatprep.subr.mxu0 0.0
    %2030 = vmatpush1.msra.mxu0 0.0
    %2031 = vmatprep.subr.mxu0 0.0
    %2032 = vmatpush1.msra.mxu0 0.0
    %2033 = vmatprep.subr.mxu0 0.0
    %2034 = vmatpush1.msra.mxu0 0.0
    %2035 = vmatprep.mubr.f32.mxu0 0.0
    %2036 = vmatmul.mubr.f32.gmra.mrb[0].mxu0 %v1969
    %v2037 = vpop.f32.mrb[0].mxu0
    %v2038 = vadd.f32 0.0, %v2037
    %v2039 = vpop.f32.mrb[0].mxu0
    %2040 = vdwg.mxu0
    %v2042 = vrot.slane %v2038, 6
    %v2044 = vadd.f32 %v1415, %v2042
    %v2045 = vsub.f32 0.0, %v2044
    %v2046 = vmul.f32 %v2045, 1.442695
    %v2047 = vpow.pop %v2046
    %v2048 = vadd.f32 %v2047, 1.0
    %v2049 = vrcp.pop %v2048
    %v2050 = vmul.f32 1.0, %v2049
    %v2051 = vtanh.pop %v2044
    %v2053 = vrot.slane %v1956, 6
    %v2055 = vmul.f32 %v2050, %v2053
    %2057 = vrot.lane.b32.xlu0 %v2051, 64
    %v2058 = vpop.permute.xlu0 %2057
    %v2060 = vmul.f32 %v2050, %v2058
    %2062 = vrot.lane.b32.xlu0 %v2060, 32
    %v2063 = vpop.permute.xlu0 %2062
    %v2065 = vadd.f32 %v2055, %v2063
    %v2066 = vtanh.pop %v2065
    %2068 = vrot.lane.b32.xlu0 %v2066, 64
    %v2069 = vpop.permute.xlu0 %2068
    %v2071 = vmul.f32 %v2050, %v2069
    %2073 = vrot.lane.b32.xlu0 %v2071, 32
    %v2074 = vpop.permute.xlu0 %2073
    %2076 = vst.msk [vmem:[#allocation3 + $0x3] sm:$0x4] %vm1628, %v2074
    %2077 = vst.msk [vmem:[#allocation3 + $0xa] sm:$0x8] %vm1630, %v2074
    %v2078 = vrot.slane %v2071, 2
    %2079 = vrot.lane.b32.xlu0 %v2078, 32
    %v2080 = vpop.permute.xlu0 %2079
    %v2081 = vsel %vm262, %v2080, 0
    %2083 = vmatprep.subr.mxu0 0.0
    %2084 = vmatpush1.msra.mxu0 %v1320
    %2085 = vmatprep.subr.mxu0 0.0
    %2086 = vmatpush1.msra.mxu0 %v1321
    %2087 = vmatprep.subr.mxu0 0.0
    %2088 = vmatpush1.msra.mxu0 %v1322
    %2089 = vmatprep.subr.mxu0 0.0
    %2090 = vmatpush1.msra.mxu0 %v1323
    %2091 = vmatprep.subr.mxu0 0.0
    %2092 = vmatpush1.msra.mxu0 0.0
    %2093 = vmatprep.subr.mxu0 0.0
    %2094 = vmatpush1.msra.mxu0 0.0
    %2095 = vmatprep.subr.mxu0 0.0
    %2096 = vmatpush1.msra.mxu0 0.0
    %2097 = vmatprep.subr.mxu0 0.0
    %2098 = vmatpush1.msra.mxu0 0.0
    %2099 = vmatprep.subr.mxu0 0.0
    %2100 = vmatpush1.msra.mxu0 0.0
    %2101 = vmatprep.subr.mxu0 0.0
    %2102 = vmatpush1.msra.mxu0 0.0
    %2103 = vmatprep.subr.mxu0 0.0
    %2104 = vmatpush1.msra.mxu0 0.0
    %2105 = vmatprep.subr.mxu0 0.0
    %2106 = vmatpush1.msra.mxu0 0.0
    %2107 = vmatprep.subr.mxu0 0.0
    %2108 = vmatpush1.msra.mxu0 0.0
    %2109 = vmatprep.subr.mxu0 0.0
    %2110 = vmatpush1.msra.mxu0 0.0
    %2111 = vmatprep.subr.mxu0 0.0
    %2112 = vmatpush1.msra.mxu0 0.0
    %2113 = vmatprep.subr.mxu0 0.0
    %2114 = vmatpush1.msra.mxu0 0.0
    %2115 = vmatprep.subr.mxu0 0.0
    %2116 = vmatpush1.msra.mxu0 0.0
    %2117 = vmatprep.subr.mxu0 0.0
    %2118 = vmatpush1.msra.mxu0 0.0
    %2119 = vmatprep.subr.mxu0 0.0
    %2120 = vmatpush1.msra.mxu0 0.0
    %2121 = vmatprep.subr.mxu0 0.0
    %2122 = vmatpush1.msra.mxu0 0.0
    %2123 = vmatprep.subr.mxu0 0.0
    %2124 = vmatpush1.msra.mxu0 0.0
    %2125 = vmatprep.subr.mxu0 0.0
    %2126 = vmatpush1.msra.mxu0 0.0
    %2127 = vmatprep.subr.mxu0 0.0
    %2128 = vmatpush1.msra.mxu0 0.0
    %2129 = vmatprep.subr.mxu0 0.0
    %2130 = vmatpush1.msra.mxu0 0.0
    %2131 = vmatprep.subr.mxu0 0.0
    %2132 = vmatpush1.msra.mxu0 0.0
    %2133 = vmatprep.subr.mxu0 0.0
    %2134 = vmatpush1.msra.mxu0 0.0
    %2135 = vmatprep.subr.mxu0 0.0
    %2136 = vmatpush1.msra.mxu0 0.0
    %2137 = vmatprep.subr.mxu0 0.0
    %2138 = vmatpush1.msra.mxu0 0.0
    %2139 = vmatprep.subr.mxu0 0.0
    %2140 = vmatpush1.msra.mxu0 0.0
    %2141 = vmatprep.subr.mxu0 0.0
    %2142 = vmatpush1.msra.mxu0 0.0
    %2143 = vmatprep.subr.mxu0 0.0
    %2144 = vmatpush1.msra.mxu0 0.0
    %2145 = vmatprep.subr.mxu0 0.0
    %2146 = vmatpush1.msra.mxu0 0.0
    %2147 = vmatprep.mubr.f32.mxu0 0.0
    %2148 = vmatmul.mubr.f32.gmra.mrb[0].mxu0 %v2081
    %v2149 = vpop.f32.mrb[0].mxu0
    %v2150 = vadd.f32 0.0, %v2149
    %v2151 = vpop.f32.mrb[0].mxu0
    %2152 = vdwg.mxu0
    %v2154 = vrot.slane %v2150, 4
    %v2156 = vadd.f32 %v1415, %v2154
    %v2157 = vsub.f32 0.0, %v2156
    %v2158 = vmul.f32 %v2157, 1.442695
    %v2159 = vpow.pop %v2158
    %v2160 = vadd.f32 %v2159, 1.0
    %v2161 = vrcp.pop %v2160
    %v2162 = vmul.f32 1.0, %v2161
    %v2163 = vtanh.pop %v2156
    %v2165 = vrot.slane %v2065, 6
    %v2167 = vmul.f32 %v2162, %v2165
    %2169 = vrot.lane.b32.xlu0 %v2163, 64
    %v2170 = vpop.permute.xlu0 %2169
    %v2172 = vmul.f32 %v2162, %v2170
    %2174 = vrot.lane.b32.xlu0 %v2172, 32
    %v2175 = vpop.permute.xlu0 %2174
    %v2177 = vadd.f32 %v2167, %v2175
    %v2178 = vtanh.pop %v2177
    %2180 = vrot.lane.b32.xlu0 %v2178, 64
    %v2181 = vpop.permute.xlu0 %2180
    %v2183 = vmul.f32 %v2162, %v2181
    %2185 = vrot.lane.b32.xlu0 %v2183, 32
    %v2186 = vpop.permute.xlu0 %2185
    %2188 = vst.msk [vmem:[#allocation3 + $0x2] sm:$0x10] %vm1742, %v2186
    %2189 = vst.msk [vmem:[#allocation3 + $0x9] sm:$0x20] %vm1744, %v2186
    %v2190 = vrot.slane %v2183, 4
    %2191 = vrot.lane.b32.xlu0 %v2190, 32
    %v2192 = vpop.permute.xlu0 %2191
    %v2193 = vsel %vm262, %v2192, 0
    %2195 = vmatprep.subr.mxu0 0.0
    %2196 = vmatpush1.msra.mxu0 %v1320
    %2197 = vmatprep.subr.mxu0 0.0
    %2198 = vmatpush1.msra.mxu0 %v1321
    %2199 = vmatprep.subr.mxu0 0.0
    %2200 = vmatpush1.msra.mxu0 %v1322
    %2201 = vmatprep.subr.mxu0 0.0
    %2202 = vmatpush1.msra.mxu0 %v1323
    %2203 = vmatprep.subr.mxu0 0.0
    %2204 = vmatpush1.msra.mxu0 0.0
    %2205 = vmatprep.subr.mxu0 0.0
    %2206 = vmatpush1.msra.mxu0 0.0
    %2207 = vmatprep.subr.mxu0 0.0
    %2208 = vmatpush1.msra.mxu0 0.0
    %2209 = vmatprep.subr.mxu0 0.0
    %2210 = vmatpush1.msra.mxu0 0.0
    %2211 = vmatprep.subr.mxu0 0.0
    %2212 = vmatpush1.msra.mxu0 0.0
    %2213 = vmatprep.subr.mxu0 0.0
    %2214 = vmatpush1.msra.mxu0 0.0
    %2215 = vmatprep.subr.mxu0 0.0
    %2216 = vmatpush1.msra.mxu0 0.0
    %2217 = vmatprep.subr.mxu0 0.0
    %2218 = vmatpush1.msra.mxu0 0.0
    %2219 = vmatprep.subr.mxu0 0.0
    %2220 = vmatpush1.msra.mxu0 0.0
    %2221 = vmatprep.subr.mxu0 0.0
    %2222 = vmatpush1.msra.mxu0 0.0
    %2223 = vmatprep.subr.mxu0 0.0
    %2224 = vmatpush1.msra.mxu0 0.0
    %2225 = vmatprep.subr.mxu0 0.0
    %2226 = vmatpush1.msra.mxu0 0.0
    %2227 = vmatprep.subr.mxu0 0.0
    %2228 = vmatpush1.msra.mxu0 0.0
    %2229 = vmatprep.subr.mxu0 0.0
    %2230 = vmatpush1.msra.mxu0 0.0
    %2231 = vmatprep.subr.mxu0 0.0
    %2232 = vmatpush1.msra.mxu0 0.0
    %2233 = vmatprep.subr.mxu0 0.0
    %2234 = vmatpush1.msra.mxu0 0.0
    %2235 = vmatprep.subr.mxu0 0.0
    %2236 = vmatpush1.msra.mxu0 0.0
    %2237 = vmatprep.subr.mxu0 0.0
    %2238 = vmatpush1.msra.mxu0 0.0
    %2239 = vmatprep.subr.mxu0 0.0
    %2240 = vmatpush1.msra.mxu0 0.0
    %2241 = vmatprep.subr.mxu0 0.0
    %2242 = vmatpush1.msra.mxu0 0.0
    %2243 = vmatprep.subr.mxu0 0.0
    %2244 = vmatpush1.msra.mxu0 0.0
    %2245 = vmatprep.subr.mxu0 0.0
    %2246 = vmatpush1.msra.mxu0 0.0
    %2247 = vmatprep.subr.mxu0 0.0
    %2248 = vmatpush1.msra.mxu0 0.0
    %2249 = vmatprep.subr.mxu0 0.0
    %2250 = vmatpush1.msra.mxu0 0.0
    %2251 = vmatprep.subr.mxu0 0.0
    %2252 = vmatpush1.msra.mxu0 0.0
    %2253 = vmatprep.subr.mxu0 0.0
    %2254 = vmatpush1.msra.mxu0 0.0
    %2255 = vmatprep.subr.mxu0 0.0
    %2256 = vmatpush1.msra.mxu0 0.0
    %2257 = vmatprep.subr.mxu0 0.0
    %2258 = vmatpush1.msra.mxu0 0.0
    %2259 = vmatprep.mubr.f32.mxu0 0.0
    %2260 = vmatmul.mubr.f32.gmra.mrb[0].mxu0 %v2193
    %v2261 = vpop.f32.mrb[0].mxu0
    %v2262 = vadd.f32 0.0, %v2261
    %v2263 = vpop.f32.mrb[0].mxu0
    %2264 = vdwg.mxu0
    %v2266 = vrot.slane %v2262, 2
    %v2268 = vadd.f32 %v1415, %v2266
    %v2269 = vsub.f32 0.0, %v2268
    %v2270 = vmul.f32 %v2269, 1.442695
    %v2271 = vpow.pop %v2270
    %v2272 = vadd.f32 %v2271, 1.0
    %v2273 = vrcp.pop %v2272
    %v2274 = vmul.f32 1.0, %v2273
    %v2275 = vtanh.pop %v2268
    %v2277 = vrot.slane %v2177, 6
    %v2279 = vmul.f32 %v2274, %v2277
    %2281 = vrot.lane.b32.xlu0 %v2275, 64
    %v2282 = vpop.permute.xlu0 %2281
    %v2284 = vmul.f32 %v2274, %v2282
    %2286 = vrot.lane.b32.xlu0 %v2284, 32
    %v2287 = vpop.permute.xlu0 %2286
    %v2289 = vadd.f32 %v2279, %v2287
    %v2290 = vtanh.pop %v2289
    %2292 = vrot.lane.b32.xlu0 %v2290, 64
    %v2293 = vpop.permute.xlu0 %2292
    %v2295 = vmul.f32 %v2274, %v2293
    %2297 = vrot.lane.b32.xlu0 %v2295, 32
    %v2298 = vpop.permute.xlu0 %2297
    %2300 = vst.msk [vmem:[#allocation3 + $0x1] sm:$0x40] %vm1856, %v2298
    %2301 = vst.msk [vmem:[#allocation3 + $0x8] sm:$0x80] %vm1858, %v2298
    %v2302 = vld [vmem:[#allocation3] sm:$0xff]
    %v2303 = vld [vmem:[#allocation3 + $0x8] sm:$0xff]
    %v2304 = vld [vmem:[%s8] sm:$0xff]
    %v2305 = vld [vmem:[%s8 + $0x8] sm:$0xff]
    %v2306 = vld [vmem:[%s8 + $0x10] sm:$0xff]
    %v2307 = vld [vmem:[%s8 + $0x18] sm:$0xff]
    %v2308 = vld [vmem:[#allocation14] sm:$0x1]
    %v2310 = vlaneseq
    %v2311 = vshrl.u32 %v2310, 7
    %v2312 = vsub.s32 0, %v2311
    %v2313 = vrot.slane %v2308, %v2312
    %v2316 = vsel %vm262, %v2302, 0
    %v2319 = vsel %vm262, %v2303, 0
    %2321 = vmatprep.subr.mxu0 0.0
    %2322 = vmatpush1.msra.mxu0 %v2304
    %2323 = vmatprep.subr.mxu0 0.0
    %2324 = vmatpush1.msra.mxu0 %v2305
    %2325 = vmatprep.subr.mxu0 0.0
    %2326 = vmatpush1.msra.mxu0 %v2306
    %2327 = vmatprep.subr.mxu0 0.0
    %2328 = vmatpush1.msra.mxu0 %v2307
    %2329 = vmatprep.subr.mxu0 0.0
    %2330 = vmatpush1.msra.mxu0 0.0
    %2331 = vmatprep.subr.mxu0 0.0
    %2332 = vmatpush1.msra.mxu0 0.0
    %2333 = vmatprep.subr.mxu0 0.0
    %2334 = vmatpush1.msra.mxu0 0.0
    %2335 = vmatprep.subr.mxu0 0.0
    %2336 = vmatpush1.msra.mxu0 0.0
    %2337 = vmatprep.subr.mxu0 0.0
    %2338 = vmatpush1.msra.mxu0 0.0
    %2339 = vmatprep.subr.mxu0 0.0
    %2340 = vmatpush1.msra.mxu0 0.0
    %2341 = vmatprep.subr.mxu0 0.0
    %2342 = vmatpush1.msra.mxu0 0.0
    %2343 = vmatprep.subr.mxu0 0.0
    %2344 = vmatpush1.msra.mxu0 0.0
    %2345 = vmatprep.subr.mxu0 0.0
    %2346 = vmatpush1.msra.mxu0 0.0
    %2347 = vmatprep.subr.mxu0 0.0
    %2348 = vmatpush1.msra.mxu0 0.0
    %2349 = vmatprep.subr.mxu0 0.0
    %2350 = vmatpush1.msra.mxu0 0.0
    %2351 = vmatprep.subr.mxu0 0.0
    %2352 = vmatpush1.msra.mxu0 0.0
    %2353 = vmatprep.subr.mxu0 0.0
    %2354 = vmatpush1.msra.mxu0 0.0
    %2355 = vmatprep.subr.mxu0 0.0
    %2356 = vmatpush1.msra.mxu0 0.0
    %2357 = vmatprep.subr.mxu0 0.0
    %2358 = vmatpush1.msra.mxu0 0.0
    %2359 = vmatprep.subr.mxu0 0.0
    %2360 = vmatpush1.msra.mxu0 0.0
    %2361 = vmatprep.subr.mxu0 0.0
    %2362 = vmatpush1.msra.mxu0 0.0
    %2363 = vmatprep.subr.mxu0 0.0
    %2364 = vmatpush1.msra.mxu0 0.0
    %2365 = vmatprep.subr.mxu0 0.0
    %2366 = vmatpush1.msra.mxu0 0.0
    %2367 = vmatprep.subr.mxu0 0.0
    %2368 = vmatpush1.msra.mxu0 0.0
    %2369 = vmatprep.subr.mxu0 0.0
    %2370 = vmatpush1.msra.mxu0 0.0
    %2371 = vmatprep.subr.mxu0 0.0
    %2372 = vmatpush1.msra.mxu0 0.0
    %2373 = vmatprep.subr.mxu0 0.0
    %2374 = vmatpush1.msra.mxu0 0.0
    %2375 = vmatprep.subr.mxu0 0.0
    %2376 = vmatpush1.msra.mxu0 0.0
    %2377 = vmatprep.subr.mxu0 0.0
    %2378 = vmatpush1.msra.mxu0 0.0
    %2379 = vmatprep.subr.mxu0 0.0
    %2380 = vmatpush1.msra.mxu0 0.0
    %2381 = vmatprep.subr.mxu0 0.0
    %2382 = vmatpush1.msra.mxu0 0.0
    %2383 = vmatprep.subr.mxu0 0.0
    %2384 = vmatpush1.msra.mxu0 0.0
    %2385 = vmatprep.mubr.f32.mxu0 0.0
    %2386 = vmatmul.mubr.f32.gmra.mrb[0].mxu0 %v2316
    %v2387 = vpop.f32.mrb[0].mxu0
    %v2388 = vadd.f32 %v2313, %v2387
    %v2389 = vpop.f32.mrb[0].mxu0
    %2390 = vmatprep.mubr.f32.mxu0 0.0
    %2391 = vmatmul.mubr.f32.gmra.mrb[0].mxu0 %v2319
    %v2392 = vpop.f32.mrb[0].mxu0
    %v2393 = vadd.f32 %v2313, %v2392
    %v2394 = vpop.f32.mrb[0].mxu0
    %2395 = vdwg.mxu0
    %v2396 = vmul.f32 %v2388, 0.35355338
    %v2397 = vmul.f32 %v2393, 0.35355338
    %2399 = vrot.lane.b32.xlu0 %v2388, 96
    %v2400 = vpop.permute.xlu0 %2399
    %v2402 = vsel %vm167, %v2396, 0
    %v2404 = vsel %vm167, %v2400, 0
    %2406 = vmatprep.subr.mxu0 0.0
    %2407 = vmatpush1.xpose.msra.mxu0 %v2404
    %2408 = vmatprep.subr.mxu0 0.0
    %2409 = vmatpush1.xpose.msra.mxu0 0.0
    %2410 = vmatprep.subr.mxu0 0.0
    %2411 = vmatpush1.xpose.msra.mxu0 0.0
    %2412 = vmatprep.subr.mxu0 0.0
    %2413 = vmatpush1.xpose.msra.mxu0 0.0
    %2414 = vmatprep.subr.mxu0 0.0
    %2415 = vmatpush1.xpose.msra.mxu0 0.0
    %2416 = vmatprep.subr.mxu0 0.0
    %2417 = vmatpush1.xpose.msra.mxu0 0.0
    %2418 = vmatprep.subr.mxu0 0.0
    %2419 = vmatpush1.xpose.msra.mxu0 0.0
    %2420 = vmatprep.subr.mxu0 0.0
    %2421 = vmatpush1.xpose.msra.mxu0 0.0
    %2422 = vmatprep.subr.mxu0 0.0
    %2423 = vmatpush1.xpose.msra.mxu0 0.0
    %2424 = vmatprep.subr.mxu0 0.0
    %2425 = vmatpush1.xpose.msra.mxu0 0.0
    %2426 = vmatprep.subr.mxu0 0.0
    %2427 = vmatpush1.xpose.msra.mxu0 0.0
    %2428 = vmatprep.subr.mxu0 0.0
    %2429 = vmatpush1.xpose.msra.mxu0 0.0
    %2430 = vmatprep.subr.mxu0 0.0
    %2431 = vmatpush1.xpose.msra.mxu0 0.0
    %2432 = vmatprep.subr.mxu0 0.0
    %2433 = vmatpush1.xpose.msra.mxu0 0.0
    %2434 = vmatprep.subr.mxu0 0.0
    %2435 = vmatpush1.xpose.msra.mxu0 0.0
    %2436 = vmatprep.subr.mxu0 0.0
    %2437 = vmatpush1.xpose.msra.mxu0 0.0
    %2438 = vmatprep.subr.mxu0 0.0
    %2439 = vmatpush1.xpose.msra.mxu0 0.0
    %2440 = vmatprep.subr.mxu0 0.0
    %2441 = vmatpush1.xpose.msra.mxu0 0.0
    %2442 = vmatprep.subr.mxu0 0.0
    %2443 = vmatpush1.xpose.msra.mxu0 0.0
    %2444 = vmatprep.subr.mxu0 0.0
    %2445 = vmatpush1.xpose.msra.mxu0 0.0
    %2446 = vmatprep.subr.mxu0 0.0
    %2447 = vmatpush1.xpose.msra.mxu0 0.0
    %2448 = vmatprep.subr.mxu0 0.0
    %2449 = vmatpush1.xpose.msra.mxu0 0.0
    %2450 = vmatprep.subr.mxu0 0.0
    %2451 = vmatpush1.xpose.msra.mxu0 0.0
    %2452 = vmatprep.subr.mxu0 0.0
    %2453 = vmatpush1.xpose.msra.mxu0 0.0
    %2454 = vmatprep.subr.mxu0 0.0
    %2455 = vmatpush1.xpose.msra.mxu0 0.0
    %2456 = vmatprep.subr.mxu0 0.0
    %2457 = vmatpush1.xpose.msra.mxu0 0.0
    %2458 = vmatprep.subr.mxu0 0.0
    %2459 = vmatpush1.xpose.msra.mxu0 0.0
    %2460 = vmatprep.subr.mxu0 0.0
    %2461 = vmatpush1.xpose.msra.mxu0 0.0
    %2462 = vmatprep.subr.mxu0 0.0
    %2463 = vmatpush1.xpose.msra.mxu0 0.0
    %2464 = vmatprep.subr.mxu0 0.0
    %2465 = vmatpush1.xpose.msra.mxu0 0.0
    %2466 = vmatprep.subr.mxu0 0.0
    %2467 = vmatpush1.xpose.msra.mxu0 0.0
    %2468 = vmatprep.subr.mxu0 0.0
    %2469 = vmatpush1.xpose.msra.mxu0 0.0
    %2470 = vmatprep.mubr.f32.mxu0 0.0
    %2471 = vmatmul.mubr.f32.gmra.mrb[0].mxu0 %v2402
    %v2472 = vpop.f32.mrb[0].mxu0
    %v2473 = vadd.f32 0.0, %v2472
    %v2474 = vpop.f32.mrb[0].mxu0
    %2475 = vdwg.mxu0
    %2477 = vrot.lane.b32.xlu0 %v2393, 96
    %v2478 = vpop.permute.xlu0 %2477
    %v2480 = vsel %vm167, %v2397, 0
    %v2482 = vsel %vm167, %v2478, 0
    %2484 = vmatprep.subr.mxu0 0.0
    %2485 = vmatpush1.xpose.msra.mxu0 %v2482
    %2486 = vmatprep.subr.mxu0 0.0
    %2487 = vmatpush1.xpose.msra.mxu0 0.0
    %2488 = vmatprep.subr.mxu0 0.0
    %2489 = vmatpush1.xpose.msra.mxu0 0.0
    %2490 = vmatprep.subr.mxu0 0.0
    %2491 = vmatpush1.xpose.msra.mxu0 0.0
    %2492 = vmatprep.subr.mxu0 0.0
    %2493 = vmatpush1.xpose.msra.mxu0 0.0
    %2494 = vmatprep.subr.mxu0 0.0
    %2495 = vmatpush1.xpose.msra.mxu0 0.0
    %2496 = vmatprep.subr.mxu0 0.0
    %2497 = vmatpush1.xpose.msra.mxu0 0.0
    %2498 = vmatprep.subr.mxu0 0.0
    %2499 = vmatpush1.xpose.msra.mxu0 0.0
    %2500 = vmatprep.subr.mxu0 0.0
    %2501 = vmatpush1.xpose.msra.mxu0 0.0
    %2502 = vmatprep.subr.mxu0 0.0
    %2503 = vmatpush1.xpose.msra.mxu0 0.0
    %2504 = vmatprep.subr.mxu0 0.0
    %2505 = vmatpush1.xpose.msra.mxu0 0.0
    %2506 = vmatprep.subr.mxu0 0.0
    %2507 = vmatpush1.xpose.msra.mxu0 0.0
    %2508 = vmatprep.subr.mxu0 0.0
    %2509 = vmatpush1.xpose.msra.mxu0 0.0
    %2510 = vmatprep.subr.mxu0 0.0
    %2511 = vmatpush1.xpose.msra.mxu0 0.0
    %2512 = vmatprep.subr.mxu0 0.0
    %2513 = vmatpush1.xpose.msra.mxu0 0.0
    %2514 = vmatprep.subr.mxu0 0.0
    %2515 = vmatpush1.xpose.msra.mxu0 0.0
    %2516 = vmatprep.subr.mxu0 0.0
    %2517 = vmatpush1.xpose.msra.mxu0 0.0
    %2518 = vmatprep.subr.mxu0 0.0
    %2519 = vmatpush1.xpose.msra.mxu0 0.0
    %2520 = vmatprep.subr.mxu0 0.0
    %2521 = vmatpush1.xpose.msra.mxu0 0.0
    %2522 = vmatprep.subr.mxu0 0.0
    %2523 = vmatpush1.xpose.msra.mxu0 0.0
    %2524 = vmatprep.subr.mxu0 0.0
    %2525 = vmatpush1.xpose.msra.mxu0 0.0
    %2526 = vmatprep.subr.mxu0 0.0
    %2527 = vmatpush1.xpose.msra.mxu0 0.0
    %2528 = vmatprep.subr.mxu0 0.0
    %2529 = vmatpush1.xpose.msra.mxu0 0.0
    %2530 = vmatprep.subr.mxu0 0.0
    %2531 = vmatpush1.xpose.msra.mxu0 0.0
    %2532 = vmatprep.subr.mxu0 0.0
    %2533 = vmatpush1.xpose.msra.mxu0 0.0
    %2534 = vmatprep.subr.mxu0 0.0
    %2535 = vmatpush1.xpose.msra.mxu0 0.0
    %2536 = vmatprep.subr.mxu0 0.0
    %2537 = vmatpush1.xpose.msra.mxu0 0.0
    %2538 = vmatprep.subr.mxu0 0.0
    %2539 = vmatpush1.xpose.msra.mxu0 0.0
    %2540 = vmatprep.subr.mxu0 0.0
    %2541 = vmatpush1.xpose.msra.mxu0 0.0
    %2542 = vmatprep.subr.mxu0 0.0
    %2543 = vmatpush1.xpose.msra.mxu0 0.0
    %2544 = vmatprep.subr.mxu0 0.0
    %2545 = vmatpush1.xpose.msra.mxu0 0.0
    %2546 = vmatprep.subr.mxu0 0.0
    %2547 = vmatpush1.xpose.msra.mxu0 0.0
    %2548 = vmatprep.mubr.f32.mxu0 0.0
    %2549 = vmatmul.mubr.f32.gmra.mrb[0].mxu0 %v2480
    %v2550 = vpop.f32.mrb[0].mxu0
    %v2551 = vadd.f32 0.0, %v2550
    %v2552 = vpop.f32.mrb[0].mxu0
    %2553 = vdwg.mxu0
    %v2554 = vsel %vm167, %v2473, -inf
    %2555 = vmax.xlane.f32.xlu0 %v2554
    %v2556 = vpop.xlane.xlu0 %2555
    %v2557 = vsel %vm167, %v2551, -inf
    %2558 = vmax.xlane.f32.xlu0 %v2557
    %v2559 = vpop.xlane.xlu0 %2558
    %v2560 = vsub.f32 %v2473, %v2556
    %v2561 = vsub.f32 %v2551, %v2559
    %v2562 = vmul.f32 %v2560, 1.442695
    %v2563 = vpow.pop %v2562
    %v2564 = vmul.f32 %v2561, 1.442695
    %v2565 = vpow.pop %v2564
    %v2566 = vsel %vm167, %v2563, 0.0
    %2567 = vadd.xlane.f32.xlu0 %v2566
    %v2568 = vpop.xlane.xlu0 %2567
    %v2569 = vsel %vm167, %v2565, 0.0
    %2570 = vadd.xlane.f32.xlu0 %v2569
    %v2571 = vpop.xlane.xlu0 %2570
    %v2572 = vrcp.pop %v2568
    %v2573 = vmul.f32 %v2563, %v2572
    %v2574 = vrcp.pop %v2571
    %v2575 = vmul.f32 %v2565, %v2574
    %v2576 = vadd.f32 %v2573, 0.0
    %v2577 = vadd.f32 %v2575, 0.0
    %2578 = vrot.lane.b32.xlu0 %v2388, 64
    %v2579 = vpop.permute.xlu0 %2578
    %v2582 = vsel %vm167, %v2573, 0
    %2584 = vmatprep.subr.mxu0 0.0
    %2585 = vmatpush1.msra.mxu0 %v2579
    %2586 = vmatprep.subr.mxu0 0.0
    %2587 = vmatpush1.msra.mxu0 0.0
    %2588 = vmatprep.subr.mxu0 0.0
    %2589 = vmatpush1.msra.mxu0 0.0
    %2590 = vmatprep.subr.mxu0 0.0
    %2591 = vmatpush1.msra.mxu0 0.0
    %2592 = vmatprep.subr.mxu0 0.0
    %2593 = vmatpush1.msra.mxu0 0.0
    %2594 = vmatprep.subr.mxu0 0.0
    %2595 = vmatpush1.msra.mxu0 0.0
    %2596 = vmatprep.subr.mxu0 0.0
    %2597 = vmatpush1.msra.mxu0 0.0
    %2598 = vmatprep.subr.mxu0 0.0
    %2599 = vmatpush1.msra.mxu0 0.0
    %2600 = vmatprep.subr.mxu0 0.0
    %2601 = vmatpush1.msra.mxu0 0.0
    %2602 = vmatprep.subr.mxu0 0.0
    %2603 = vmatpush1.msra.mxu0 0.0
    %2604 = vmatprep.subr.mxu0 0.0
    %2605 = vmatpush1.msra.mxu0 0.0
    %2606 = vmatprep.subr.mxu0 0.0
    %2607 = vmatpush1.msra.mxu0 0.0
    %2608 = vmatprep.subr.mxu0 0.0
    %2609 = vmatpush1.msra.mxu0 0.0
    %2610 = vmatprep.subr.mxu0 0.0
    %2611 = vmatpush1.msra.mxu0 0.0
    %2612 = vmatprep.subr.mxu0 0.0
    %2613 = vmatpush1.msra.mxu0 0.0
    %2614 = vmatprep.subr.mxu0 0.0
    %2615 = vmatpush1.msra.mxu0 0.0
    %2616 = vmatprep.subr.mxu0 0.0
    %2617 = vmatpush1.msra.mxu0 0.0
    %2618 = vmatprep.subr.mxu0 0.0
    %2619 = vmatpush1.msra.mxu0 0.0
    %2620 = vmatprep.subr.mxu0 0.0
    %2621 = vmatpush1.msra.mxu0 0.0
    %2622 = vmatprep.subr.mxu0 0.0
    %2623 = vmatpush1.msra.mxu0 0.0
    %2624 = vmatprep.subr.mxu0 0.0
    %2625 = vmatpush1.msra.mxu0 0.0
    %2626 = vmatprep.subr.mxu0 0.0
    %2627 = vmatpush1.msra.mxu0 0.0
    %2628 = vmatprep.subr.mxu0 0.0
    %2629 = vmatpush1.msra.mxu0 0.0
    %2630 = vmatprep.subr.mxu0 0.0
    %2631 = vmatpush1.msra.mxu0 0.0
    %2632 = vmatprep.subr.mxu0 0.0
    %2633 = vmatpush1.msra.mxu0 0.0
    %2634 = vmatprep.subr.mxu0 0.0
    %2635 = vmatpush1.msra.mxu0 0.0
    %2636 = vmatprep.subr.mxu0 0.0
    %2637 = vmatpush1.msra.mxu0 0.0
    %2638 = vmatprep.subr.mxu0 0.0
    %2639 = vmatpush1.msra.mxu0 0.0
    %2640 = vmatprep.subr.mxu0 0.0
    %2641 = vmatpush1.msra.mxu0 0.0
    %2642 = vmatprep.subr.mxu0 0.0
    %2643 = vmatpush1.msra.mxu0 0.0
    %2644 = vmatprep.subr.mxu0 0.0
    %2645 = vmatpush1.msra.mxu0 0.0
    %2646 = vmatprep.subr.mxu0 0.0
    %2647 = vmatpush1.msra.mxu0 0.0
    %2648 = vmatprep.mubr.f32.mxu0 0.0
    %2649 = vmatmul.mubr.f32.gmra.mrb[0].mxu0 %v2582
    %v2650 = vpop.f32.mrb[0].mxu0
    %v2651 = vadd.f32 0.0, %v2650
    %v2652 = vpop.f32.mrb[0].mxu0
    %2653 = vdwg.mxu0
    %2654 = vrot.lane.b32.xlu0 %v2393, 64
    %v2655 = vpop.permute.xlu0 %2654
    %v2658 = vsel %vm167, %v2575, 0
    %2660 = vmatprep.subr.mxu0 0.0
    %2661 = vmatpush1.msra.mxu0 %v2655
    %2662 = vmatprep.subr.mxu0 0.0
    %2663 = vmatpush1.msra.mxu0 0.0
    %2664 = vmatprep.subr.mxu0 0.0
    %2665 = vmatpush1.msra.mxu0 0.0
    %2666 = vmatprep.subr.mxu0 0.0
    %2667 = vmatpush1.msra.mxu0 0.0
    %2668 = vmatprep.subr.mxu0 0.0
    %2669 = vmatpush1.msra.mxu0 0.0
    %2670 = vmatprep.subr.mxu0 0.0
    %2671 = vmatpush1.msra.mxu0 0.0
    %2672 = vmatprep.subr.mxu0 0.0
    %2673 = vmatpush1.msra.mxu0 0.0
    %2674 = vmatprep.subr.mxu0 0.0
    %2675 = vmatpush1.msra.mxu0 0.0
    %2676 = vmatprep.subr.mxu0 0.0
    %2677 = vmatpush1.msra.mxu0 0.0
    %2678 = vmatprep.subr.mxu0 0.0
    %2679 = vmatpush1.msra.mxu0 0.0
    %2680 = vmatprep.subr.mxu0 0.0
    %2681 = vmatpush1.msra.mxu0 0.0
    %2682 = vmatprep.subr.mxu0 0.0
    %2683 = vmatpush1.msra.mxu0 0.0
    %2684 = vmatprep.subr.mxu0 0.0
    %2685 = vmatpush1.msra.mxu0 0.0
    %2686 = vmatprep.subr.mxu0 0.0
    %2687 = vmatpush1.msra.mxu0 0.0
    %2688 = vmatprep.subr.mxu0 0.0
    %2689 = vmatpush1.msra.mxu0 0.0
    %2690 = vmatprep.subr.mxu0 0.0
    %2691 = vmatpush1.msra.mxu0 0.0
    %2692 = vmatprep.subr.mxu0 0.0
    %2693 = vmatpush1.msra.mxu0 0.0
    %2694 = vmatprep.subr.mxu0 0.0
    %2695 = vmatpush1.msra.mxu0 0.0
    %2696 = vmatprep.subr.mxu0 0.0
    %2697 = vmatpush1.msra.mxu0 0.0
    %2698 = vmatprep.subr.mxu0 0.0
    %2699 = vmatpush1.msra.mxu0 0.0
    %2700 = vmatprep.subr.mxu0 0.0
    %2701 = vmatpush1.msra.mxu0 0.0
    %2702 = vmatprep.subr.mxu0 0.0
    %2703 = vmatpush1.msra.mxu0 0.0
    %2704 = vmatprep.subr.mxu0 0.0
    %2705 = vmatpush1.msra.mxu0 0.0
    %2706 = vmatprep.subr.mxu0 0.0
    %2707 = vmatpush1.msra.mxu0 0.0
    %2708 = vmatprep.subr.mxu0 0.0
    %2709 = vmatpush1.msra.mxu0 0.0
    %2710 = vmatprep.subr.mxu0 0.0
    %2711 = vmatpush1.msra.mxu0 0.0
    %2712 = vmatprep.subr.mxu0 0.0
    %2713 = vmatpush1.msra.mxu0 0.0
    %2714 = vmatprep.subr.mxu0 0.0
    %2715 = vmatpush1.msra.mxu0 0.0
    %2716 = vmatprep.subr.mxu0 0.0
    %2717 = vmatpush1.msra.mxu0 0.0
    %2718 = vmatprep.subr.mxu0 0.0
    %2719 = vmatpush1.msra.mxu0 0.0
    %2720 = vmatprep.subr.mxu0 0.0
    %2721 = vmatpush1.msra.mxu0 0.0
    %2722 = vmatprep.subr.mxu0 0.0
    %2723 = vmatpush1.msra.mxu0 0.0
    %2724 = vmatprep.mubr.f32.mxu0 0.0
    %2725 = vmatmul.mubr.f32.gmra.mrb[0].mxu0 %v2658
    %v2726 = vpop.f32.mrb[0].mxu0
    %v2727 = vadd.f32 0.0, %v2726
    %v2728 = vpop.f32.mrb[0].mxu0
    %2729 = vdwg.mxu0
    %2730 = vst.msk [vmem:[#allocation4] sm:$0xff] %vm167, %v2651
    %2731 = vst.msk [vmem:[#allocation4 + $0x8] sm:$0xff] %vm167, %v2727
    %2732 = vrot.lane.b32.xlu0 %v2396, 120
    %v2733 = vpop.permute.xlu0 %2732
    %2734 = vrot.lane.b32.xlu0 %v2388, 88
    %v2735 = vpop.permute.xlu0 %2734
    %v2736 = vsel %vm167, %v2733, 0
    %v2738 = vsel %vm167, %v2735, 0
    %2740 = vmatprep.subr.mxu0 0.0
    %2741 = vmatpush1.xpose.msra.mxu0 %v2738
    %2742 = vmatprep.subr.mxu0 0.0
    %2743 = vmatpush1.xpose.msra.mxu0 0.0
    %2744 = vmatprep.subr.mxu0 0.0
    %2745 = vmatpush1.xpose.msra.mxu0 0.0
    %2746 = vmatprep.subr.mxu0 0.0
    %2747 = vmatpush1.xpose.msra.mxu0 0.0
    %2748 = vmatprep.subr.mxu0 0.0
    %2749 = vmatpush1.xpose.msra.mxu0 0.0
    %2750 = vmatprep.subr.mxu0 0.0
    %2751 = vmatpush1.xpose.msra.mxu0 0.0
    %2752 = vmatprep.subr.mxu0 0.0
    %2753 = vmatpush1.xpose.msra.mxu0 0.0
    %2754 = vmatprep.subr.mxu0 0.0
    %2755 = vmatpush1.xpose.msra.mxu0 0.0
    %2756 = vmatprep.subr.mxu0 0.0
    %2757 = vmatpush1.xpose.msra.mxu0 0.0
    %2758 = vmatprep.subr.mxu0 0.0
    %2759 = vmatpush1.xpose.msra.mxu0 0.0
    %2760 = vmatprep.subr.mxu0 0.0
    %2761 = vmatpush1.xpose.msra.mxu0 0.0
    %2762 = vmatprep.subr.mxu0 0.0
    %2763 = vmatpush1.xpose.msra.mxu0 0.0
    %2764 = vmatprep.subr.mxu0 0.0
    %2765 = vmatpush1.xpose.msra.mxu0 0.0
    %2766 = vmatprep.subr.mxu0 0.0
    %2767 = vmatpush1.xpose.msra.mxu0 0.0
    %2768 = vmatprep.subr.mxu0 0.0
    %2769 = vmatpush1.xpose.msra.mxu0 0.0
    %2770 = vmatprep.subr.mxu0 0.0
    %2771 = vmatpush1.xpose.msra.mxu0 0.0
    %2772 = vmatprep.subr.mxu0 0.0
    %2773 = vmatpush1.xpose.msra.mxu0 0.0
    %2774 = vmatprep.subr.mxu0 0.0
    %2775 = vmatpush1.xpose.msra.mxu0 0.0
    %2776 = vmatprep.subr.mxu0 0.0
    %2777 = vmatpush1.xpose.msra.mxu0 0.0
    %2778 = vmatprep.subr.mxu0 0.0
    %2779 = vmatpush1.xpose.msra.mxu0 0.0
    %2780 = vmatprep.subr.mxu0 0.0
    %2781 = vmatpush1.xpose.msra.mxu0 0.0
    %2782 = vmatprep.subr.mxu0 0.0
    %2783 = vmatpush1.xpose.msra.mxu0 0.0
    %2784 = vmatprep.subr.mxu0 0.0
    %2785 = vmatpush1.xpose.msra.mxu0 0.0
    %2786 = vmatprep.subr.mxu0 0.0
    %2787 = vmatpush1.xpose.msra.mxu0 0.0
    %2788 = vmatprep.subr.mxu0 0.0
    %2789 = vmatpush1.xpose.msra.mxu0 0.0
    %2790 = vmatprep.subr.mxu0 0.0
    %2791 = vmatpush1.xpose.msra.mxu0 0.0
    %2792 = vmatprep.subr.mxu0 0.0
    %2793 = vmatpush1.xpose.msra.mxu0 0.0
    %2794 = vmatprep.subr.mxu0 0.0
    %2795 = vmatpush1.xpose.msra.mxu0 0.0
    %2796 = vmatprep.subr.mxu0 0.0
    %2797 = vmatpush1.xpose.msra.mxu0 0.0
    %2798 = vmatprep.subr.mxu0 0.0
    %2799 = vmatpush1.xpose.msra.mxu0 0.0
    %2800 = vmatprep.subr.mxu0 0.0
    %2801 = vmatpush1.xpose.msra.mxu0 0.0
    %2802 = vmatprep.subr.mxu0 0.0
    %2803 = vmatpush1.xpose.msra.mxu0 0.0
    %2804 = vmatprep.mubr.f32.mxu0 0.0
    %2805 = vmatmul.mubr.f32.gmra.mrb[0].mxu0 %v2736
    %v2806 = vpop.f32.mrb[0].mxu0
    %v2807 = vadd.f32 0.0, %v2806
    %v2808 = vpop.f32.mrb[0].mxu0
    %2809 = vdwg.mxu0
    %2810 = vrot.lane.b32.xlu0 %v2397, 120
    %v2811 = vpop.permute.xlu0 %2810
    %2812 = vrot.lane.b32.xlu0 %v2393, 88
    %v2813 = vpop.permute.xlu0 %2812
    %v2814 = vsel %vm167, %v2811, 0
    %v2816 = vsel %vm167, %v2813, 0
    %2818 = vmatprep.subr.mxu0 0.0
    %2819 = vmatpush1.xpose.msra.mxu0 %v2816
    %2820 = vmatprep.subr.mxu0 0.0
    %2821 = vmatpush1.xpose.msra.mxu0 0.0
    %2822 = vmatprep.subr.mxu0 0.0
    %2823 = vmatpush1.xpose.msra.mxu0 0.0
    %2824 = vmatprep.subr.mxu0 0.0
    %2825 = vmatpush1.xpose.msra.mxu0 0.0
    %2826 = vmatprep.subr.mxu0 0.0
    %2827 = vmatpush1.xpose.msra.mxu0 0.0
    %2828 = vmatprep.subr.mxu0 0.0
    %2829 = vmatpush1.xpose.msra.mxu0 0.0
    %2830 = vmatprep.subr.mxu0 0.0
    %2831 = vmatpush1.xpose.msra.mxu0 0.0
    %2832 = vmatprep.subr.mxu0 0.0
    %2833 = vmatpush1.xpose.msra.mxu0 0.0
    %2834 = vmatprep.subr.mxu0 0.0
    %2835 = vmatpush1.xpose.msra.mxu0 0.0
    %2836 = vmatprep.subr.mxu0 0.0
    %2837 = vmatpush1.xpose.msra.mxu0 0.0
    %2838 = vmatprep.subr.mxu0 0.0
    %2839 = vmatpush1.xpose.msra.mxu0 0.0
    %2840 = vmatprep.subr.mxu0 0.0
    %2841 = vmatpush1.xpose.msra.mxu0 0.0
    %2842 = vmatprep.subr.mxu0 0.0
    %2843 = vmatpush1.xpose.msra.mxu0 0.0
    %2844 = vmatprep.subr.mxu0 0.0
    %2845 = vmatpush1.xpose.msra.mxu0 0.0
    %2846 = vmatprep.subr.mxu0 0.0
    %2847 = vmatpush1.xpose.msra.mxu0 0.0
    %2848 = vmatprep.subr.mxu0 0.0
    %2849 = vmatpush1.xpose.msra.mxu0 0.0
    %2850 = vmatprep.subr.mxu0 0.0
    %2851 = vmatpush1.xpose.msra.mxu0 0.0
    %2852 = vmatprep.subr.mxu0 0.0
    %2853 = vmatpush1.xpose.msra.mxu0 0.0
    %2854 = vmatprep.subr.mxu0 0.0
    %2855 = vmatpush1.xpose.msra.mxu0 0.0
    %2856 = vmatprep.subr.mxu0 0.0
    %2857 = vmatpush1.xpose.msra.mxu0 0.0
    %2858 = vmatprep.subr.mxu0 0.0
    %2859 = vmatpush1.xpose.msra.mxu0 0.0
    %2860 = vmatprep.subr.mxu0 0.0
    %2861 = vmatpush1.xpose.msra.mxu0 0.0
    %2862 = vmatprep.subr.mxu0 0.0
    %2863 = vmatpush1.xpose.msra.mxu0 0.0
    %2864 = vmatprep.subr.mxu0 0.0
    %2865 = vmatpush1.xpose.msra.mxu0 0.0
    %2866 = vmatprep.subr.mxu0 0.0
    %2867 = vmatpush1.xpose.msra.mxu0 0.0
    %2868 = vmatprep.subr.mxu0 0.0
    %2869 = vmatpush1.xpose.msra.mxu0 0.0
    %2870 = vmatprep.subr.mxu0 0.0
    %2871 = vmatpush1.xpose.msra.mxu0 0.0
    %2872 = vmatprep.subr.mxu0 0.0
    %2873 = vmatpush1.xpose.msra.mxu0 0.0
    %2874 = vmatprep.subr.mxu0 0.0
    %2875 = vmatpush1.xpose.msra.mxu0 0.0
    %2876 = vmatprep.subr.mxu0 0.0
    %2877 = vmatpush1.xpose.msra.mxu0 0.0
    %2878 = vmatprep.subr.mxu0 0.0
    %2879 = vmatpush1.xpose.msra.mxu0 0.0
    %2880 = vmatprep.subr.mxu0 0.0
    %2881 = vmatpush1.xpose.msra.mxu0 0.0
    %2882 = vmatprep.mubr.f32.mxu0 0.0
    %2883 = vmatmul.mubr.f32.gmra.mrb[0].mxu0 %v2814
    %v2884 = vpop.f32.mrb[0].mxu0
    %v2885 = vadd.f32 0.0, %v2884
    %v2886 = vpop.f32.mrb[0].mxu0
    %2887 = vdwg.mxu0
    %v2888 = vsel %vm167, %v2807, -inf
    %2889 = vmax.xlane.f32.xlu0 %v2888
    %v2890 = vpop.xlane.xlu0 %2889
    %v2891 = vsel %vm167, %v2885, -inf
    %2892 = vmax.xlane.f32.xlu0 %v2891
    %v2893 = vpop.xlane.xlu0 %2892
    %v2894 = vsub.f32 %v2807, %v2890
    %v2895 = vsub.f32 %v2885, %v2893
    %v2896 = vmul.f32 %v2894, 1.442695
    %v2897 = vpow.pop %v2896
    %v2898 = vmul.f32 %v2895, 1.442695
    %v2899 = vpow.pop %v2898
    %v2900 = vsel %vm167, %v2897, 0.0
    %2901 = vadd.xlane.f32.xlu0 %v2900
    %v2902 = vpop.xlane.xlu0 %2901
    %v2903 = vsel %vm167, %v2899, 0.0
    %2904 = vadd.xlane.f32.xlu0 %v2903
    %v2905 = vpop.xlane.xlu0 %2904
    %v2906 = vrcp.pop %v2902
    %v2907 = vmul.f32 %v2897, %v2906
    %v2908 = vrcp.pop %v2905
    %v2909 = vmul.f32 %v2899, %v2908
    %v2910 = vadd.f32 %v2576, %v2907
    %v2911 = vadd.f32 %v2577, %v2909
    %2912 = vrot.lane.b32.xlu0 %v2388, 56
    %v2913 = vpop.permute.xlu0 %2912
    %v2916 = vsel %vm167, %v2907, 0
    %2918 = vmatprep.subr.mxu0 0.0
    %2919 = vmatpush1.msra.mxu0 %v2913
    %2920 = vmatprep.subr.mxu0 0.0
    %2921 = vmatpush1.msra.mxu0 0.0
    %2922 = vmatprep.subr.mxu0 0.0
    %2923 = vmatpush1.msra.mxu0 0.0
    %2924 = vmatprep.subr.mxu0 0.0
    %2925 = vmatpush1.msra.mxu0 0.0
    %2926 = vmatprep.subr.mxu0 0.0
    %2927 = vmatpush1.msra.mxu0 0.0
    %2928 = vmatprep.subr.mxu0 0.0
    %2929 = vmatpush1.msra.mxu0 0.0
    %2930 = vmatprep.subr.mxu0 0.0
    %2931 = vmatpush1.msra.mxu0 0.0
    %2932 = vmatprep.subr.mxu0 0.0
    %2933 = vmatpush1.msra.mxu0 0.0
    %2934 = vmatprep.subr.mxu0 0.0
    %2935 = vmatpush1.msra.mxu0 0.0
    %2936 = vmatprep.subr.mxu0 0.0
    %2937 = vmatpush1.msra.mxu0 0.0
    %2938 = vmatprep.subr.mxu0 0.0
    %2939 = vmatpush1.msra.mxu0 0.0
    %2940 = vmatprep.subr.mxu0 0.0
    %2941 = vmatpush1.msra.mxu0 0.0
    %2942 = vmatprep.subr.mxu0 0.0
    %2943 = vmatpush1.msra.mxu0 0.0
    %2944 = vmatprep.subr.mxu0 0.0
    %2945 = vmatpush1.msra.mxu0 0.0
    %2946 = vmatprep.subr.mxu0 0.0
    %2947 = vmatpush1.msra.mxu0 0.0
    %2948 = vmatprep.subr.mxu0 0.0
    %2949 = vmatpush1.msra.mxu0 0.0
    %2950 = vmatprep.subr.mxu0 0.0
    %2951 = vmatpush1.msra.mxu0 0.0
    %2952 = vmatprep.subr.mxu0 0.0
    %2953 = vmatpush1.msra.mxu0 0.0
    %2954 = vmatprep.subr.mxu0 0.0
    %2955 = vmatpush1.msra.mxu0 0.0
    %2956 = vmatprep.subr.mxu0 0.0
    %2957 = vmatpush1.msra.mxu0 0.0
    %2958 = vmatprep.subr.mxu0 0.0
    %2959 = vmatpush1.msra.mxu0 0.0
    %2960 = vmatprep.subr.mxu0 0.0
    %2961 = vmatpush1.msra.mxu0 0.0
    %2962 = vmatprep.subr.mxu0 0.0
    %2963 = vmatpush1.msra.mxu0 0.0
    %2964 = vmatprep.subr.mxu0 0.0
    %2965 = vmatpush1.msra.mxu0 0.0
    %2966 = vmatprep.subr.mxu0 0.0
    %2967 = vmatpush1.msra.mxu0 0.0
    %2968 = vmatprep.subr.mxu0 0.0
    %2969 = vmatpush1.msra.mxu0 0.0
    %2970 = vmatprep.subr.mxu0 0.0
    %2971 = vmatpush1.msra.mxu0 0.0
    %2972 = vmatprep.subr.mxu0 0.0
    %2973 = vmatpush1.msra.mxu0 0.0
    %2974 = vmatprep.subr.mxu0 0.0
    %2975 = vmatpush1.msra.mxu0 0.0
    %2976 = vmatprep.subr.mxu0 0.0
    %2977 = vmatpush1.msra.mxu0 0.0
    %2978 = vmatprep.subr.mxu0 0.0
    %2979 = vmatpush1.msra.mxu0 0.0
    %2980 = vmatprep.subr.mxu0 0.0
    %2981 = vmatpush1.msra.mxu0 0.0
    %2982 = vmatprep.mubr.f32.mxu0 0.0
    %2983 = vmatmul.mubr.f32.gmra.mrb[0].mxu0 %v2916
    %v2984 = vpop.f32.mrb[0].mxu0
    %v2985 = vadd.f32 0.0, %v2984
    %v2986 = vpop.f32.mrb[0].mxu0
    %2987 = vdwg.mxu0
    %2988 = vrot.lane.b32.xlu0 %v2393, 56
    %v2989 = vpop.permute.xlu0 %2988
    %v2992 = vsel %vm167, %v2909, 0
    %2994 = vmatprep.subr.mxu0 0.0
    %2995 = vmatpush1.msra.mxu0 %v2989
    %2996 = vmatprep.subr.mxu0 0.0
    %2997 = vmatpush1.msra.mxu0 0.0
    %2998 = vmatprep.subr.mxu0 0.0
    %2999 = vmatpush1.msra.mxu0 0.0
    %3000 = vmatprep.subr.mxu0 0.0
    %3001 = vmatpush1.msra.mxu0 0.0
    %3002 = vmatprep.subr.mxu0 0.0
    %3003 = vmatpush1.msra.mxu0 0.0
    %3004 = vmatprep.subr.mxu0 0.0
    %3005 = vmatpush1.msra.mxu0 0.0
    %3006 = vmatprep.subr.mxu0 0.0
    %3007 = vmatpush1.msra.mxu0 0.0
    %3008 = vmatprep.subr.mxu0 0.0
    %3009 = vmatpush1.msra.mxu0 0.0
    %3010 = vmatprep.subr.mxu0 0.0
    %3011 = vmatpush1.msra.mxu0 0.0
    %3012 = vmatprep.subr.mxu0 0.0
    %3013 = vmatpush1.msra.mxu0 0.0
    %3014 = vmatprep.subr.mxu0 0.0
    %3015 = vmatpush1.msra.mxu0 0.0
    %3016 = vmatprep.subr.mxu0 0.0
    %3017 = vmatpush1.msra.mxu0 0.0
    %3018 = vmatprep.subr.mxu0 0.0
    %3019 = vmatpush1.msra.mxu0 0.0
    %3020 = vmatprep.subr.mxu0 0.0
    %3021 = vmatpush1.msra.mxu0 0.0
    %3022 = vmatprep.subr.mxu0 0.0
    %3023 = vmatpush1.msra.mxu0 0.0
    %3024 = vmatprep.subr.mxu0 0.0
    %3025 = vmatpush1.msra.mxu0 0.0
    %3026 = vmatprep.subr.mxu0 0.0
    %3027 = vmatpush1.msra.mxu0 0.0
    %3028 = vmatprep.subr.mxu0 0.0
    %3029 = vmatpush1.msra.mxu0 0.0
    %3030 = vmatprep.subr.mxu0 0.0
    %3031 = vmatpush1.msra.mxu0 0.0
    %3032 = vmatprep.subr.mxu0 0.0
    %3033 = vmatpush1.msra.mxu0 0.0
    %3034 = vmatprep.subr.mxu0 0.0
    %3035 = vmatpush1.msra.mxu0 0.0
    %3036 = vmatprep.subr.mxu0 0.0
    %3037 = vmatpush1.msra.mxu0 0.0
    %3038 = vmatprep.subr.mxu0 0.0
    %3039 = vmatpush1.msra.mxu0 0.0
    %3040 = vmatprep.subr.mxu0 0.0
    %3041 = vmatpush1.msra.mxu0 0.0
    %3042 = vmatprep.subr.mxu0 0.0
    %3043 = vmatpush1.msra.mxu0 0.0
    %3044 = vmatprep.subr.mxu0 0.0
    %3045 = vmatpush1.msra.mxu0 0.0
    %3046 = vmatprep.subr.mxu0 0.0
    %3047 = vmatpush1.msra.mxu0 0.0
    %3048 = vmatprep.subr.mxu0 0.0
    %3049 = vmatpush1.msra.mxu0 0.0
    %3050 = vmatprep.subr.mxu0 0.0
    %3051 = vmatpush1.msra.mxu0 0.0
    %3052 = vmatprep.subr.mxu0 0.0
    %3053 = vmatpush1.msra.mxu0 0.0
    %3054 = vmatprep.subr.mxu0 0.0
    %3055 = vmatpush1.msra.mxu0 0.0
    %3056 = vmatprep.subr.mxu0 0.0
    %3057 = vmatpush1.msra.mxu0 0.0
    %3058 = vmatprep.mubr.f32.mxu0 0.0
    %3059 = vmatmul.mubr.f32.gmra.mrb[0].mxu0 %v2992
    %v3060 = vpop.f32.mrb[0].mxu0
    %v3061 = vadd.f32 0.0, %v3060
    %v3062 = vpop.f32.mrb[0].mxu0
    %3063 = vdwg.mxu0
    %3066 = vrot.lane.b32.xlu0 %v2985, 8
    %v3067 = vpop.permute.xlu0 %3066
    %3068 = vrot.lane.b32.xlu0 %v3061, 8
    %v3069 = vpop.permute.xlu0 %3068
    %vm3072 = vcmask 130112
    %3073 = vst.msk [vmem:[#allocation4] sm:$0xff] %vm3072, %v3067
    %3074 = vst.msk [vmem:[#allocation4 + $0x8] sm:$0xff] %vm3072, %v3069
    %3075 = vrot.lane.b32.xlu0 %v2396, 112
    %v3076 = vpop.permute.xlu0 %3075
    %3077 = vrot.lane.b32.xlu0 %v2388, 80
    %v3078 = vpop.permute.xlu0 %3077
    %v3079 = vsel %vm167, %v3076, 0
    %v3081 = vsel %vm167, %v3078, 0
    %3083 = vmatprep.subr.mxu0 0.0
    %3084 = vmatpush1.xpose.msra.mxu0 %v3081
    %3085 = vmatprep.subr.mxu0 0.0
    %3086 = vmatpush1.xpose.msra.mxu0 0.0
    %3087 = vmatprep.subr.mxu0 0.0
    %3088 = vmatpush1.xpose.msra.mxu0 0.0
    %3089 = vmatprep.subr.mxu0 0.0
    %3090 = vmatpush1.xpose.msra.mxu0 0.0
    %3091 = vmatprep.subr.mxu0 0.0
    %3092 = vmatpush1.xpose.msra.mxu0 0.0
    %3093 = vmatprep.subr.mxu0 0.0
    %3094 = vmatpush1.xpose.msra.mxu0 0.0
    %3095 = vmatprep.subr.mxu0 0.0
    %3096 = vmatpush1.xpose.msra.mxu0 0.0
    %3097 = vmatprep.subr.mxu0 0.0
    %3098 = vmatpush1.xpose.msra.mxu0 0.0
    %3099 = vmatprep.subr.mxu0 0.0
    %3100 = vmatpush1.xpose.msra.mxu0 0.0
    %3101 = vmatprep.subr.mxu0 0.0
    %3102 = vmatpush1.xpose.msra.mxu0 0.0
    %3103 = vmatprep.subr.mxu0 0.0
    %3104 = vmatpush1.xpose.msra.mxu0 0.0
    %3105 = vmatprep.subr.mxu0 0.0
    %3106 = vmatpush1.xpose.msra.mxu0 0.0
    %3107 = vmatprep.subr.mxu0 0.0
    %3108 = vmatpush1.xpose.msra.mxu0 0.0
    %3109 = vmatprep.subr.mxu0 0.0
    %3110 = vmatpush1.xpose.msra.mxu0 0.0
    %3111 = vmatprep.subr.mxu0 0.0
    %3112 = vmatpush1.xpose.msra.mxu0 0.0
    %3113 = vmatprep.subr.mxu0 0.0
    %3114 = vmatpush1.xpose.msra.mxu0 0.0
    %3115 = vmatprep.subr.mxu0 0.0
    %3116 = vmatpush1.xpose.msra.mxu0 0.0
    %3117 = vmatprep.subr.mxu0 0.0
    %3118 = vmatpush1.xpose.msra.mxu0 0.0
    %3119 = vmatprep.subr.mxu0 0.0
    %3120 = vmatpush1.xpose.msra.mxu0 0.0
    %3121 = vmatprep.subr.mxu0 0.0
    %3122 = vmatpush1.xpose.msra.mxu0 0.0
    %3123 = vmatprep.subr.mxu0 0.0
    %3124 = vmatpush1.xpose.msra.mxu0 0.0
    %3125 = vmatprep.subr.mxu0 0.0
    %3126 = vmatpush1.xpose.msra.mxu0 0.0
    %3127 = vmatprep.subr.mxu0 0.0
    %3128 = vmatpush1.xpose.msra.mxu0 0.0
    %3129 = vmatprep.subr.mxu0 0.0
    %3130 = vmatpush1.xpose.msra.mxu0 0.0
    %3131 = vmatprep.subr.mxu0 0.0
    %3132 = vmatpush1.xpose.msra.mxu0 0.0
    %3133 = vmatprep.subr.mxu0 0.0
    %3134 = vmatpush1.xpose.msra.mxu0 0.0
    %3135 = vmatprep.subr.mxu0 0.0
    %3136 = vmatpush1.xpose.msra.mxu0 0.0
    %3137 = vmatprep.subr.mxu0 0.0
    %3138 = vmatpush1.xpose.msra.mxu0 0.0
    %3139 = vmatprep.subr.mxu0 0.0
    %3140 = vmatpush1.xpose.msra.mxu0 0.0
    %3141 = vmatprep.subr.mxu0 0.0
    %3142 = vmatpush1.xpose.msra.mxu0 0.0
    %3143 = vmatprep.subr.mxu0 0.0
    %3144 = vmatpush1.xpose.msra.mxu0 0.0
    %3145 = vmatprep.subr.mxu0 0.0
    %3146 = vmatpush1.xpose.msra.mxu0 0.0
    %3147 = vmatprep.mubr.f32.mxu0 0.0
    %3148 = vmatmul.mubr.f32.gmra.mrb[0].mxu0 %v3079
    %v3149 = vpop.f32.mrb[0].mxu0
    %v3150 = vadd.f32 0.0, %v3149
    %v3151 = vpop.f32.mrb[0].mxu0
    %3152 = vdwg.mxu0
    %3153 = vrot.lane.b32.xlu0 %v2397, 112
    %v3154 = vpop.permute.xlu0 %3153
    %3155 = vrot.lane.b32.xlu0 %v2393, 80
    %v3156 = vpop.permute.xlu0 %3155
    %v3157 = vsel %vm167, %v3154, 0
    %v3159 = vsel %vm167, %v3156, 0
    %3161 = vmatprep.subr.mxu0 0.0
    %3162 = vmatpush1.xpose.msra.mxu0 %v3159
    %3163 = vmatprep.subr.mxu0 0.0
    %3164 = vmatpush1.xpose.msra.mxu0 0.0
    %3165 = vmatprep.subr.mxu0 0.0
    %3166 = vmatpush1.xpose.msra.mxu0 0.0
    %3167 = vmatprep.subr.mxu0 0.0
    %3168 = vmatpush1.xpose.msra.mxu0 0.0
    %3169 = vmatprep.subr.mxu0 0.0
    %3170 = vmatpush1.xpose.msra.mxu0 0.0
    %3171 = vmatprep.subr.mxu0 0.0
    %3172 = vmatpush1.xpose.msra.mxu0 0.0
    %3173 = vmatprep.subr.mxu0 0.0
    %3174 = vmatpush1.xpose.msra.mxu0 0.0
    %3175 = vmatprep.subr.mxu0 0.0
    %3176 = vmatpush1.xpose.msra.mxu0 0.0
    %3177 = vmatprep.subr.mxu0 0.0
    %3178 = vmatpush1.xpose.msra.mxu0 0.0
    %3179 = vmatprep.subr.mxu0 0.0
    %3180 = vmatpush1.xpose.msra.mxu0 0.0
    %3181 = vmatprep.subr.mxu0 0.0
    %3182 = vmatpush1.xpose.msra.mxu0 0.0
    %3183 = vmatprep.subr.mxu0 0.0
    %3184 = vmatpush1.xpose.msra.mxu0 0.0
    %3185 = vmatprep.subr.mxu0 0.0
    %3186 = vmatpush1.xpose.msra.mxu0 0.0
    %3187 = vmatprep.subr.mxu0 0.0
    %3188 = vmatpush1.xpose.msra.mxu0 0.0
    %3189 = vmatprep.subr.mxu0 0.0
    %3190 = vmatpush1.xpose.msra.mxu0 0.0
    %3191 = vmatprep.subr.mxu0 0.0
    %3192 = vmatpush1.xpose.msra.mxu0 0.0
    %3193 = vmatprep.subr.mxu0 0.0
    %3194 = vmatpush1.xpose.msra.mxu0 0.0
    %3195 = vmatprep.subr.mxu0 0.0
    %3196 = vmatpush1.xpose.msra.mxu0 0.0
    %3197 = vmatprep.subr.mxu0 0.0
    %3198 = vmatpush1.xpose.msra.mxu0 0.0
    %3199 = vmatprep.subr.mxu0 0.0
    %3200 = vmatpush1.xpose.msra.mxu0 0.0
    %3201 = vmatprep.subr.mxu0 0.0
    %3202 = vmatpush1.xpose.msra.mxu0 0.0
    %3203 = vmatprep.subr.mxu0 0.0
    %3204 = vmatpush1.xpose.msra.mxu0 0.0
    %3205 = vmatprep.subr.mxu0 0.0
    %3206 = vmatpush1.xpose.msra.mxu0 0.0
    %3207 = vmatprep.subr.mxu0 0.0
    %3208 = vmatpush1.xpose.msra.mxu0 0.0
    %3209 = vmatprep.subr.mxu0 0.0
    %3210 = vmatpush1.xpose.msra.mxu0 0.0
    %3211 = vmatprep.subr.mxu0 0.0
    %3212 = vmatpush1.xpose.msra.mxu0 0.0
    %3213 = vmatprep.subr.mxu0 0.0
    %3214 = vmatpush1.xpose.msra.mxu0 0.0
    %3215 = vmatprep.subr.mxu0 0.0
    %3216 = vmatpush1.xpose.msra.mxu0 0.0
    %3217 = vmatprep.subr.mxu0 0.0
    %3218 = vmatpush1.xpose.msra.mxu0 0.0
    %3219 = vmatprep.subr.mxu0 0.0
    %3220 = vmatpush1.xpose.msra.mxu0 0.0
    %3221 = vmatprep.subr.mxu0 0.0
    %3222 = vmatpush1.xpose.msra.mxu0 0.0
    %3223 = vmatprep.subr.mxu0 0.0
    %3224 = vmatpush1.xpose.msra.mxu0 0.0
    %3225 = vmatprep.mubr.f32.mxu0 0.0
    %3226 = vmatmul.mubr.f32.gmra.mrb[0].mxu0 %v3157
    %v3227 = vpop.f32.mrb[0].mxu0
    %v3228 = vadd.f32 0.0, %v3227
    %v3229 = vpop.f32.mrb[0].mxu0
    %3230 = vdwg.mxu0
    %v3231 = vsel %vm167, %v3150, -inf
    %3232 = vmax.xlane.f32.xlu0 %v3231
    %v3233 = vpop.xlane.xlu0 %3232
    %v3234 = vsel %vm167, %v3228, -inf
    %3235 = vmax.xlane.f32.xlu0 %v3234
    %v3236 = vpop.xlane.xlu0 %3235
    %v3237 = vsub.f32 %v3150, %v3233
    %v3238 = vsub.f32 %v3228, %v3236
    %v3239 = vmul.f32 %v3237, 1.442695
    %v3240 = vpow.pop %v3239
    %v3241 = vmul.f32 %v3238, 1.442695
    %v3242 = vpow.pop %v3241
    %v3243 = vsel %vm167, %v3240, 0.0
    %3244 = vadd.xlane.f32.xlu0 %v3243
    %v3245 = vpop.xlane.xlu0 %3244
    %v3246 = vsel %vm167, %v3242, 0.0
    %3247 = vadd.xlane.f32.xlu0 %v3246
    %v3248 = vpop.xlane.xlu0 %3247
    %v3249 = vrcp.pop %v3245
    %v3250 = vmul.f32 %v3240, %v3249
    %v3251 = vrcp.pop %v3248
    %v3252 = vmul.f32 %v3242, %v3251
    %v3253 = vadd.f32 %v2910, %v3250
    %v3254 = vadd.f32 %v2911, %v3252
    %3255 = vrot.lane.b32.xlu0 %v2388, 48
    %v3256 = vpop.permute.xlu0 %3255
    %v3259 = vsel %vm167, %v3250, 0
    %3261 = vmatprep.subr.mxu0 0.0
    %3262 = vmatpush1.msra.mxu0 %v3256
    %3263 = vmatprep.subr.mxu0 0.0
    %3264 = vmatpush1.msra.mxu0 0.0
    %3265 = vmatprep.subr.mxu0 0.0
    %3266 = vmatpush1.msra.mxu0 0.0
    %3267 = vmatprep.subr.mxu0 0.0
    %3268 = vmatpush1.msra.mxu0 0.0
    %3269 = vmatprep.subr.mxu0 0.0
    %3270 = vmatpush1.msra.mxu0 0.0
    %3271 = vmatprep.subr.mxu0 0.0
    %3272 = vmatpush1.msra.mxu0 0.0
    %3273 = vmatprep.subr.mxu0 0.0
    %3274 = vmatpush1.msra.mxu0 0.0
    %3275 = vmatprep.subr.mxu0 0.0
    %3276 = vmatpush1.msra.mxu0 0.0
    %3277 = vmatprep.subr.mxu0 0.0
    %3278 = vmatpush1.msra.mxu0 0.0
    %3279 = vmatprep.subr.mxu0 0.0
    %3280 = vmatpush1.msra.mxu0 0.0
    %3281 = vmatprep.subr.mxu0 0.0
    %3282 = vmatpush1.msra.mxu0 0.0
    %3283 = vmatprep.subr.mxu0 0.0
    %3284 = vmatpush1.msra.mxu0 0.0
    %3285 = vmatprep.subr.mxu0 0.0
    %3286 = vmatpush1.msra.mxu0 0.0
    %3287 = vmatprep.subr.mxu0 0.0
    %3288 = vmatpush1.msra.mxu0 0.0
    %3289 = vmatprep.subr.mxu0 0.0
    %3290 = vmatpush1.msra.mxu0 0.0
    %3291 = vmatprep.subr.mxu0 0.0
    %3292 = vmatpush1.msra.mxu0 0.0
    %3293 = vmatprep.subr.mxu0 0.0
    %3294 = vmatpush1.msra.mxu0 0.0
    %3295 = vmatprep.subr.mxu0 0.0
    %3296 = vmatpush1.msra.mxu0 0.0
    %3297 = vmatprep.subr.mxu0 0.0
    %3298 = vmatpush1.msra.mxu0 0.0
    %3299 = vmatprep.subr.mxu0 0.0
    %3300 = vmatpush1.msra.mxu0 0.0
    %3301 = vmatprep.subr.mxu0 0.0
    %3302 = vmatpush1.msra.mxu0 0.0
    %3303 = vmatprep.subr.mxu0 0.0
    %3304 = vmatpush1.msra.mxu0 0.0
    %3305 = vmatprep.subr.mxu0 0.0
    %3306 = vmatpush1.msra.mxu0 0.0
    %3307 = vmatprep.subr.mxu0 0.0
    %3308 = vmatpush1.msra.mxu0 0.0
    %3309 = vmatprep.subr.mxu0 0.0
    %3310 = vmatpush1.msra.mxu0 0.0
    %3311 = vmatprep.subr.mxu0 0.0
    %3312 = vmatpush1.msra.mxu0 0.0
    %3313 = vmatprep.subr.mxu0 0.0
    %3314 = vmatpush1.msra.mxu0 0.0
    %3315 = vmatprep.subr.mxu0 0.0
    %3316 = vmatpush1.msra.mxu0 0.0
    %3317 = vmatprep.subr.mxu0 0.0
    %3318 = vmatpush1.msra.mxu0 0.0
    %3319 = vmatprep.subr.mxu0 0.0
    %3320 = vmatpush1.msra.mxu0 0.0
    %3321 = vmatprep.subr.mxu0 0.0
    %3322 = vmatpush1.msra.mxu0 0.0
    %3323 = vmatprep.subr.mxu0 0.0
    %3324 = vmatpush1.msra.mxu0 0.0
    %3325 = vmatprep.mubr.f32.mxu0 0.0
    %3326 = vmatmul.mubr.f32.gmra.mrb[0].mxu0 %v3259
    %v3327 = vpop.f32.mrb[0].mxu0
    %v3328 = vadd.f32 0.0, %v3327
    %v3329 = vpop.f32.mrb[0].mxu0
    %3330 = vdwg.mxu0
    %3331 = vrot.lane.b32.xlu0 %v2393, 48
    %v3332 = vpop.permute.xlu0 %3331
    %v3335 = vsel %vm167, %v3252, 0
    %3337 = vmatprep.subr.mxu0 0.0
    %3338 = vmatpush1.msra.mxu0 %v3332
    %3339 = vmatprep.subr.mxu0 0.0
    %3340 = vmatpush1.msra.mxu0 0.0
    %3341 = vmatprep.subr.mxu0 0.0
    %3342 = vmatpush1.msra.mxu0 0.0
    %3343 = vmatprep.subr.mxu0 0.0
    %3344 = vmatpush1.msra.mxu0 0.0
    %3345 = vmatprep.subr.mxu0 0.0
    %3346 = vmatpush1.msra.mxu0 0.0
    %3347 = vmatprep.subr.mxu0 0.0
    %3348 = vmatpush1.msra.mxu0 0.0
    %3349 = vmatprep.subr.mxu0 0.0
    %3350 = vmatpush1.msra.mxu0 0.0
    %3351 = vmatprep.subr.mxu0 0.0
    %3352 = vmatpush1.msra.mxu0 0.0
    %3353 = vmatprep.subr.mxu0 0.0
    %3354 = vmatpush1.msra.mxu0 0.0
    %3355 = vmatprep.subr.mxu0 0.0
    %3356 = vmatpush1.msra.mxu0 0.0
    %3357 = vmatprep.subr.mxu0 0.0
    %3358 = vmatpush1.msra.mxu0 0.0
    %3359 = vmatprep.subr.mxu0 0.0
    %3360 = vmatpush1.msra.mxu0 0.0
    %3361 = vmatprep.subr.mxu0 0.0
    %3362 = vmatpush1.msra.mxu0 0.0
    %3363 = vmatprep.subr.mxu0 0.0
    %3364 = vmatpush1.msra.mxu0 0.0
    %3365 = vmatprep.subr.mxu0 0.0
    %3366 = vmatpush1.msra.mxu0 0.0
    %3367 = vmatprep.subr.mxu0 0.0
    %3368 = vmatpush1.msra.mxu0 0.0
    %3369 = vmatprep.subr.mxu0 0.0
    %3370 = vmatpush1.msra.mxu0 0.0
    %3371 = vmatprep.subr.mxu0 0.0
    %3372 = vmatpush1.msra.mxu0 0.0
    %3373 = vmatprep.subr.mxu0 0.0
    %3374 = vmatpush1.msra.mxu0 0.0
    %3375 = vmatprep.subr.mxu0 0.0
    %3376 = vmatpush1.msra.mxu0 0.0
    %3377 = vmatprep.subr.mxu0 0.0
    %3378 = vmatpush1.msra.mxu0 0.0
    %3379 = vmatprep.subr.mxu0 0.0
    %3380 = vmatpush1.msra.mxu0 0.0
    %3381 = vmatprep.subr.mxu0 0.0
    %3382 = vmatpush1.msra.mxu0 0.0
    %3383 = vmatprep.subr.mxu0 0.0
    %3384 = vmatpush1.msra.mxu0 0.0
    %3385 = vmatprep.subr.mxu0 0.0
    %3386 = vmatpush1.msra.mxu0 0.0
    %3387 = vmatprep.subr.mxu0 0.0
    %3388 = vmatpush1.msra.mxu0 0.0
    %3389 = vmatprep.subr.mxu0 0.0
    %3390 = vmatpush1.msra.mxu0 0.0
    %3391 = vmatprep.subr.mxu0 0.0
    %3392 = vmatpush1.msra.mxu0 0.0
    %3393 = vmatprep.subr.mxu0 0.0
    %3394 = vmatpush1.msra.mxu0 0.0
    %3395 = vmatprep.subr.mxu0 0.0
    %3396 = vmatpush1.msra.mxu0 0.0
    %3397 = vmatprep.subr.mxu0 0.0
    %3398 = vmatpush1.msra.mxu0 0.0
    %3399 = vmatprep.subr.mxu0 0.0
    %3400 = vmatpush1.msra.mxu0 0.0
    %3401 = vmatprep.mubr.f32.mxu0 0.0
    %3402 = vmatmul.mubr.f32.gmra.mrb[0].mxu0 %v3335
    %v3403 = vpop.f32.mrb[0].mxu0
    %v3404 = vadd.f32 0.0, %v3403
    %v3405 = vpop.f32.mrb[0].mxu0
    %3406 = vdwg.mxu0
    %3409 = vrot.lane.b32.xlu0 %v3328, 16
    %v3410 = vpop.permute.xlu0 %3409
    %3411 = vrot.lane.b32.xlu0 %v3404, 16
    %v3412 = vpop.permute.xlu0 %3411
    %vm3415 = vcmask 195712
    %3416 = vst.msk [vmem:[#allocation4] sm:$0xff] %vm3415, %v3410
    %3417 = vst.msk [vmem:[#allocation4 + $0x8] sm:$0xff] %vm3415, %v3412
    %3418 = vrot.lane.b32.xlu0 %v2396, 104
    %v3419 = vpop.permute.xlu0 %3418
    %3420 = vrot.lane.b32.xlu0 %v2388, 72
    %v3421 = vpop.permute.xlu0 %3420
    %v3422 = vsel %vm167, %v3419, 0
    %v3424 = vsel %vm167, %v3421, 0
    %3426 = vmatprep.subr.mxu0 0.0
    %3427 = vmatpush1.xpose.msra.mxu0 %v3424
    %3428 = vmatprep.subr.mxu0 0.0
    %3429 = vmatpush1.xpose.msra.mxu0 0.0
    %3430 = vmatprep.subr.mxu0 0.0
    %3431 = vmatpush1.xpose.msra.mxu0 0.0
    %3432 = vmatprep.subr.mxu0 0.0
    %3433 = vmatpush1.xpose.msra.mxu0 0.0
    %3434 = vmatprep.subr.mxu0 0.0
    %3435 = vmatpush1.xpose.msra.mxu0 0.0
    %3436 = vmatprep.subr.mxu0 0.0
    %3437 = vmatpush1.xpose.msra.mxu0 0.0
    %3438 = vmatprep.subr.mxu0 0.0
    %3439 = vmatpush1.xpose.msra.mxu0 0.0
    %3440 = vmatprep.subr.mxu0 0.0
    %3441 = vmatpush1.xpose.msra.mxu0 0.0
    %3442 = vmatprep.subr.mxu0 0.0
    %3443 = vmatpush1.xpose.msra.mxu0 0.0
    %3444 = vmatprep.subr.mxu0 0.0
    %3445 = vmatpush1.xpose.msra.mxu0 0.0
    %3446 = vmatprep.subr.mxu0 0.0
    %3447 = vmatpush1.xpose.msra.mxu0 0.0
    %3448 = vmatprep.subr.mxu0 0.0
    %3449 = vmatpush1.xpose.msra.mxu0 0.0
    %3450 = vmatprep.subr.mxu0 0.0
    %3451 = vmatpush1.xpose.msra.mxu0 0.0
    %3452 = vmatprep.subr.mxu0 0.0
    %3453 = vmatpush1.xpose.msra.mxu0 0.0
    %3454 = vmatprep.subr.mxu0 0.0
    %3455 = vmatpush1.xpose.msra.mxu0 0.0
    %3456 = vmatprep.subr.mxu0 0.0
    %3457 = vmatpush1.xpose.msra.mxu0 0.0
    %3458 = vmatprep.subr.mxu0 0.0
    %3459 = vmatpush1.xpose.msra.mxu0 0.0
    %3460 = vmatprep.subr.mxu0 0.0
    %3461 = vmatpush1.xpose.msra.mxu0 0.0
    %3462 = vmatprep.subr.mxu0 0.0
    %3463 = vmatpush1.xpose.msra.mxu0 0.0
    %3464 = vmatprep.subr.mxu0 0.0
    %3465 = vmatpush1.xpose.msra.mxu0 0.0
    %3466 = vmatprep.subr.mxu0 0.0
    %3467 = vmatpush1.xpose.msra.mxu0 0.0
    %3468 = vmatprep.subr.mxu0 0.0
    %3469 = vmatpush1.xpose.msra.mxu0 0.0
    %3470 = vmatprep.subr.mxu0 0.0
    %3471 = vmatpush1.xpose.msra.mxu0 0.0
    %3472 = vmatprep.subr.mxu0 0.0
    %3473 = vmatpush1.xpose.msra.mxu0 0.0
    %3474 = vmatprep.subr.mxu0 0.0
    %3475 = vmatpush1.xpose.msra.mxu0 0.0
    %3476 = vmatprep.subr.mxu0 0.0
    %3477 = vmatpush1.xpose.msra.mxu0 0.0
    %3478 = vmatprep.subr.mxu0 0.0
    %3479 = vmatpush1.xpose.msra.mxu0 0.0
    %3480 = vmatprep.subr.mxu0 0.0
    %3481 = vmatpush1.xpose.msra.mxu0 0.0
    %3482 = vmatprep.subr.mxu0 0.0
    %3483 = vmatpush1.xpose.msra.mxu0 0.0
    %3484 = vmatprep.subr.mxu0 0.0
    %3485 = vmatpush1.xpose.msra.mxu0 0.0
    %3486 = vmatprep.subr.mxu0 0.0
    %3487 = vmatpush1.xpose.msra.mxu0 0.0
    %3488 = vmatprep.subr.mxu0 0.0
    %3489 = vmatpush1.xpose.msra.mxu0 0.0
    %3490 = vmatprep.mubr.f32.mxu0 0.0
    %3491 = vmatmul.mubr.f32.gmra.mrb[0].mxu0 %v3422
    %v3492 = vpop.f32.mrb[0].mxu0
    %v3493 = vadd.f32 0.0, %v3492
    %v3494 = vpop.f32.mrb[0].mxu0
    %3495 = vdwg.mxu0
    %3496 = vrot.lane.b32.xlu0 %v2397, 104
    %v3497 = vpop.permute.xlu0 %3496
    %3498 = vrot.lane.b32.xlu0 %v2393, 72
    %v3499 = vpop.permute.xlu0 %3498
    %v3500 = vsel %vm167, %v3497, 0
    %v3502 = vsel %vm167, %v3499, 0
    %3504 = vmatprep.subr.mxu0 0.0
    %3505 = vmatpush1.xpose.msra.mxu0 %v3502
    %3506 = vmatprep.subr.mxu0 0.0
    %3507 = vmatpush1.xpose.msra.mxu0 0.0
    %3508 = vmatprep.subr.mxu0 0.0
    %3509 = vmatpush1.xpose.msra.mxu0 0.0
    %3510 = vmatprep.subr.mxu0 0.0
    %3511 = vmatpush1.xpose.msra.mxu0 0.0
    %3512 = vmatprep.subr.mxu0 0.0
    %3513 = vmatpush1.xpose.msra.mxu0 0.0
    %3514 = vmatprep.subr.mxu0 0.0
    %3515 = vmatpush1.xpose.msra.mxu0 0.0
    %3516 = vmatprep.subr.mxu0 0.0
    %3517 = vmatpush1.xpose.msra.mxu0 0.0
    %3518 = vmatprep.subr.mxu0 0.0
    %3519 = vmatpush1.xpose.msra.mxu0 0.0
    %3520 = vmatprep.subr.mxu0 0.0
    %3521 = vmatpush1.xpose.msra.mxu0 0.0
    %3522 = vmatprep.subr.mxu0 0.0
    %3523 = vmatpush1.xpose.msra.mxu0 0.0
    %3524 = vmatprep.subr.mxu0 0.0
    %3525 = vmatpush1.xpose.msra.mxu0 0.0
    %3526 = vmatprep.subr.mxu0 0.0
    %3527 = vmatpush1.xpose.msra.mxu0 0.0
    %3528 = vmatprep.subr.mxu0 0.0
    %3529 = vmatpush1.xpose.msra.mxu0 0.0
    %3530 = vmatprep.subr.mxu0 0.0
    %3531 = vmatpush1.xpose.msra.mxu0 0.0
    %3532 = vmatprep.subr.mxu0 0.0
    %3533 = vmatpush1.xpose.msra.mxu0 0.0
    %3534 = vmatprep.subr.mxu0 0.0
    %3535 = vmatpush1.xpose.msra.mxu0 0.0
    %3536 = vmatprep.subr.mxu0 0.0
    %3537 = vmatpush1.xpose.msra.mxu0 0.0
    %3538 = vmatprep.subr.mxu0 0.0
    %3539 = vmatpush1.xpose.msra.mxu0 0.0
    %3540 = vmatprep.subr.mxu0 0.0
    %3541 = vmatpush1.xpose.msra.mxu0 0.0
    %3542 = vmatprep.subr.mxu0 0.0
    %3543 = vmatpush1.xpose.msra.mxu0 0.0
    %3544 = vmatprep.subr.mxu0 0.0
    %3545 = vmatpush1.xpose.msra.mxu0 0.0
    %3546 = vmatprep.subr.mxu0 0.0
    %3547 = vmatpush1.xpose.msra.mxu0 0.0
    %3548 = vmatprep.subr.mxu0 0.0
    %3549 = vmatpush1.xpose.msra.mxu0 0.0
    %3550 = vmatprep.subr.mxu0 0.0
    %3551 = vmatpush1.xpose.msra.mxu0 0.0
    %3552 = vmatprep.subr.mxu0 0.0
    %3553 = vmatpush1.xpose.msra.mxu0 0.0
    %3554 = vmatprep.subr.mxu0 0.0
    %3555 = vmatpush1.xpose.msra.mxu0 0.0
    %3556 = vmatprep.subr.mxu0 0.0
    %3557 = vmatpush1.xpose.msra.mxu0 0.0
    %3558 = vmatprep.subr.mxu0 0.0
    %3559 = vmatpush1.xpose.msra.mxu0 0.0
    %3560 = vmatprep.subr.mxu0 0.0
    %3561 = vmatpush1.xpose.msra.mxu0 0.0
    %3562 = vmatprep.subr.mxu0 0.0
    %3563 = vmatpush1.xpose.msra.mxu0 0.0
    %3564 = vmatprep.subr.mxu0 0.0
    %3565 = vmatpush1.xpose.msra.mxu0 0.0
    %3566 = vmatprep.subr.mxu0 0.0
    %3567 = vmatpush1.xpose.msra.mxu0 0.0
    %3568 = vmatprep.mubr.f32.mxu0 0.0
    %3569 = vmatmul.mubr.f32.gmra.mrb[0].mxu0 %v3500
    %v3570 = vpop.f32.mrb[0].mxu0
    %v3571 = vadd.f32 0.0, %v3570
    %v3572 = vpop.f32.mrb[0].mxu0
    %3573 = vdwg.mxu0
    %v3574 = vsel %vm167, %v3493, -inf
    %3575 = vmax.xlane.f32.xlu0 %v3574
    %v3576 = vpop.xlane.xlu0 %3575
    %v3577 = vsel %vm167, %v3571, -inf
    %3578 = vmax.xlane.f32.xlu0 %v3577
    %v3579 = vpop.xlane.xlu0 %3578
    %v3580 = vsub.f32 %v3493, %v3576
    %v3581 = vsub.f32 %v3571, %v3579
    %v3582 = vmul.f32 %v3580, 1.442695
    %v3583 = vpow.pop %v3582
    %v3584 = vmul.f32 %v3581, 1.442695
    %v3585 = vpow.pop %v3584
    %v3586 = vsel %vm167, %v3583, 0.0
    %3587 = vadd.xlane.f32.xlu0 %v3586
    %v3588 = vpop.xlane.xlu0 %3587
    %v3589 = vsel %vm167, %v3585, 0.0
    %3590 = vadd.xlane.f32.xlu0 %v3589
    %v3591 = vpop.xlane.xlu0 %3590
    %v3592 = vrcp.pop %v3588
    %v3593 = vmul.f32 %v3583, %v3592
    %v3594 = vrcp.pop %v3591
    %v3595 = vmul.f32 %v3585, %v3594
    %v3596 = vadd.f32 %v3253, %v3593
    %v3597 = vadd.f32 %v3254, %v3595
    %3598 = vrot.lane.b32.xlu0 %v2388, 40
    %v3599 = vpop.permute.xlu0 %3598
    %v3602 = vsel %vm167, %v3593, 0
    %3604 = vmatprep.subr.mxu0 0.0
    %3605 = vmatpush1.msra.mxu0 %v3599
    %3606 = vmatprep.subr.mxu0 0.0
    %3607 = vmatpush1.msra.mxu0 0.0
    %3608 = vmatprep.subr.mxu0 0.0
    %3609 = vmatpush1.msra.mxu0 0.0
    %3610 = vmatprep.subr.mxu0 0.0
    %3611 = vmatpush1.msra.mxu0 0.0
    %3612 = vmatprep.subr.mxu0 0.0
    %3613 = vmatpush1.msra.mxu0 0.0
    %3614 = vmatprep.subr.mxu0 0.0
    %3615 = vmatpush1.msra.mxu0 0.0
    %3616 = vmatprep.subr.mxu0 0.0
    %3617 = vmatpush1.msra.mxu0 0.0
    %3618 = vmatprep.subr.mxu0 0.0
    %3619 = vmatpush1.msra.mxu0 0.0
    %3620 = vmatprep.subr.mxu0 0.0
    %3621 = vmatpush1.msra.mxu0 0.0
    %3622 = vmatprep.subr.mxu0 0.0
    %3623 = vmatpush1.msra.mxu0 0.0
    %3624 = vmatprep.subr.mxu0 0.0
    %3625 = vmatpush1.msra.mxu0 0.0
    %3626 = vmatprep.subr.mxu0 0.0
    %3627 = vmatpush1.msra.mxu0 0.0
    %3628 = vmatprep.subr.mxu0 0.0
    %3629 = vmatpush1.msra.mxu0 0.0
    %3630 = vmatprep.subr.mxu0 0.0
    %3631 = vmatpush1.msra.mxu0 0.0
    %3632 = vmatprep.subr.mxu0 0.0
    %3633 = vmatpush1.msra.mxu0 0.0
    %3634 = vmatprep.subr.mxu0 0.0
    %3635 = vmatpush1.msra.mxu0 0.0
    %3636 = vmatprep.subr.mxu0 0.0
    %3637 = vmatpush1.msra.mxu0 0.0
    %3638 = vmatprep.subr.mxu0 0.0
    %3639 = vmatpush1.msra.mxu0 0.0
    %3640 = vmatprep.subr.mxu0 0.0
    %3641 = vmatpush1.msra.mxu0 0.0
    %3642 = vmatprep.subr.mxu0 0.0
    %3643 = vmatpush1.msra.mxu0 0.0
    %3644 = vmatprep.subr.mxu0 0.0
    %3645 = vmatpush1.msra.mxu0 0.0
    %3646 = vmatprep.subr.mxu0 0.0
    %3647 = vmatpush1.msra.mxu0 0.0
    %3648 = vmatprep.subr.mxu0 0.0
    %3649 = vmatpush1.msra.mxu0 0.0
    %3650 = vmatprep.subr.mxu0 0.0
    %3651 = vmatpush1.msra.mxu0 0.0
    %3652 = vmatprep.subr.mxu0 0.0
    %3653 = vmatpush1.msra.mxu0 0.0
    %3654 = vmatprep.subr.mxu0 0.0
    %3655 = vmatpush1.msra.mxu0 0.0
    %3656 = vmatprep.subr.mxu0 0.0
    %3657 = vmatpush1.msra.mxu0 0.0
    %3658 = vmatprep.subr.mxu0 0.0
    %3659 = vmatpush1.msra.mxu0 0.0
    %3660 = vmatprep.subr.mxu0 0.0
    %3661 = vmatpush1.msra.mxu0 0.0
    %3662 = vmatprep.subr.mxu0 0.0
    %3663 = vmatpush1.msra.mxu0 0.0
    %3664 = vmatprep.subr.mxu0 0.0
    %3665 = vmatpush1.msra.mxu0 0.0
    %3666 = vmatprep.subr.mxu0 0.0
    %3667 = vmatpush1.msra.mxu0 0.0
    %3668 = vmatprep.mubr.f32.mxu0 0.0
    %3669 = vmatmul.mubr.f32.gmra.mrb[0].mxu0 %v3602
    %v3670 = vpop.f32.mrb[0].mxu0
    %v3671 = vadd.f32 0.0, %v3670
    %v3672 = vpop.f32.mrb[0].mxu0
    %3673 = vdwg.mxu0
    %3674 = vrot.lane.b32.xlu0 %v2393, 40
    %v3675 = vpop.permute.xlu0 %3674
    %v3678 = vsel %vm167, %v3595, 0
    %3680 = vmatprep.subr.mxu0 0.0
    %3681 = vmatpush1.msra.mxu0 %v3675
    %3682 = vmatprep.subr.mxu0 0.0
    %3683 = vmatpush1.msra.mxu0 0.0
    %3684 = vmatprep.subr.mxu0 0.0
    %3685 = vmatpush1.msra.mxu0 0.0
    %3686 = vmatprep.subr.mxu0 0.0
    %3687 = vmatpush1.msra.mxu0 0.0
    %3688 = vmatprep.subr.mxu0 0.0
    %3689 = vmatpush1.msra.mxu0 0.0
    %3690 = vmatprep.subr.mxu0 0.0
    %3691 = vmatpush1.msra.mxu0 0.0
    %3692 = vmatprep.subr.mxu0 0.0
    %3693 = vmatpush1.msra.mxu0 0.0
    %3694 = vmatprep.subr.mxu0 0.0
    %3695 = vmatpush1.msra.mxu0 0.0
    %3696 = vmatprep.subr.mxu0 0.0
    %3697 = vmatpush1.msra.mxu0 0.0
    %3698 = vmatprep.subr.mxu0 0.0
    %3699 = vmatpush1.msra.mxu0 0.0
    %3700 = vmatprep.subr.mxu0 0.0
    %3701 = vmatpush1.msra.mxu0 0.0
    %3702 = vmatprep.subr.mxu0 0.0
    %3703 = vmatpush1.msra.mxu0 0.0
    %3704 = vmatprep.subr.mxu0 0.0
    %3705 = vmatpush1.msra.mxu0 0.0
    %3706 = vmatprep.subr.mxu0 0.0
    %3707 = vmatpush1.msra.mxu0 0.0
    %3708 = vmatprep.subr.mxu0 0.0
    %3709 = vmatpush1.msra.mxu0 0.0
    %3710 = vmatprep.subr.mxu0 0.0
    %3711 = vmatpush1.msra.mxu0 0.0
    %3712 = vmatprep.subr.mxu0 0.0
    %3713 = vmatpush1.msra.mxu0 0.0
    %3714 = vmatprep.subr.mxu0 0.0
    %3715 = vmatpush1.msra.mxu0 0.0
    %3716 = vmatprep.subr.mxu0 0.0
    %3717 = vmatpush1.msra.mxu0 0.0
    %3718 = vmatprep.subr.mxu0 0.0
    %3719 = vmatpush1.msra.mxu0 0.0
    %3720 = vmatprep.subr.mxu0 0.0
    %3721 = vmatpush1.msra.mxu0 0.0
    %3722 = vmatprep.subr.mxu0 0.0
    %3723 = vmatpush1.msra.mxu0 0.0
    %3724 = vmatprep.subr.mxu0 0.0
    %3725 = vmatpush1.msra.mxu0 0.0
    %3726 = vmatprep.subr.mxu0 0.0
    %3727 = vmatpush1.msra.mxu0 0.0
    %3728 = vmatprep.subr.mxu0 0.0
    %3729 = vmatpush1.msra.mxu0 0.0
    %3730 = vmatprep.subr.mxu0 0.0
    %3731 = vmatpush1.msra.mxu0 0.0
    %3732 = vmatprep.subr.mxu0 0.0
    %3733 = vmatpush1.msra.mxu0 0.0
    %3734 = vmatprep.subr.mxu0 0.0
    %3735 = vmatpush1.msra.mxu0 0.0
    %3736 = vmatprep.subr.mxu0 0.0
    %3737 = vmatpush1.msra.mxu0 0.0
    %3738 = vmatprep.subr.mxu0 0.0
    %3739 = vmatpush1.msra.mxu0 0.0
    %3740 = vmatprep.subr.mxu0 0.0
    %3741 = vmatpush1.msra.mxu0 0.0
    %3742 = vmatprep.subr.mxu0 0.0
    %3743 = vmatpush1.msra.mxu0 0.0
    %3744 = vmatprep.mubr.f32.mxu0 0.0
    %3745 = vmatmul.mubr.f32.gmra.mrb[0].mxu0 %v3678
    %v3746 = vpop.f32.mrb[0].mxu0
    %v3747 = vadd.f32 0.0, %v3746
    %v3748 = vpop.f32.mrb[0].mxu0
    %3749 = vdwg.mxu0
    %3752 = vrot.lane.b32.xlu0 %v3671, 24
    %v3753 = vpop.permute.xlu0 %3752
    %3754 = vrot.lane.b32.xlu0 %v3747, 24
    %v3755 = vpop.permute.xlu0 %3754
    %vm3758 = vcmask 261312
    %3759 = vst.msk [vmem:[#allocation4] sm:$0xff] %vm3758, %v3753
    %3760 = vst.msk [vmem:[#allocation4 + $0x8] sm:$0xff] %vm3758, %v3755
    %v3761 = vmul.f32 %v3596, 0.25
    %v3762 = vmul.f32 %v3597, 0.25
    %3763 = vst.msk [vmem:[#allocation20] sm:$0xff] %vm167, %v3761
    %3764 = vst.msk [vmem:[#allocation20 + $0x8] sm:$0xff] %vm167, %v3762
    %v3765 = vld [vmem:[#allocation4] sm:$0xff]
    %v3766 = vld [vmem:[#allocation4 + $0x8] sm:$0xff]
    %v3767 = vld [vmem:[#allocation15] sm:$0xff]
    %v3768 = vld [vmem:[#allocation15 + $0x8] sm:$0xff]
    %v3769 = vld [vmem:[#allocation15 + $0x10] sm:$0xff]
    %v3770 = vld [vmem:[#allocation15 + $0x18] sm:$0xff]
    %v3771 = vld [vmem:[#allocation17] sm:$0x1]
    %v3773 = vlaneseq
    %v3774 = vshrl.u32 %v3773, 7
    %v3775 = vsub.s32 0, %v3774
    %v3776 = vrot.slane %v3771, %v3775
    %v3779 = vsel %vm262, %v3765, 0
    %v3782 = vsel %vm262, %v3766, 0
    %3784 = vmatprep.subr.mxu0 0.0
    %3785 = vmatpush1.msra.mxu0 %v3767
    %3786 = vmatprep.subr.mxu0 0.0
    %3787 = vmatpush1.msra.mxu0 %v3768
    %3788 = vmatprep.subr.mxu0 0.0
    %3789 = vmatpush1.msra.mxu0 %v3769
    %3790 = vmatprep.subr.mxu0 0.0
    %3791 = vmatpush1.msra.mxu0 %v3770
    %3792 = vmatprep.subr.mxu0 0.0
    %3793 = vmatpush1.msra.mxu0 0.0
    %3794 = vmatprep.subr.mxu0 0.0
    %3795 = vmatpush1.msra.mxu0 0.0
    %3796 = vmatprep.subr.mxu0 0.0
    %3797 = vmatpush1.msra.mxu0 0.0
    %3798 = vmatprep.subr.mxu0 0.0
    %3799 = vmatpush1.msra.mxu0 0.0
    %3800 = vmatprep.subr.mxu0 0.0
    %3801 = vmatpush1.msra.mxu0 0.0
    %3802 = vmatprep.subr.mxu0 0.0
    %3803 = vmatpush1.msra.mxu0 0.0
    %3804 = vmatprep.subr.mxu0 0.0
    %3805 = vmatpush1.msra.mxu0 0.0
    %3806 = vmatprep.subr.mxu0 0.0
    %3807 = vmatpush1.msra.mxu0 0.0
    %3808 = vmatprep.subr.mxu0 0.0
    %3809 = vmatpush1.msra.mxu0 0.0
    %3810 = vmatprep.subr.mxu0 0.0
    %3811 = vmatpush1.msra.mxu0 0.0
    %3812 = vmatprep.subr.mxu0 0.0
    %3813 = vmatpush1.msra.mxu0 0.0
    %3814 = vmatprep.subr.mxu0 0.0
    %3815 = vmatpush1.msra.mxu0 0.0
    %3816 = vmatprep.subr.mxu0 0.0
    %3817 = vmatpush1.msra.mxu0 0.0
    %3818 = vmatprep.subr.mxu0 0.0
    %3819 = vmatpush1.msra.mxu0 0.0
    %3820 = vmatprep.subr.mxu0 0.0
    %3821 = vmatpush1.msra.mxu0 0.0
    %3822 = vmatprep.subr.mxu0 0.0
    %3823 = vmatpush1.msra.mxu0 0.0
    %3824 = vmatprep.subr.mxu0 0.0
    %3825 = vmatpush1.msra.mxu0 0.0
    %3826 = vmatprep.subr.mxu0 0.0
    %3827 = vmatpush1.msra.mxu0 0.0
    %3828 = vmatprep.subr.mxu0 0.0
    %3829 = vmatpush1.msra.mxu0 0.0
    %3830 = vmatprep.subr.mxu0 0.0
    %3831 = vmatpush1.msra.mxu0 0.0
    %3832 = vmatprep.subr.mxu0 0.0
    %3833 = vmatpush1.msra.mxu0 0.0
    %3834 = vmatprep.subr.mxu0 0.0
    %3835 = vmatpush1.msra.mxu0 0.0
    %3836 = vmatprep.subr.mxu0 0.0
    %3837 = vmatpush1.msra.mxu0 0.0
    %3838 = vmatprep.subr.mxu0 0.0
    %3839 = vmatpush1.msra.mxu0 0.0
    %3840 = vmatprep.subr.mxu0 0.0
    %3841 = vmatpush1.msra.mxu0 0.0
    %3842 = vmatprep.subr.mxu0 0.0
    %3843 = vmatpush1.msra.mxu0 0.0
    %3844 = vmatprep.subr.mxu0 0.0
    %3845 = vmatpush1.msra.mxu0 0.0
    %3846 = vmatprep.subr.mxu0 0.0
    %3847 = vmatpush1.msra.mxu0 0.0
    %3848 = vmatprep.mubr.f32.mxu0 0.0
    %3849 = vmatmul.mubr.f32.gmra.mrb[0].mxu0 %v3779
    %v3850 = vpop.f32.mrb[0].mxu0
    %v3851 = vadd.f32 %v3776, %v3850
    %v3852 = vpop.f32.mrb[0].mxu0
    %3853 = vmatprep.mubr.f32.mxu0 0.0
    %3854 = vmatmul.mubr.f32.gmra.mrb[0].mxu0 %v3782
    %v3855 = vpop.f32.mrb[0].mxu0
    %v3856 = vadd.f32 %v3776, %v3855
    %v3857 = vpop.f32.mrb[0].mxu0
    %3858 = vdwg.mxu0
    %v3859 = vld [vmem:[%s12] sm:$0xff]
    %v3860 = vld [vmem:[%s12 + $0x8] sm:$0xff]
    %v3861 = vld [vmem:[%s12 + $0x10] sm:$0xff]
    %v3862 = vld [vmem:[%s12 + $0x18] sm:$0xff]
    %v3863 = vld [vmem:[#allocation18] sm:$0x1]
    %v3865 = vlaneseq
    %v3866 = vshrl.u32 %v3865, 7
    %v3867 = vsub.s32 0, %v3866
    %v3868 = vrot.slane %v3863, %v3867
    %v3871 = vsel %vm262, %v3851, 0
    %v3874 = vsel %vm262, %v3856, 0
    %3876 = vmatprep.subr.mxu0 0.0
    %3877 = vmatpush1.msra.mxu0 %v3859
    %3878 = vmatprep.subr.mxu0 0.0
    %3879 = vmatpush1.msra.mxu0 %v3860
    %3880 = vmatprep.subr.mxu0 0.0
    %3881 = vmatpush1.msra.mxu0 %v3861
    %3882 = vmatprep.subr.mxu0 0.0
    %3883 = vmatpush1.msra.mxu0 %v3862
    %3884 = vmatprep.subr.mxu0 0.0
    %3885 = vmatpush1.msra.mxu0 0.0
    %3886 = vmatprep.subr.mxu0 0.0
    %3887 = vmatpush1.msra.mxu0 0.0
    %3888 = vmatprep.subr.mxu0 0.0
    %3889 = vmatpush1.msra.mxu0 0.0
    %3890 = vmatprep.subr.mxu0 0.0
    %3891 = vmatpush1.msra.mxu0 0.0
    %3892 = vmatprep.subr.mxu0 0.0
    %3893 = vmatpush1.msra.mxu0 0.0
    %3894 = vmatprep.subr.mxu0 0.0
    %3895 = vmatpush1.msra.mxu0 0.0
    %3896 = vmatprep.subr.mxu0 0.0
    %3897 = vmatpush1.msra.mxu0 0.0
    %3898 = vmatprep.subr.mxu0 0.0
    %3899 = vmatpush1.msra.mxu0 0.0
    %3900 = vmatprep.subr.mxu0 0.0
    %3901 = vmatpush1.msra.mxu0 0.0
    %3902 = vmatprep.subr.mxu0 0.0
    %3903 = vmatpush1.msra.mxu0 0.0
    %3904 = vmatprep.subr.mxu0 0.0
    %3905 = vmatpush1.msra.mxu0 0.0
    %3906 = vmatprep.subr.mxu0 0.0
    %3907 = vmatpush1.msra.mxu0 0.0
    %3908 = vmatprep.subr.mxu0 0.0
    %3909 = vmatpush1.msra.mxu0 0.0
    %3910 = vmatprep.subr.mxu0 0.0
    %3911 = vmatpush1.msra.mxu0 0.0
    %3912 = vmatprep.subr.mxu0 0.0
    %3913 = vmatpush1.msra.mxu0 0.0
    %3914 = vmatprep.subr.mxu0 0.0
    %3915 = vmatpush1.msra.mxu0 0.0
    %3916 = vmatprep.subr.mxu0 0.0
    %3917 = vmatpush1.msra.mxu0 0.0
    %3918 = vmatprep.subr.mxu0 0.0
    %3919 = vmatpush1.msra.mxu0 0.0
    %3920 = vmatprep.subr.mxu0 0.0
    %3921 = vmatpush1.msra.mxu0 0.0
    %3922 = vmatprep.subr.mxu0 0.0
    %3923 = vmatpush1.msra.mxu0 0.0
    %3924 = vmatprep.subr.mxu0 0.0
    %3925 = vmatpush1.msra.mxu0 0.0
    %3926 = vmatprep.subr.mxu0 0.0
    %3927 = vmatpush1.msra.mxu0 0.0
    %3928 = vmatprep.subr.mxu0 0.0
    %3929 = vmatpush1.msra.mxu0 0.0
    %3930 = vmatprep.subr.mxu0 0.0
    %3931 = vmatpush1.msra.mxu0 0.0
    %3932 = vmatprep.subr.mxu0 0.0
    %3933 = vmatpush1.msra.mxu0 0.0
    %3934 = vmatprep.subr.mxu0 0.0
    %3935 = vmatpush1.msra.mxu0 0.0
    %3936 = vmatprep.subr.mxu0 0.0
    %3937 = vmatpush1.msra.mxu0 0.0
    %3938 = vmatprep.subr.mxu0 0.0
    %3939 = vmatpush1.msra.mxu0 0.0
    %3940 = vmatprep.mubr.f32.mxu0 0.0
    %3941 = vmatmul.mubr.f32.gmra.mrb[0].mxu0 %v3871
    %v3942 = vpop.f32.mrb[0].mxu0
    %v3943 = vadd.f32 %v3868, %v3942
    %v3944 = vpop.f32.mrb[0].mxu0
    %3945 = vmatprep.mubr.f32.mxu0 0.0
    %3946 = vmatmul.mubr.f32.gmra.mrb[0].mxu0 %v3874
    %v3947 = vpop.f32.mrb[0].mxu0
    %v3948 = vadd.f32 %v3868, %v3947
    %v3949 = vpop.f32.mrb[0].mxu0
    %3950 = vdwg.mxu0
    %v3951 = vmax.f32 %v3943, 0.0
    %v3952 = vmax.f32 %v3948, 0.0
    %v3953 = vld [vmem:[%s14] sm:$0xff]
    %v3954 = vld [vmem:[%s14 + $0x8] sm:$0xff]
    %v3955 = vld [vmem:[#allocation5] sm:$0x1]
    %v3957 = vlaneseq
    %v3958 = vshrl.u32 %v3957, 7
    %v3959 = vsub.s32 0, %v3958
    %v3960 = vrot.slane %v3955, %v3959
    %vm3962 = vcmask 130048
    %v3964 = vsel %vm3962, %v3951, 0
    %v3967 = vsel %vm3962, %v3952, 0
    %3969 = vmatprep.subr.mxu0 0.0
    %3970 = vmatpush1.msra.mxu0 %v3953
    %3971 = vmatprep.subr.mxu0 0.0
    %3972 = vmatpush1.msra.mxu0 %v3954
    %3973 = vmatprep.subr.mxu0 0.0
    %3974 = vmatpush1.msra.mxu0 0.0
    %3975 = vmatprep.subr.mxu0 0.0
    %3976 = vmatpush1.msra.mxu0 0.0
    %3977 = vmatprep.subr.mxu0 0.0
    %3978 = vmatpush1.msra.mxu0 0.0
    %3979 = vmatprep.subr.mxu0 0.0
    %3980 = vmatpush1.msra.mxu0 0.0
    %3981 = vmatprep.subr.mxu0 0.0
    %3982 = vmatpush1.msra.mxu0 0.0
    %3983 = vmatprep.subr.mxu0 0.0
    %3984 = vmatpush1.msra.mxu0 0.0
    %3985 = vmatprep.subr.mxu0 0.0
    %3986 = vmatpush1.msra.mxu0 0.0
    %3987 = vmatprep.subr.mxu0 0.0
    %3988 = vmatpush1.msra.mxu0 0.0
    %3989 = vmatprep.subr.mxu0 0.0
    %3990 = vmatpush1.msra.mxu0 0.0
    %3991 = vmatprep.subr.mxu0 0.0
    %3992 = vmatpush1.msra.mxu0 0.0
    %3993 = vmatprep.subr.mxu0 0.0
    %3994 = vmatpush1.msra.mxu0 0.0
    %3995 = vmatprep.subr.mxu0 0.0
    %3996 = vmatpush1.msra.mxu0 0.0
    %3997 = vmatprep.subr.mxu0 0.0
    %3998 = vmatpush1.msra.mxu0 0.0
    %3999 = vmatprep.subr.mxu0 0.0
    %4000 = vmatpush1.msra.mxu0 0.0
    %4001 = vmatprep.subr.mxu0 0.0
    %4002 = vmatpush1.msra.mxu0 0.0
    %4003 = vmatprep.subr.mxu0 0.0
    %4004 = vmatpush1.msra.mxu0 0.0
    %4005 = vmatprep.subr.mxu0 0.0
    %4006 = vmatpush1.msra.mxu0 0.0
    %4007 = vmatprep.subr.mxu0 0.0
    %4008 = vmatpush1.msra.mxu0 0.0
    %4009 = vmatprep.subr.mxu0 0.0
    %4010 = vmatpush1.msra.mxu0 0.0
    %4011 = vmatprep.subr.mxu0 0.0
    %4012 = vmatpush1.msra.mxu0 0.0
    %4013 = vmatprep.subr.mxu0 0.0
    %4014 = vmatpush1.msra.mxu0 0.0
    %4015 = vmatprep.subr.mxu0 0.0
    %4016 = vmatpush1.msra.mxu0 0.0
    %4017 = vmatprep.subr.mxu0 0.0
    %4018 = vmatpush1.msra.mxu0 0.0
    %4019 = vmatprep.subr.mxu0 0.0
    %4020 = vmatpush1.msra.mxu0 0.0
    %4021 = vmatprep.subr.mxu0 0.0
    %4022 = vmatpush1.msra.mxu0 0.0
    %4023 = vmatprep.subr.mxu0 0.0
    %4024 = vmatpush1.msra.mxu0 0.0
    %4025 = vmatprep.subr.mxu0 0.0
    %4026 = vmatpush1.msra.mxu0 0.0
    %4027 = vmatprep.subr.mxu0 0.0
    %4028 = vmatpush1.msra.mxu0 0.0
    %4029 = vmatprep.subr.mxu0 0.0
    %4030 = vmatpush1.msra.mxu0 0.0
    %4031 = vmatprep.subr.mxu0 0.0
    %4032 = vmatpush1.msra.mxu0 0.0
    %4033 = vmatprep.mubr.f32.mxu0 0.0
    %4034 = vmatmul.mubr.f32.gmra.mrb[0].mxu0 %v3964
    %v4035 = vpop.f32.mrb[0].mxu0
    %v4036 = vadd.f32 %v3960, %v4035
    %v4037 = vpop.f32.mrb[0].mxu0
    %4038 = vmatprep.mubr.f32.mxu0 0.0
    %4039 = vmatmul.mubr.f32.gmra.mrb[0].mxu0 %v3967
    %v4040 = vpop.f32.mrb[0].mxu0
    %v4041 = vadd.f32 %v3960, %v4040
    %v4042 = vpop.f32.mrb[0].mxu0
    %4043 = vdwg.mxu0
    %vm4044 = vcmask 7175
    %4045 = vst.msk [vmem:[%s16 - $0x7] sm:$0x80] %vm4044, %v4036
    %4046 = vst.msk [vmem:[%s16 - $0x6] sm:$0x80] %vm4044, %v4041
    // Predicated region
    $region98: #{battery_net_forward.1} parent=1 // pred_check
      _
    $region99: #{battery_net_forward.1} parent=1 // pred_check_branch
      %4048 = sbr.rel (0) target = $region101
    $region100: #{battery_net_forward.1} parent=1 // pred_region
      _
    $region101: #{battery_net_forward.1} parent=1 // pred_fallthru
      _
    // Predicated region
    $region102: #{battery_net_forward.1} parent=1 // pred_check
      _
    $region103: #{battery_net_forward.1} parent=1 // pred_check_branch
      %4050 = sbr.rel (0) target = $region105
    $region104: #{battery_net_forward.1} parent=1 // pred_region
      %s4052 = ssub.s32 256, 256
      %4053 = vsyncadd [#allocation8], %s4052
      %s4054 = sshll.u32 [#allocation20], 4
      %s4055 = int_to_ptr.vmem [resolvable:$true] %s4054
      %4060 = dma.vmem_to_hbm [thread:$0]  %s4055, 256, %s17, [#allocation8], 128, 128, 8
    $region105: #{battery_net_forward.1} parent=1 // pred_fallthru
      _
    // Predicated region
    $region106: #{battery_net_forward.1} parent=1 // pred_check
      _
    $region107: #{battery_net_forward.1} parent=1 // pred_check_branch
      %4062 = sbr.rel (0) target = $region109
    $region108: #{battery_net_forward.1} parent=1 // pred_region
      _
    $region109: #{battery_net_forward.1} parent=1 // pred_fallthru
      _
    // Predicated region
    $region110: #{battery_net_forward.1} parent=1 // pred_check
      _
    $region111: #{battery_net_forward.1} parent=1 // pred_check_branch
      %4064 = sbr.rel (0) target = $region113
    $region112: #{battery_net_forward.1} parent=1 // pred_region
      %4065 = dma.done [#allocation8], 256
    $region113: #{battery_net_forward.1} parent=1 // pred_fallthru
      _
    %4066 = vsyncpa [#allocation7], 1
    %4067 = vsyncpa [#allocation10], 1
    %4068 = vsyncpa [#allocation13], 1
    %4069 = vsyncpa [#allocation16], 1
    %4070 = vsyncpa [#allocation19], 1
    %4071 = vsyncpa [#allocation8], 1

</llo_original>
